<compile_context>
chip_gen: v6e
topology: v6e:2x2x1
jax: 0.10.0
libtpu: 0.0.40
codegen_flags: <defaults>
</compile_context>

<pallas_src>
import math
import functools

import jax
import jax.numpy as jnp
from jax.experimental import pallas as pl
from jax.experimental.pallas import tpu as pltpu

# -------- small config consistent with a ViT layer --------
HIDDEN = 32
NUM_HEADS = 2
HEAD_DIM = HIDDEN // NUM_HEADS
INTERMEDIATE = 4 * HIDDEN
LN_EPS = 1e-12
THRESHOLD = 0.05
BATCH = 2
NUM_PATCHES = 16
SEQ = NUM_PATCHES + 1  # CLS + patches

GATE_H1 = 256
GATE_H2 = 64

# -------- packed row-vector slab layout (one parameter vector per sublane row) --------
(V_LN1G, V_LN1B, V_LN2G, V_LN2B, V_BQKV, V_BO1, V_BO2,
 V_BI, V_BMO, V_GB1, V_GB2, V_GW3, V_GB3) = range(13)
VEC_ROWS = 16          # padded to a sublane multiple
VEC_COLS = 256         # max vector width (gate bias 1)


def _full_spec(shape):
    nd = len(shape)
    return pl.BlockSpec(shape, lambda *_: (0,) * nd)


# ---------------- fused DHSLayer kernel ----------------
def dhs_fused_kernel(x_ref, vec_ref, wqkv_ref, wo_ref, wi_ref, wmo_ref,
                     gw1_ref, gw2_ref,
                     out_ref, stats_ref,
                     *, batch, seq, hidden, num_heads, head_dim,
                     intermediate, eps, threshold, compute_cosine):
    f32 = jnp.float32
    rows = batch * seq

    # ---- single load of activations + all weights (resident for the whole step) ----
    x = x_ref[...]                      # [R, H]     raw hidden states, batch-stacked
    vecs = vec_ref[...]                 # [16, 256]  packed row vectors
    wqkv = wqkv_ref[...]                # [H, 6H]    layer1 QKV | layer2 QKV (Q pre-scaled)
    wo = wo_ref[...]                    # [2H, H]    wo1 stacked over wo2
    wi = wi_ref[...]                    # [H, I]
    wmo = wmo_ref[...]                  # [I, H]
    gw1 = gw1_ref[...]                  # [H, 256]
    gw2 = gw2_ref[...]                  # [256, 64]

    def vrow(r, w):
        return vecs[r:r + 1, :w]        # [1, w] row vector, lane-0 aligned

    ln1g, ln1b = vrow(V_LN1G, hidden), vrow(V_LN1B, hidden)
    ln2g, ln2b = vrow(V_LN2G, hidden), vrow(V_LN2B, hidden)
    bqkv = vrow(V_BQKV, 6 * hidden)
    bo = (vrow(V_BO1, hidden), vrow(V_BO2, hidden))
    bi = vrow(V_BI, intermediate)
    bmo = vrow(V_BMO, hidden)
    gb1 = vrow(V_GB1, GATE_H1)
    gb2 = vrow(V_GB2, GATE_H2)
    gw3 = vrow(V_GW3, GATE_H2)
    gb3 = vrow(V_GB3, 1)

    def layer_norm(t, g, b):
        mu = jnp.mean(t, axis=-1, keepdims=True)
        var = jnp.mean((t - mu) ** 2, axis=-1, keepdims=True)
        return (t - mu) * jax.lax.rsqrt(var + eps) * g + b

    # ---- gate MLP on the RAW inputs, once over all B*N rows (CLS scores unused) ----
    g1 = jnp.maximum(jnp.dot(x, gw1, preferred_element_type=f32) + gb1, 0.0)
    g2 = jnp.maximum(jnp.dot(g1, gw2, preferred_element_type=f32) + gb2, 0.0)
    logit = jnp.sum(g2 * gw3, axis=-1, keepdims=True) + gb3      # [R, 1] stays on-chip
    scores = jax.nn.sigmoid(logit)                               # [R, 1]

    # ---- shared layernorm_before + ONE fused QKV projection feeding both layers ----
    xn = layer_norm(x, ln1g, ln1b)                               # [R, H]
    qkv = jnp.dot(xn, wqkv, preferred_element_type=f32) + bqkv   # [R, 6H]

    n_apply = 2 if compute_cosine else 1
    key_is_cls = None
    if compute_cosine:
        key_is_cls = jax.lax.broadcasted_iota(jnp.int32, (seq, seq), 1) == 0

    # ---- per (layer, batch) attention blocks (the only non-stacked part) ----
    attn_blocks = []
    for layer in range(n_apply):
        base = layer * 3 * hidden
        wo_l = wo[layer * hidden:(layer + 1) * hidden, :]        # [H, H]
        for b in range(batch):
            r0 = b * seq
            qkv_b = qkv[r0:r0 + seq, :]                          # [N, 6H] (static slice)
            attn = None
            for h in range(num_heads):                           # static per-head unroll
                lo = h * head_dim
                q = qkv_b[:, base + lo:base + lo + head_dim]
                k = qkv_b[:, base + hidden + lo:base + hidden + lo + head_dim]
                v = qkv_b[:, base + 2 * hidden + lo:base + 2 * hidden + lo + head_dim]
                s = jnp.dot(q, k.T, preferred_element_type=f32)  # scale pre-folded into Q
                if layer == 1:
                    # TrainingMLP path attends over patches only: mask the CLS key.
                    s = jnp.where(key_is_cls, -1e30, s)
                s = s - jnp.max(s, axis=-1, keepdims=True)
                e = jnp.exp(s)
                p = e / jnp.sum(e, axis=-1, keepdims=True)       # exact (parity with torch)
                ctx = jnp.dot(p, v, preferred_element_type=f32)  # [N, hd]
                # fold the head directly through its row block of the output projection
                part = jnp.dot(ctx, wo_l[lo:lo + head_dim, :], preferred_element_type=f32)
                attn = part if attn is None else attn + part
            attn_blocks.append(attn + bo[layer])                 # [N, H]

    # ---- stacked residual + ONE shared LN2 / intermediate(GELU) / output FFN tail ----
    resid = jnp.concatenate([x] * n_apply, axis=0)               # [n*R, H]
    h1 = jnp.concatenate(attn_blocks, axis=0) + resid            # [n*R, H]
    hn = layer_norm(h1, ln2g, ln2b)
    pre = jnp.dot(hn, wi, preferred_element_type=f32) + bi
    inter = 0.5 * pre * (1.0 + jax.lax.erf(pre * (1.0 / math.sqrt(2.0))))
    y = jnp.dot(inter, wmo, preferred_element_type=f32) + bmo + h1   # [n*R, H]
    y1 = y[:rows, :]                                             # layer-1 (pruned-query) output

    # ---- keep mask, scatter-back output, skip count ----
    row_ids = jax.lax.broadcasted_iota(jnp.int32, (rows, 1), 0)
    is_cls = row_ids == 0
    for b in range(1, batch):
        is_cls = jnp.logical_or(is_cls, row_ids == b * seq)
    keep = jnp.logical_or(is_cls, scores >= threshold)           # [R, 1]
    out_ref[...] = jnp.where(keep, y1, x)

    skipped = jnp.sum(
        jnp.where(jnp.logical_not(is_cls), (scores < threshold).astype(f32), 0.0),
        axis=0, keepdims=True)                                   # [1, 1]

    # ---- similarity + BCE loss (patch rows only; CLS rows masked out of the sum) ----
    if compute_cosine:
        real = y[rows:, :]                                       # layer-2 output, [R, H]
        dot = jnp.sum(real * x, axis=-1, keepdims=True)
        sq_r = jnp.sum(real * real, axis=-1, keepdims=True)
        sq_x = jnp.sum(x * x, axis=-1, keepdims=True)
        # single rsqrt == 1 / max(|r|*|x|, 1e-8)  (torch cosine_similarity eps=1e-8)
        cos_sim = (dot * jax.lax.rsqrt(jnp.maximum(sq_r * sq_x, 1e-16)) + 1.0) * 0.5
        eu = jnp.sum((real - x) ** 2, axis=-1, keepdims=True)
        dist_sim = jnp.exp(-(eu / (sq_r + 1e-6)))                # torch: / (sum(real^2)+1e-6)
        sim = 0.5 * cos_sim + 0.5 * dist_sim
        target = (sim < 1.0 - threshold).astype(f32)
        pclip = jnp.clip(scores, 1e-12, 1.0 - 1e-12)
        bce = target * jnp.log(pclip) + (1.0 - target) * jnp.log(1.0 - pclip)
        bce = jnp.where(jnp.logical_not(is_cls), bce, 0.0)
        loss = -jnp.sum(bce, axis=0, keepdims=True) * (1.0 / float(batch * (seq - 1)))
    else:
        loss = jnp.zeros((1, 1), f32)

    stats_ref[...] = jnp.concatenate([loss, skipped], axis=1)    # [1, 2]: loss, skip


# ---------------- DHSLayer forward (single pallas_call, single grid step) ----------------
def dhs_layer_forward(hidden_states, params, compute_cosine=True):
    B, N, H = hidden_states.shape
    x2d = hidden_states.reshape(B * N, H)                        # batch fused into sublanes
    ins = [x2d, params["vecs"], params["wqkv"], params["wo"],
           params["wi"], params["wmo"], params["gw1"], params["gw2"]]
    kernel = functools.partial(
        dhs_fused_kernel, batch=B, seq=N, hidden=H, num_heads=NUM_HEADS,
        head_dim=H // NUM_HEADS, intermediate=INTERMEDIATE, eps=LN_EPS,
        threshold=THRESHOLD, compute_cosine=compute_cosine)
    # NOTE(v7x): the two TensorCores could be used via grid=(2,) over batch, but
    # that forfeits the batch row-fusion; at these shapes the fused single step wins.
    out2d, stats = pl.pallas_call(
        kernel,
        out_shape=(jax.ShapeDtypeStruct((B * N, H), jnp.float32),
                   jax.ShapeDtypeStruct((1, 2), jnp.float32)),
        grid=(1,),
        in_specs=[_full_spec(a.shape) for a in ins],
        out_specs=(_full_spec((B * N, H)), _full_spec((1, 2))),
        compiler_params=pltpu.CompilerParams(dimension_semantics=("arbitrary",)),
    )(*ins)
    out = out2d.reshape(B, N, H)
    # torch module stores loss / skip_ratio as attributes and returns (output,)
    return out, stats[0, 0], stats[0, 1].astype(jnp.int32)


# ---------------- deterministic synthetic parameters (packed for the kernel) ----------------
def init_params(key):
    def lin(k, fan_in, fan_out):
        k1, k2 = jax.random.split(k)
        w = jax.random.normal(k1, (fan_in, fan_out), jnp.float32) * 0.02
        b = jax.random.normal(k2, (1, fan_out), jnp.float32) * 0.02
        return w, b

    ks = jax.random.split(key, 13)
    scale = 1.0 / math.sqrt(HEAD_DIM)

    def attn_block(kq, kk, kv, ko):
        wq, bq = lin(kq, HIDDEN, HIDDEN)
        wk, bk = lin(kk, HIDDEN, HIDDEN)
        wv, bv = lin(kv, HIDDEN, HIDDEN)
        wo, bo = lin(ko, HIDDEN, HIDDEN)
        # fuse QKV; fold 1/sqrt(head_dim) into the Q weight AND bias
        wqkv = jnp.concatenate([wq * scale, wk, wv], axis=1)     # [H, 3H]
        bqkv = jnp.concatenate([bq * scale, bk, bv], axis=1)     # [1, 3H]
        return wqkv, bqkv, wo, bo

    wqkv1, bqkv1, wo1, bo1 = attn_block(ks[0], ks[1], ks[2], ks[3])
    wqkv2, bqkv2, wo2, bo2 = attn_block(ks[4], ks[5], ks[6], ks[7])
    wi, bi = lin(ks[8], HIDDEN, INTERMEDIATE)
    wmo, bmo = lin(ks[9], INTERMEDIATE, HIDDEN)
    gw1, gb1 = lin(ks[10], HIDDEN, GATE_H1)
    gw2, gb2 = lin(ks[11], GATE_H1, GATE_H2)
    gw3c, gb3 = lin(ks[12], GATE_H2, 1)
    gw3 = gw3c.T                                                 # [1, 64] lane-reduction row

    ln1g = jnp.ones((1, HIDDEN), jnp.float32)
    ln1b = jnp.zeros((1, HIDDEN), jnp.float32)
    ln2g = jnp.ones((1, HIDDEN), jnp.float32)
    ln2b = jnp.zeros((1, HIDDEN), jnp.float32)

    # one packed slab for every small row vector (one DMA instead of 15)
    vecs = jnp.zeros((VEC_ROWS, VEC_COLS), jnp.float32)

    def put(slab, row, vec):
        return slab.at[row, :vec.shape[1]].set(vec[0])

    vecs = put(vecs, V_LN1G, ln1g)
    vecs = put(vecs, V_LN1B, ln1b)
    vecs = put(vecs, V_LN2G, ln2g)
    vecs = put(vecs, V_LN2B, ln2b)
    vecs = put(vecs, V_BQKV, jnp.concatenate([bqkv1, bqkv2], axis=1))   # [1, 6H]
    vecs = put(vecs, V_BO1, bo1)
    vecs = put(vecs, V_BO2, bo2)
    vecs = put(vecs, V_BI, bi)
    vecs = put(vecs, V_BMO, bmo)
    vecs = put(vecs, V_GB1, gb1)
    vecs = put(vecs, V_GB2, gb2)
    vecs = put(vecs, V_GW3, gw3)
    vecs = put(vecs, V_GB3, gb3)

    return dict(
        vecs=vecs,
        wqkv=jnp.concatenate([wqkv1, wqkv2], axis=1),            # [H, 6H]
        wo=jnp.concatenate([wo1, wo2], axis=0),                  # [2H, H]
        wi=wi, wmo=wmo, gw1=gw1, gw2=gw2,
    )


if __name__ == "__main__":
    key = jax.random.PRNGKey(0)
    kx, kp = jax.random.split(key)
    params = init_params(kp)
    x = jax.random.normal(kx, (BATCH, SEQ, HIDDEN), jnp.float32)

    out, loss, skip = dhs_layer_forward(x, params, compute_cosine=True)
    jax.block_until_ready((out, loss, skip))
    assert out.shape == (BATCH, SEQ, HIDDEN)
    assert out.dtype == jnp.float32
    assert bool(jnp.isfinite(loss))
    print("KERNEL_OK")
</pallas_src>

<mosaic_0001>
module attributes {stable_mosaic.version = 11 : i64} {
  func.func @dhs_fused_kernel(%arg0: i32, %arg1: memref<34x32xf32, #tpu.memory_space<vmem>>, %arg2: memref<16x256xf32, #tpu.memory_space<vmem>>, %arg3: memref<32x192xf32, #tpu.memory_space<vmem>>, %arg4: memref<64x32xf32, #tpu.memory_space<vmem>>, %arg5: memref<32x128xf32, #tpu.memory_space<vmem>>, %arg6: memref<128x32xf32, #tpu.memory_space<vmem>>, %arg7: memref<32x256xf32, #tpu.memory_space<vmem>>, %arg8: memref<256x64xf32, #tpu.memory_space<vmem>>, %arg9: memref<34x32xf32, #tpu.memory_space<vmem>>, %arg10: memref<1x2xf32, #tpu.memory_space<vmem>>) attributes {dimension_semantics = [#tpu.dimension_semantics<arbitrary>], iteration_bounds = array<i64: 1>, scalar_prefetch = 0 : i64, scratch_operands = 0 : i64, tpu.core_type = #tpu.core_type<tc>, window_params = [{pipeline_mode = #tpu.pipeline_mode<synchronous>, transform_indices = @transform_0, window_bounds = array<i64: 34, 32>}, {pipeline_mode = #tpu.pipeline_mode<synchronous>, transform_indices = @transform_1, window_bounds = array<i64: 16, 256>}, {pipeline_mode = #tpu.pipeline_mode<synchronous>, transform_indices = @transform_2, window_bounds = array<i64: 32, 192>}, {pipeline_mode = #tpu.pipeline_mode<synchronous>, transform_indices = @transform_3, window_bounds = array<i64: 64, 32>}, {pipeline_mode = #tpu.pipeline_mode<synchronous>, transform_indices = @transform_4, window_bounds = array<i64: 32, 128>}, {pipeline_mode = #tpu.pipeline_mode<synchronous>, transform_indices = @transform_5, window_bounds = array<i64: 128, 32>}, {pipeline_mode = #tpu.pipeline_mode<synchronous>, transform_indices = @transform_6, window_bounds = array<i64: 32, 256>}, {pipeline_mode = #tpu.pipeline_mode<synchronous>, transform_indices = @transform_7, window_bounds = array<i64: 256, 64>}, {pipeline_mode = #tpu.pipeline_mode<synchronous>, transform_indices = @transform_8, window_bounds = array<i64: 34, 32>}, {pipeline_mode = #tpu.pipeline_mode<synchronous>, transform_indices = @transform_9, window_bounds = array<i64: 1, 2>}]} {
    %c0 = arith.constant 0 : index
    %c0_0 = arith.constant 0 : index
    %0 = vector.load %arg1[%c0, %c0_0] : memref<34x32xf32, #tpu.memory_space<vmem>>, vector<34x32xf32>
    %c0_1 = arith.constant 0 : index
    %c0_2 = arith.constant 0 : index
    %1 = vector.load %arg2[%c0_1, %c0_2] : memref<16x256xf32, #tpu.memory_space<vmem>>, vector<16x256xf32>
    %c0_3 = arith.constant 0 : index
    %c0_4 = arith.constant 0 : index
    %2 = vector.load %arg3[%c0_3, %c0_4] : memref<32x192xf32, #tpu.memory_space<vmem>>, vector<32x192xf32>
    %c0_5 = arith.constant 0 : index
    %c0_6 = arith.constant 0 : index
    %3 = vector.load %arg4[%c0_5, %c0_6] : memref<64x32xf32, #tpu.memory_space<vmem>>, vector<64x32xf32>
    %c0_7 = arith.constant 0 : index
    %c0_8 = arith.constant 0 : index
    %4 = vector.load %arg5[%c0_7, %c0_8] : memref<32x128xf32, #tpu.memory_space<vmem>>, vector<32x128xf32>
    %c0_9 = arith.constant 0 : index
    %c0_10 = arith.constant 0 : index
    %5 = vector.load %arg6[%c0_9, %c0_10] : memref<128x32xf32, #tpu.memory_space<vmem>>, vector<128x32xf32>
    %c0_11 = arith.constant 0 : index
    %c0_12 = arith.constant 0 : index
    %6 = vector.load %arg7[%c0_11, %c0_12] : memref<32x256xf32, #tpu.memory_space<vmem>>, vector<32x256xf32>
    %c0_13 = arith.constant 0 : index
    %c0_14 = arith.constant 0 : index
    %7 = vector.load %arg8[%c0_13, %c0_14] : memref<256x64xf32, #tpu.memory_space<vmem>>, vector<256x64xf32>
    %8 = vector.extract_strided_slice %1 {offsets = [0, 0], sizes = [1, 32], strides = [1, 1]} : vector<16x256xf32> to vector<1x32xf32>
    %9 = vector.extract_strided_slice %1 {offsets = [1, 0], sizes = [1, 32], strides = [1, 1]} : vector<16x256xf32> to vector<1x32xf32>
    %10 = vector.extract_strided_slice %1 {offsets = [2, 0], sizes = [1, 32], strides = [1, 1]} : vector<16x256xf32> to vector<1x32xf32>
    %11 = vector.extract_strided_slice %1 {offsets = [3, 0], sizes = [1, 32], strides = [1, 1]} : vector<16x256xf32> to vector<1x32xf32>
    %12 = vector.extract_strided_slice %1 {offsets = [4, 0], sizes = [1, 192], strides = [1, 1]} : vector<16x256xf32> to vector<1x192xf32>
    %13 = vector.extract_strided_slice %1 {offsets = [5, 0], sizes = [1, 32], strides = [1, 1]} : vector<16x256xf32> to vector<1x32xf32>
    %14 = vector.extract_strided_slice %1 {offsets = [6, 0], sizes = [1, 32], strides = [1, 1]} : vector<16x256xf32> to vector<1x32xf32>
    %15 = vector.extract_strided_slice %1 {offsets = [7, 0], sizes = [1, 128], strides = [1, 1]} : vector<16x256xf32> to vector<1x128xf32>
    %16 = vector.extract_strided_slice %1 {offsets = [8, 0], sizes = [1, 32], strides = [1, 1]} : vector<16x256xf32> to vector<1x32xf32>
    %17 = vector.extract_strided_slice %1 {offsets = [9, 0], sizes = [1, 256], strides = [1, 1]} : vector<16x256xf32> to vector<1x256xf32>
    %18 = vector.extract_strided_slice %1 {offsets = [10, 0], sizes = [1, 64], strides = [1, 1]} : vector<16x256xf32> to vector<1x64xf32>
    %19 = vector.extract_strided_slice %1 {offsets = [11, 0], sizes = [1, 64], strides = [1, 1]} : vector<16x256xf32> to vector<1x64xf32>
    %20 = vector.extract_strided_slice %1 {offsets = [12, 0], sizes = [1, 1], strides = [1, 1]} : vector<16x256xf32> to vector<1x1xf32>
    %cst = arith.constant dense<0.000000e+00> : vector<34x256xf32>
    %21 = tpu.matmul %0, %6, %cst {dimension_numbers = #tpu.dot_dimension_numbers<[1], [0], [0], [1], [0, 0, 1, 1], [], []>} : vector<34x32xf32>, vector<32x256xf32>, vector<34x256xf32> -> vector<34x256xf32>
    %22 = vector.broadcast %17 : vector<1x256xf32> to vector<34x256xf32>
    %23 = arith.addf %21, %22 : vector<34x256xf32>
    %cst_15 = arith.constant 0.000000e+00 : f32
    %24 = vector.broadcast %cst_15 : f32 to vector<34x256xf32>
    %25 = arith.maximumf %23, %24 : vector<34x256xf32>
    %cst_16 = arith.constant dense<0.000000e+00> : vector<34x64xf32>
    %26 = tpu.matmul %25, %7, %cst_16 {dimension_numbers = #tpu.dot_dimension_numbers<[1], [0], [0], [1], [0, 0, 1, 1], [], []>} : vector<34x256xf32>, vector<256x64xf32>, vector<34x64xf32> -> vector<34x64xf32>
    %27 = vector.broadcast %18 : vector<1x64xf32> to vector<34x64xf32>
    %28 = arith.addf %26, %27 : vector<34x64xf32>
    %cst_17 = arith.constant 0.000000e+00 : f32
    %29 = vector.broadcast %cst_17 : f32 to vector<34x64xf32>
    %30 = arith.maximumf %28, %29 : vector<34x64xf32>
    %31 = vector.broadcast %19 : vector<1x64xf32> to vector<34x64xf32>
    %32 = arith.mulf %30, %31 : vector<34x64xf32>
    %cst_18 = arith.constant dense<0.000000e+00> : vector<34xf32>
    %33 = vector.multi_reduction <add>, %32, %cst_18 [1] : vector<34x64xf32> to vector<34xf32>
    %34 = vector.shape_cast %33 : vector<34xf32> to vector<34x1xf32>
    %35 = vector.broadcast %20 : vector<1x1xf32> to vector<34x1xf32>
    %36 = arith.addf %34, %35 : vector<34x1xf32>
    %37 = arith.negf %36 : vector<34x1xf32>
    %38 = math.exp %37 : vector<34x1xf32>
    %cst_19 = arith.constant 1.000000e+00 : f32
    %39 = vector.broadcast %cst_19 : f32 to vector<34x1xf32>
    %40 = arith.addf %39, %38 : vector<34x1xf32>
    %41 = arith.divf %39, %40 : vector<34x1xf32>
    %cst_20 = arith.constant dense<0.000000e+00> : vector<34xf32>
    %42 = vector.multi_reduction <add>, %0, %cst_20 [1] : vector<34x32xf32> to vector<34xf32>
    %43 = vector.shape_cast %42 : vector<34xf32> to vector<34x1xf32>
    %cst_21 = arith.constant 3.200000e+01 : f32
    %44 = vector.broadcast %cst_21 : f32 to vector<34x1xf32>
    %45 = arith.divf %43, %44 : vector<34x1xf32>
    %46 = vector.broadcast %45 : vector<34x1xf32> to vector<34x32xf32>
    %47 = arith.subf %0, %46 : vector<34x32xf32>
    %48 = arith.mulf %47, %47 : vector<34x32xf32>
    %cst_22 = arith.constant dense<0.000000e+00> : vector<34xf32>
    %49 = vector.multi_reduction <add>, %48, %cst_22 [1] : vector<34x32xf32> to vector<34xf32>
    %50 = vector.shape_cast %49 : vector<34xf32> to vector<34x1xf32>
    %cst_23 = arith.constant 3.200000e+01 : f32
    %51 = vector.broadcast %cst_23 : f32 to vector<34x1xf32>
    %52 = arith.divf %50, %51 : vector<34x1xf32>
    %53 = vector.broadcast %45 : vector<34x1xf32> to vector<34x32xf32>
    %54 = arith.subf %0, %53 : vector<34x32xf32>
    %cst_24 = arith.constant 9.99999996E-13 : f32
    %55 = vector.broadcast %cst_24 : f32 to vector<34x1xf32>
    %56 = arith.addf %52, %55 : vector<34x1xf32>
    %57 = math.rsqrt %56 : vector<34x1xf32>
    %58 = vector.broadcast %57 : vector<34x1xf32> to vector<34x32xf32>
    %59 = arith.mulf %54, %58 : vector<34x32xf32>
    %60 = vector.broadcast %8 : vector<1x32xf32> to vector<34x32xf32>
    %61 = arith.mulf %59, %60 : vector<34x32xf32>
    %62 = vector.broadcast %9 : vector<1x32xf32> to vector<34x32xf32>
    %63 = arith.addf %61, %62 : vector<34x32xf32>
    %cst_25 = arith.constant dense<0.000000e+00> : vector<34x192xf32>
    %64 = tpu.matmul %63, %2, %cst_25 {dimension_numbers = #tpu.dot_dimension_numbers<[1], [0], [0], [1], [0, 0, 1, 1], [], []>} : vector<34x32xf32>, vector<32x192xf32>, vector<34x192xf32> -> vector<34x192xf32>
    %65 = vector.broadcast %12 : vector<1x192xf32> to vector<34x192xf32>
    %66 = arith.addf %64, %65 : vector<34x192xf32>
    %67 = tpu.iota {dimensions = array<i32: 1>} : vector<17x17xi32>
    %c0_i32 = arith.constant 0 : i32
    %68 = vector.broadcast %c0_i32 : i32 to vector<17x17xi32>
    %69 = arith.cmpi eq, %67, %68 : vector<17x17xi32>
    %70 = vector.extract_strided_slice %3 {offsets = [0, 0], sizes = [32, 32], strides = [1, 1]} : vector<64x32xf32> to vector<32x32xf32>
    %71 = vector.extract_strided_slice %66 {offsets = [0, 0], sizes = [17, 192], strides = [1, 1]} : vector<34x192xf32> to vector<17x192xf32>
    %72 = vector.extract_strided_slice %71 {offsets = [0, 0], sizes = [17, 16], strides = [1, 1]} : vector<17x192xf32> to vector<17x16xf32>
    %73 = vector.extract_strided_slice %71 {offsets = [0, 32], sizes = [17, 16], strides = [1, 1]} : vector<17x192xf32> to vector<17x16xf32>
    %74 = vector.extract_strided_slice %71 {offsets = [0, 64], sizes = [17, 16], strides = [1, 1]} : vector<17x192xf32> to vector<17x16xf32>
    %75 = tpu.transpose %73, [1, 0] : vector<17x16xf32> -> vector<16x17xf32>
    %cst_26 = arith.constant dense<0.000000e+00> : vector<17x17xf32>
    %76 = tpu.matmul %72, %75, %cst_26 {dimension_numbers = #tpu.dot_dimension_numbers<[1], [0], [0], [1], [0, 0, 1, 1], [], []>} : vector<17x16xf32>, vector<16x17xf32>, vector<17x17xf32> -> vector<17x17xf32>
    %cst_27 = arith.constant dense<0xFF800000> : vector<17xf32>
    %77 = vector.multi_reduction <maximumf>, %76, %cst_27 [1] : vector<17x17xf32> to vector<17xf32>
    %78 = vector.shape_cast %77 : vector<17xf32> to vector<17x1xf32>
    %79 = vector.broadcast %78 : vector<17x1xf32> to vector<17x17xf32>
    %80 = arith.subf %76, %79 : vector<17x17xf32>
    %81 = math.exp %80 : vector<17x17xf32>
    %cst_28 = arith.constant dense<0.000000e+00> : vector<17xf32>
    %82 = vector.multi_reduction <add>, %81, %cst_28 [1] : vector<17x17xf32> to vector<17xf32>
    %83 = vector.shape_cast %82 : vector<17xf32> to vector<17x1xf32>
    %84 = vector.broadcast %83 : vector<17x1xf32> to vector<17x17xf32>
    %85 = arith.divf %81, %84 : vector<17x17xf32>
    %cst_29 = arith.constant dense<0.000000e+00> : vector<17x16xf32>
    %86 = tpu.matmul %85, %74, %cst_29 {dimension_numbers = #tpu.dot_dimension_numbers<[1], [0], [0], [1], [0, 0, 1, 1], [], []>} : vector<17x17xf32>, vector<17x16xf32>, vector<17x16xf32> -> vector<17x16xf32>
    %87 = vector.extract_strided_slice %70 {offsets = [0, 0], sizes = [16, 32], strides = [1, 1]} : vector<32x32xf32> to vector<16x32xf32>
    %cst_30 = arith.constant dense<0.000000e+00> : vector<17x32xf32>
    %88 = tpu.matmul %86, %87, %cst_30 {dimension_numbers = #tpu.dot_dimension_numbers<[1], [0], [0], [1], [0, 0, 1, 1], [], []>} : vector<17x16xf32>, vector<16x32xf32>, vector<17x32xf32> -> vector<17x32xf32>
    %89 = vector.extract_strided_slice %71 {offsets = [0, 16], sizes = [17, 16], strides = [1, 1]} : vector<17x192xf32> to vector<17x16xf32>
    %90 = vector.extract_strided_slice %71 {offsets = [0, 48], sizes = [17, 16], strides = [1, 1]} : vector<17x192xf32> to vector<17x16xf32>
    %91 = vector.extract_strided_slice %71 {offsets = [0, 80], sizes = [17, 16], strides = [1, 1]} : vector<17x192xf32> to vector<17x16xf32>
    %92 = tpu.transpose %90, [1, 0] : vector<17x16xf32> -> vector<16x17xf32>
    %cst_31 = arith.constant dense<0.000000e+00> : vector<17x17xf32>
    %93 = tpu.matmul %89, %92, %cst_31 {dimension_numbers = #tpu.dot_dimension_numbers<[1], [0], [0], [1], [0, 0, 1, 1], [], []>} : vector<17x16xf32>, vector<16x17xf32>, vector<17x17xf32> -> vector<17x17xf32>
    %cst_32 = arith.constant dense<0xFF800000> : vector<17xf32>
    %94 = vector.multi_reduction <maximumf>, %93, %cst_32 [1] : vector<17x17xf32> to vector<17xf32>
    %95 = vector.shape_cast %94 : vector<17xf32> to vector<17x1xf32>
    %96 = vector.broadcast %95 : vector<17x1xf32> to vector<17x17xf32>
    %97 = arith.subf %93, %96 : vector<17x17xf32>
    %98 = math.exp %97 : vector<17x17xf32>
    %cst_33 = arith.constant dense<0.000000e+00> : vector<17xf32>
    %99 = vector.multi_reduction <add>, %98, %cst_33 [1] : vector<17x17xf32> to vector<17xf32>
    %100 = vector.shape_cast %99 : vector<17xf32> to vector<17x1xf32>
    %101 = vector.broadcast %100 : vector<17x1xf32> to vector<17x17xf32>
    %102 = arith.divf %98, %101 : vector<17x17xf32>
    %cst_34 = arith.constant dense<0.000000e+00> : vector<17x16xf32>
    %103 = tpu.matmul %102, %91, %cst_34 {dimension_numbers = #tpu.dot_dimension_numbers<[1], [0], [0], [1], [0, 0, 1, 1], [], []>} : vector<17x17xf32>, vector<17x16xf32>, vector<17x16xf32> -> vector<17x16xf32>
    %104 = vector.extract_strided_slice %70 {offsets = [16, 0], sizes = [16, 32], strides = [1, 1]} : vector<32x32xf32> to vector<16x32xf32>
    %cst_35 = arith.constant dense<0.000000e+00> : vector<17x32xf32>
    %105 = tpu.matmul %103, %104, %cst_35 {dimension_numbers = #tpu.dot_dimension_numbers<[1], [0], [0], [1], [0, 0, 1, 1], [], []>} : vector<17x16xf32>, vector<16x32xf32>, vector<17x32xf32> -> vector<17x32xf32>
    %106 = arith.addf %88, %105 : vector<17x32xf32>
    %107 = vector.broadcast %13 : vector<1x32xf32> to vector<17x32xf32>
    %108 = arith.addf %106, %107 : vector<17x32xf32>
    %109 = vector.extract_strided_slice %66 {offsets = [17, 0], sizes = [17, 192], strides = [1, 1]} : vector<34x192xf32> to vector<17x192xf32>
    %110 = vector.extract_strided_slice %109 {offsets = [0, 0], sizes = [17, 16], strides = [1, 1]} : vector<17x192xf32> to vector<17x16xf32>
    %111 = vector.extract_strided_slice %109 {offsets = [0, 32], sizes = [17, 16], strides = [1, 1]} : vector<17x192xf32> to vector<17x16xf32>
    %112 = vector.extract_strided_slice %109 {offsets = [0, 64], sizes = [17, 16], strides = [1, 1]} : vector<17x192xf32> to vector<17x16xf32>
    %113 = tpu.transpose %111, [1, 0] : vector<17x16xf32> -> vector<16x17xf32>
    %cst_36 = arith.constant dense<0.000000e+00> : vector<17x17xf32>
    %114 = tpu.matmul %110, %113, %cst_36 {dimension_numbers = #tpu.dot_dimension_numbers<[1], [0], [0], [1], [0, 0, 1, 1], [], []>} : vector<17x16xf32>, vector<16x17xf32>, vector<17x17xf32> -> vector<17x17xf32>
    %cst_37 = arith.constant dense<0xFF800000> : vector<17xf32>
    %115 = vector.multi_reduction <maximumf>, %114, %cst_37 [1] : vector<17x17xf32> to vector<17xf32>
    %116 = vector.shape_cast %115 : vector<17xf32> to vector<17x1xf32>
    %117 = vector.broadcast %116 : vector<17x1xf32> to vector<17x17xf32>
    %118 = arith.subf %114, %117 : vector<17x17xf32>
    %119 = math.exp %118 : vector<17x17xf32>
    %cst_38 = arith.constant dense<0.000000e+00> : vector<17xf32>
    %120 = vector.multi_reduction <add>, %119, %cst_38 [1] : vector<17x17xf32> to vector<17xf32>
    %121 = vector.shape_cast %120 : vector<17xf32> to vector<17x1xf32>
    %122 = vector.broadcast %121 : vector<17x1xf32> to vector<17x17xf32>
    %123 = arith.divf %119, %122 : vector<17x17xf32>
    %cst_39 = arith.constant dense<0.000000e+00> : vector<17x16xf32>
    %124 = tpu.matmul %123, %112, %cst_39 {dimension_numbers = #tpu.dot_dimension_numbers<[1], [0], [0], [1], [0, 0, 1, 1], [], []>} : vector<17x17xf32>, vector<17x16xf32>, vector<17x16xf32> -> vector<17x16xf32>
    %125 = vector.extract_strided_slice %70 {offsets = [0, 0], sizes = [16, 32], strides = [1, 1]} : vector<32x32xf32> to vector<16x32xf32>
    %cst_40 = arith.constant dense<0.000000e+00> : vector<17x32xf32>
    %126 = tpu.matmul %124, %125, %cst_40 {dimension_numbers = #tpu.dot_dimension_numbers<[1], [0], [0], [1], [0, 0, 1, 1], [], []>} : vector<17x16xf32>, vector<16x32xf32>, vector<17x32xf32> -> vector<17x32xf32>
    %127 = vector.extract_strided_slice %109 {offsets = [0, 16], sizes = [17, 16], strides = [1, 1]} : vector<17x192xf32> to vector<17x16xf32>
    %128 = vector.extract_strided_slice %109 {offsets = [0, 48], sizes = [17, 16], strides = [1, 1]} : vector<17x192xf32> to vector<17x16xf32>
    %129 = vector.extract_strided_slice %109 {offsets = [0, 80], sizes = [17, 16], strides = [1, 1]} : vector<17x192xf32> to vector<17x16xf32>
    %130 = tpu.transpose %128, [1, 0] : vector<17x16xf32> -> vector<16x17xf32>
    %cst_41 = arith.constant dense<0.000000e+00> : vector<17x17xf32>
    %131 = tpu.matmul %127, %130, %cst_41 {dimension_numbers = #tpu.dot_dimension_numbers<[1], [0], [0], [1], [0, 0, 1, 1], [], []>} : vector<17x16xf32>, vector<16x17xf32>, vector<17x17xf32> -> vector<17x17xf32>
    %cst_42 = arith.constant dense<0xFF800000> : vector<17xf32>
    %132 = vector.multi_reduction <maximumf>, %131, %cst_42 [1] : vector<17x17xf32> to vector<17xf32>
    %133 = vector.shape_cast %132 : vector<17xf32> to vector<17x1xf32>
    %134 = vector.broadcast %133 : vector<17x1xf32> to vector<17x17xf32>
    %135 = arith.subf %131, %134 : vector<17x17xf32>
    %136 = math.exp %135 : vector<17x17xf32>
    %cst_43 = arith.constant dense<0.000000e+00> : vector<17xf32>
    %137 = vector.multi_reduction <add>, %136, %cst_43 [1] : vector<17x17xf32> to vector<17xf32>
    %138 = vector.shape_cast %137 : vector<17xf32> to vector<17x1xf32>
    %139 = vector.broadcast %138 : vector<17x1xf32> to vector<17x17xf32>
    %140 = arith.divf %136, %139 : vector<17x17xf32>
    %cst_44 = arith.constant dense<0.000000e+00> : vector<17x16xf32>
    %141 = tpu.matmul %140, %129, %cst_44 {dimension_numbers = #tpu.dot_dimension_numbers<[1], [0], [0], [1], [0, 0, 1, 1], [], []>} : vector<17x17xf32>, vector<17x16xf32>, vector<17x16xf32> -> vector<17x16xf32>
    %142 = vector.extract_strided_slice %70 {offsets = [16, 0], sizes = [16, 32], strides = [1, 1]} : vector<32x32xf32> to vector<16x32xf32>
    %cst_45 = arith.constant dense<0.000000e+00> : vector<17x32xf32>
    %143 = tpu.matmul %141, %142, %cst_45 {dimension_numbers = #tpu.dot_dimension_numbers<[1], [0], [0], [1], [0, 0, 1, 1], [], []>} : vector<17x16xf32>, vector<16x32xf32>, vector<17x32xf32> -> vector<17x32xf32>
    %144 = arith.addf %126, %143 : vector<17x32xf32>
    %145 = vector.broadcast %13 : vector<1x32xf32> to vector<17x32xf32>
    %146 = arith.addf %144, %145 : vector<17x32xf32>
    %147 = vector.extract_strided_slice %3 {offsets = [32, 0], sizes = [32, 32], strides = [1, 1]} : vector<64x32xf32> to vector<32x32xf32>
    %148 = vector.extract_strided_slice %66 {offsets = [0, 0], sizes = [17, 192], strides = [1, 1]} : vector<34x192xf32> to vector<17x192xf32>
    %149 = vector.extract_strided_slice %148 {offsets = [0, 96], sizes = [17, 16], strides = [1, 1]} : vector<17x192xf32> to vector<17x16xf32>
    %150 = vector.extract_strided_slice %148 {offsets = [0, 128], sizes = [17, 16], strides = [1, 1]} : vector<17x192xf32> to vector<17x16xf32>
    %151 = vector.extract_strided_slice %148 {offsets = [0, 160], sizes = [17, 16], strides = [1, 1]} : vector<17x192xf32> to vector<17x16xf32>
    %152 = tpu.transpose %150, [1, 0] : vector<17x16xf32> -> vector<16x17xf32>
    %cst_46 = arith.constant dense<0.000000e+00> : vector<17x17xf32>
    %153 = tpu.matmul %149, %152, %cst_46 {dimension_numbers = #tpu.dot_dimension_numbers<[1], [0], [0], [1], [0, 0, 1, 1], [], []>} : vector<17x16xf32>, vector<16x17xf32>, vector<17x17xf32> -> vector<17x17xf32>
    %cst_47 = arith.constant -1.000000e+30 : f32
    %154 = vector.broadcast %cst_47 : f32 to vector<17x17xf32>
    %155 = arith.select %69, %154, %153 : vector<17x17xi1>, vector<17x17xf32>
    %cst_48 = arith.constant dense<0xFF800000> : vector<17xf32>
    %156 = vector.multi_reduction <maximumf>, %155, %cst_48 [1] : vector<17x17xf32> to vector<17xf32>
    %157 = vector.shape_cast %156 : vector<17xf32> to vector<17x1xf32>
    %158 = vector.broadcast %157 : vector<17x1xf32> to vector<17x17xf32>
    %159 = arith.subf %155, %158 : vector<17x17xf32>
    %160 = math.exp %159 : vector<17x17xf32>
    %cst_49 = arith.constant dense<0.000000e+00> : vector<17xf32>
    %161 = vector.multi_reduction <add>, %160, %cst_49 [1] : vector<17x17xf32> to vector<17xf32>
    %162 = vector.shape_cast %161 : vector<17xf32> to vector<17x1xf32>
    %163 = vector.broadcast %162 : vector<17x1xf32> to vector<17x17xf32>
    %164 = arith.divf %160, %163 : vector<17x17xf32>
    %cst_50 = arith.constant dense<0.000000e+00> : vector<17x16xf32>
    %165 = tpu.matmul %164, %151, %cst_50 {dimension_numbers = #tpu.dot_dimension_numbers<[1], [0], [0], [1], [0, 0, 1, 1], [], []>} : vector<17x17xf32>, vector<17x16xf32>, vector<17x16xf32> -> vector<17x16xf32>
    %166 = vector.extract_strided_slice %147 {offsets = [0, 0], sizes = [16, 32], strides = [1, 1]} : vector<32x32xf32> to vector<16x32xf32>
    %cst_51 = arith.constant dense<0.000000e+00> : vector<17x32xf32>
    %167 = tpu.matmul %165, %166, %cst_51 {dimension_numbers = #tpu.dot_dimension_numbers<[1], [0], [0], [1], [0, 0, 1, 1], [], []>} : vector<17x16xf32>, vector<16x32xf32>, vector<17x32xf32> -> vector<17x32xf32>
    %168 = vector.extract_strided_slice %148 {offsets = [0, 112], sizes = [17, 16], strides = [1, 1]} : vector<17x192xf32> to vector<17x16xf32>
    %169 = vector.extract_strided_slice %148 {offsets = [0, 144], sizes = [17, 16], strides = [1, 1]} : vector<17x192xf32> to vector<17x16xf32>
    %170 = vector.extract_strided_slice %148 {offsets = [0, 176], sizes = [17, 16], strides = [1, 1]} : vector<17x192xf32> to vector<17x16xf32>
    %171 = tpu.transpose %169, [1, 0] : vector<17x16xf32> -> vector<16x17xf32>
    %cst_52 = arith.constant dense<0.000000e+00> : vector<17x17xf32>
    %172 = tpu.matmul %168, %171, %cst_52 {dimension_numbers = #tpu.dot_dimension_numbers<[1], [0], [0], [1], [0, 0, 1, 1], [], []>} : vector<17x16xf32>, vector<16x17xf32>, vector<17x17xf32> -> vector<17x17xf32>
    %cst_53 = arith.constant -1.000000e+30 : f32
    %173 = vector.broadcast %cst_53 : f32 to vector<17x17xf32>
    %174 = arith.select %69, %173, %172 : vector<17x17xi1>, vector<17x17xf32>
    %cst_54 = arith.constant dense<0xFF800000> : vector<17xf32>
    %175 = vector.multi_reduction <maximumf>, %174, %cst_54 [1] : vector<17x17xf32> to vector<17xf32>
    %176 = vector.shape_cast %175 : vector<17xf32> to vector<17x1xf32>
    %177 = vector.broadcast %176 : vector<17x1xf32> to vector<17x17xf32>
    %178 = arith.subf %174, %177 : vector<17x17xf32>
    %179 = math.exp %178 : vector<17x17xf32>
    %cst_55 = arith.constant dense<0.000000e+00> : vector<17xf32>
    %180 = vector.multi_reduction <add>, %179, %cst_55 [1] : vector<17x17xf32> to vector<17xf32>
    %181 = vector.shape_cast %180 : vector<17xf32> to vector<17x1xf32>
    %182 = vector.broadcast %181 : vector<17x1xf32> to vector<17x17xf32>
    %183 = arith.divf %179, %182 : vector<17x17xf32>
    %cst_56 = arith.constant dense<0.000000e+00> : vector<17x16xf32>
    %184 = tpu.matmul %183, %170, %cst_56 {dimension_numbers = #tpu.dot_dimension_numbers<[1], [0], [0], [1], [0, 0, 1, 1], [], []>} : vector<17x17xf32>, vector<17x16xf32>, vector<17x16xf32> -> vector<17x16xf32>
    %185 = vector.extract_strided_slice %147 {offsets = [16, 0], sizes = [16, 32], strides = [1, 1]} : vector<32x32xf32> to vector<16x32xf32>
    %cst_57 = arith.constant dense<0.000000e+00> : vector<17x32xf32>
    %186 = tpu.matmul %184, %185, %cst_57 {dimension_numbers = #tpu.dot_dimension_numbers<[1], [0], [0], [1], [0, 0, 1, 1], [], []>} : vector<17x16xf32>, vector<16x32xf32>, vector<17x32xf32> -> vector<17x32xf32>
    %187 = arith.addf %167, %186 : vector<17x32xf32>
    %188 = vector.broadcast %14 : vector<1x32xf32> to vector<17x32xf32>
    %189 = arith.addf %187, %188 : vector<17x32xf32>
    %190 = vector.extract_strided_slice %66 {offsets = [17, 0], sizes = [17, 192], strides = [1, 1]} : vector<34x192xf32> to vector<17x192xf32>
    %191 = vector.extract_strided_slice %190 {offsets = [0, 96], sizes = [17, 16], strides = [1, 1]} : vector<17x192xf32> to vector<17x16xf32>
    %192 = vector.extract_strided_slice %190 {offsets = [0, 128], sizes = [17, 16], strides = [1, 1]} : vector<17x192xf32> to vector<17x16xf32>
    %193 = vector.extract_strided_slice %190 {offsets = [0, 160], sizes = [17, 16], strides = [1, 1]} : vector<17x192xf32> to vector<17x16xf32>
    %194 = tpu.transpose %192, [1, 0] : vector<17x16xf32> -> vector<16x17xf32>
    %cst_58 = arith.constant dense<0.000000e+00> : vector<17x17xf32>
    %195 = tpu.matmul %191, %194, %cst_58 {dimension_numbers = #tpu.dot_dimension_numbers<[1], [0], [0], [1], [0, 0, 1, 1], [], []>} : vector<17x16xf32>, vector<16x17xf32>, vector<17x17xf32> -> vector<17x17xf32>
    %cst_59 = arith.constant -1.000000e+30 : f32
    %196 = vector.broadcast %cst_59 : f32 to vector<17x17xf32>
    %197 = arith.select %69, %196, %195 : vector<17x17xi1>, vector<17x17xf32>
    %cst_60 = arith.constant dense<0xFF800000> : vector<17xf32>
    %198 = vector.multi_reduction <maximumf>, %197, %cst_60 [1] : vector<17x17xf32> to vector<17xf32>
    %199 = vector.shape_cast %198 : vector<17xf32> to vector<17x1xf32>
    %200 = vector.broadcast %199 : vector<17x1xf32> to vector<17x17xf32>
    %201 = arith.subf %197, %200 : vector<17x17xf32>
    %202 = math.exp %201 : vector<17x17xf32>
    %cst_61 = arith.constant dense<0.000000e+00> : vector<17xf32>
    %203 = vector.multi_reduction <add>, %202, %cst_61 [1] : vector<17x17xf32> to vector<17xf32>
    %204 = vector.shape_cast %203 : vector<17xf32> to vector<17x1xf32>
    %205 = vector.broadcast %204 : vector<17x1xf32> to vector<17x17xf32>
    %206 = arith.divf %202, %205 : vector<17x17xf32>
    %cst_62 = arith.constant dense<0.000000e+00> : vector<17x16xf32>
    %207 = tpu.matmul %206, %193, %cst_62 {dimension_numbers = #tpu.dot_dimension_numbers<[1], [0], [0], [1], [0, 0, 1, 1], [], []>} : vector<17x17xf32>, vector<17x16xf32>, vector<17x16xf32> -> vector<17x16xf32>
    %208 = vector.extract_strided_slice %147 {offsets = [0, 0], sizes = [16, 32], strides = [1, 1]} : vector<32x32xf32> to vector<16x32xf32>
    %cst_63 = arith.constant dense<0.000000e+00> : vector<17x32xf32>
    %209 = tpu.matmul %207, %208, %cst_63 {dimension_numbers = #tpu.dot_dimension_numbers<[1], [0], [0], [1], [0, 0, 1, 1], [], []>} : vector<17x16xf32>, vector<16x32xf32>, vector<17x32xf32> -> vector<17x32xf32>
    %210 = vector.extract_strided_slice %190 {offsets = [0, 112], sizes = [17, 16], strides = [1, 1]} : vector<17x192xf32> to vector<17x16xf32>
    %211 = vector.extract_strided_slice %190 {offsets = [0, 144], sizes = [17, 16], strides = [1, 1]} : vector<17x192xf32> to vector<17x16xf32>
    %212 = vector.extract_strided_slice %190 {offsets = [0, 176], sizes = [17, 16], strides = [1, 1]} : vector<17x192xf32> to vector<17x16xf32>
    %213 = tpu.transpose %211, [1, 0] : vector<17x16xf32> -> vector<16x17xf32>
    %cst_64 = arith.constant dense<0.000000e+00> : vector<17x17xf32>
    %214 = tpu.matmul %210, %213, %cst_64 {dimension_numbers = #tpu.dot_dimension_numbers<[1], [0], [0], [1], [0, 0, 1, 1], [], []>} : vector<17x16xf32>, vector<16x17xf32>, vector<17x17xf32> -> vector<17x17xf32>
    %cst_65 = arith.constant -1.000000e+30 : f32
    %215 = vector.broadcast %cst_65 : f32 to vector<17x17xf32>
    %216 = arith.select %69, %215, %214 : vector<17x17xi1>, vector<17x17xf32>
    %cst_66 = arith.constant dense<0xFF800000> : vector<17xf32>
    %217 = vector.multi_reduction <maximumf>, %216, %cst_66 [1] : vector<17x17xf32> to vector<17xf32>
    %218 = vector.shape_cast %217 : vector<17xf32> to vector<17x1xf32>
    %219 = vector.broadcast %218 : vector<17x1xf32> to vector<17x17xf32>
    %220 = arith.subf %216, %219 : vector<17x17xf32>
    %221 = math.exp %220 : vector<17x17xf32>
    %cst_67 = arith.constant dense<0.000000e+00> : vector<17xf32>
    %222 = vector.multi_reduction <add>, %221, %cst_67 [1] : vector<17x17xf32> to vector<17xf32>
    %223 = vector.shape_cast %222 : vector<17xf32> to vector<17x1xf32>
    %224 = vector.broadcast %223 : vector<17x1xf32> to vector<17x17xf32>
    %225 = arith.divf %221, %224 : vector<17x17xf32>
    %cst_68 = arith.constant dense<0.000000e+00> : vector<17x16xf32>
    %226 = tpu.matmul %225, %212, %cst_68 {dimension_numbers = #tpu.dot_dimension_numbers<[1], [0], [0], [1], [0, 0, 1, 1], [], []>} : vector<17x17xf32>, vector<17x16xf32>, vector<17x16xf32> -> vector<17x16xf32>
    %227 = vector.extract_strided_slice %147 {offsets = [16, 0], sizes = [16, 32], strides = [1, 1]} : vector<32x32xf32> to vector<16x32xf32>
    %cst_69 = arith.constant dense<0.000000e+00> : vector<17x32xf32>
    %228 = tpu.matmul %226, %227, %cst_69 {dimension_numbers = #tpu.dot_dimension_numbers<[1], [0], [0], [1], [0, 0, 1, 1], [], []>} : vector<17x16xf32>, vector<16x32xf32>, vector<17x32xf32> -> vector<17x32xf32>
    %229 = arith.addf %209, %228 : vector<17x32xf32>
    %230 = vector.broadcast %14 : vector<1x32xf32> to vector<17x32xf32>
    %231 = arith.addf %229, %230 : vector<17x32xf32>
    %232 = tpu.concatenate %0, %0 in 0 : vector<34x32xf32>, vector<34x32xf32> -> vector<68x32xf32>
    %233 = tpu.concatenate %108, %146, %189, %231 in 0 : vector<17x32xf32>, vector<17x32xf32>, vector<17x32xf32>, vector<17x32xf32> -> vector<68x32xf32>
    %234 = arith.addf %233, %232 : vector<68x32xf32>
    %cst_70 = arith.constant dense<0.000000e+00> : vector<68xf32>
    %235 = vector.multi_reduction <add>, %234, %cst_70 [1] : vector<68x32xf32> to vector<68xf32>
    %236 = vector.shape_cast %235 : vector<68xf32> to vector<68x1xf32>
    %cst_71 = arith.constant 3.200000e+01 : f32
    %237 = vector.broadcast %cst_71 : f32 to vector<68x1xf32>
    %238 = arith.divf %236, %237 : vector<68x1xf32>
    %239 = vector.broadcast %238 : vector<68x1xf32> to vector<68x32xf32>
    %240 = arith.subf %234, %239 : vector<68x32xf32>
    %241 = arith.mulf %240, %240 : vector<68x32xf32>
    %cst_72 = arith.constant dense<0.000000e+00> : vector<68xf32>
    %242 = vector.multi_reduction <add>, %241, %cst_72 [1] : vector<68x32xf32> to vector<68xf32>
    %243 = vector.shape_cast %242 : vector<68xf32> to vector<68x1xf32>
    %cst_73 = arith.constant 3.200000e+01 : f32
    %244 = vector.broadcast %cst_73 : f32 to vector<68x1xf32>
    %245 = arith.divf %243, %244 : vector<68x1xf32>
    %246 = vector.broadcast %238 : vector<68x1xf32> to vector<68x32xf32>
    %247 = arith.subf %234, %246 : vector<68x32xf32>
    %cst_74 = arith.constant 9.99999996E-13 : f32
    %248 = vector.broadcast %cst_74 : f32 to vector<68x1xf32>
    %249 = arith.addf %245, %248 : vector<68x1xf32>
    %250 = math.rsqrt %249 : vector<68x1xf32>
    %251 = vector.broadcast %250 : vector<68x1xf32> to vector<68x32xf32>
    %252 = arith.mulf %247, %251 : vector<68x32xf32>
    %253 = vector.broadcast %10 : vector<1x32xf32> to vector<68x32xf32>
    %254 = arith.mulf %252, %253 : vector<68x32xf32>
    %255 = vector.broadcast %11 : vector<1x32xf32> to vector<68x32xf32>
    %256 = arith.addf %254, %255 : vector<68x32xf32>
    %cst_75 = arith.constant dense<0.000000e+00> : vector<68x128xf32>
    %257 = tpu.matmul %256, %4, %cst_75 {dimension_numbers = #tpu.dot_dimension_numbers<[1], [0], [0], [1], [0, 0, 1, 1], [], []>} : vector<68x32xf32>, vector<32x128xf32>, vector<68x128xf32> -> vector<68x128xf32>
    %258 = vector.broadcast %15 : vector<1x128xf32> to vector<68x128xf32>
    %259 = arith.addf %257, %258 : vector<68x128xf32>
    %cst_76 = arith.constant 5.000000e-01 : f32
    %260 = vector.broadcast %cst_76 : f32 to vector<68x128xf32>
    %261 = arith.mulf %260, %259 : vector<68x128xf32>
    %cst_77 = arith.constant 0.707106769 : f32
    %262 = vector.broadcast %cst_77 : f32 to vector<68x128xf32>
    %263 = arith.mulf %259, %262 : vector<68x128xf32>
    %264 = math.erf %263 : vector<68x128xf32>
    %cst_78 = arith.constant 1.000000e+00 : f32
    %265 = vector.broadcast %cst_78 : f32 to vector<68x128xf32>
    %266 = arith.addf %265, %264 : vector<68x128xf32>
    %267 = arith.mulf %261, %266 : vector<68x128xf32>
    %cst_79 = arith.constant dense<0.000000e+00> : vector<68x32xf32>
    %268 = tpu.matmul %267, %5, %cst_79 {dimension_numbers = #tpu.dot_dimension_numbers<[1], [0], [0], [1], [0, 0, 1, 1], [], []>} : vector<68x128xf32>, vector<128x32xf32>, vector<68x32xf32> -> vector<68x32xf32>
    %269 = vector.broadcast %16 : vector<1x32xf32> to vector<68x32xf32>
    %270 = arith.addf %268, %269 : vector<68x32xf32>
    %271 = arith.addf %270, %234 : vector<68x32xf32>
    %272 = vector.extract_strided_slice %271 {offsets = [0, 0], sizes = [34, 32], strides = [1, 1]} : vector<68x32xf32> to vector<34x32xf32>
    %273 = tpu.iota {dimensions = array<i32: 0>} : vector<34x1xi32>
    %c0_i32_80 = arith.constant 0 : i32
    %274 = vector.broadcast %c0_i32_80 : i32 to vector<34x1xi32>
    %275 = arith.cmpi eq, %273, %274 : vector<34x1xi32>
    %c17_i32 = arith.constant 17 : i32
    %276 = vector.broadcast %c17_i32 : i32 to vector<34x1xi32>
    %277 = arith.cmpi eq, %273, %276 : vector<34x1xi32>
    %278 = arith.ori %275, %277 : vector<34x1xi1>
    %cst_81 = arith.constant 5.000000e-02 : f32
    %279 = vector.broadcast %cst_81 : f32 to vector<34x1xf32>
    %280 = arith.cmpf oge, %41, %279 : vector<34x1xf32>
    %281 = arith.ori %278, %280 : vector<34x1xi1>
    %282 = vector.shape_cast %281 : vector<34x1xi1> to vector<34x1xi1>
    %283 = vector.broadcast %282 : vector<34x1xi1> to vector<34x32xi1>
    %284 = arith.select %283, %272, %0 : vector<34x32xi1>, vector<34x32xf32>
    %c0_82 = arith.constant 0 : index
    %c0_83 = arith.constant 0 : index
    %285 = vector.load %arg9[%c0_82, %c0_83] : memref<34x32xf32, #tpu.memory_space<vmem>>, vector<34x32xf32>
    tpu.vector_store %arg9[%c0_82, %c0_83], %284 {strides = array<i32>} : memref<34x32xf32, #tpu.memory_space<vmem>>, vector<34x32xf32>,
    %cst_84 = arith.constant dense<true> : vector<34x1xi1>
    %286 = arith.xori %278, %cst_84 : vector<34x1xi1>
    %cst_85 = arith.constant 5.000000e-02 : f32
    %287 = vector.broadcast %cst_85 : f32 to vector<34x1xf32>
    %288 = arith.cmpf olt, %41, %287 : vector<34x1xf32>
    %289 = arith.extui %288 : vector<34x1xi1> to vector<34x1xi32>
    %290 = arith.sitofp %289 : vector<34x1xi32> to vector<34x1xf32>
    %cst_86 = arith.constant 0.000000e+00 : f32
    %291 = vector.broadcast %cst_86 : f32 to vector<34x1xf32>
    %292 = arith.select %286, %290, %291 : vector<34x1xi1>, vector<34x1xf32>
    %cst_87 = arith.constant dense<0.000000e+00> : vector<1xf32>
    %293 = vector.multi_reduction <add>, %292, %cst_87 [0] : vector<34x1xf32> to vector<1xf32>
    %294 = vector.shape_cast %293 : vector<1xf32> to vector<1x1xf32>
    %295 = vector.extract_strided_slice %271 {offsets = [34, 0], sizes = [34, 32], strides = [1, 1]} : vector<68x32xf32> to vector<34x32xf32>
    %296 = arith.mulf %295, %0 : vector<34x32xf32>
    %cst_88 = arith.constant dense<0.000000e+00> : vector<34xf32>
    %297 = vector.multi_reduction <add>, %296, %cst_88 [1] : vector<34x32xf32> to vector<34xf32>
    %298 = vector.shape_cast %297 : vector<34xf32> to vector<34x1xf32>
    %299 = arith.mulf %295, %295 : vector<34x32xf32>
    %cst_89 = arith.constant dense<0.000000e+00> : vector<34xf32>
    %300 = vector.multi_reduction <add>, %299, %cst_89 [1] : vector<34x32xf32> to vector<34xf32>
    %301 = vector.shape_cast %300 : vector<34xf32> to vector<34x1xf32>
    %302 = arith.mulf %0, %0 : vector<34x32xf32>
    %cst_90 = arith.constant dense<0.000000e+00> : vector<34xf32>
    %303 = vector.multi_reduction <add>, %302, %cst_90 [1] : vector<34x32xf32> to vector<34xf32>
    %304 = vector.shape_cast %303 : vector<34xf32> to vector<34x1xf32>
    %305 = arith.mulf %301, %304 : vector<34x1xf32>
    %cst_91 = arith.constant 1.000000e-16 : f32
    %306 = vector.broadcast %cst_91 : f32 to vector<34x1xf32>
    %307 = arith.maximumf %305, %306 : vector<34x1xf32>
    %308 = math.rsqrt %307 : vector<34x1xf32>
    %309 = arith.mulf %298, %308 : vector<34x1xf32>
    %cst_92 = arith.constant 1.000000e+00 : f32
    %310 = vector.broadcast %cst_92 : f32 to vector<34x1xf32>
    %311 = arith.addf %309, %310 : vector<34x1xf32>
    %cst_93 = arith.constant 5.000000e-01 : f32
    %312 = vector.broadcast %cst_93 : f32 to vector<34x1xf32>
    %313 = arith.mulf %311, %312 : vector<34x1xf32>
    %314 = arith.subf %295, %0 : vector<34x32xf32>
    %315 = arith.mulf %314, %314 : vector<34x32xf32>
    %cst_94 = arith.constant dense<0.000000e+00> : vector<34xf32>
    %316 = vector.multi_reduction <add>, %315, %cst_94 [1] : vector<34x32xf32> to vector<34xf32>
    %317 = vector.shape_cast %316 : vector<34xf32> to vector<34x1xf32>
    %cst_95 = arith.constant 9.99999997E-7 : f32
    %318 = vector.broadcast %cst_95 : f32 to vector<34x1xf32>
    %319 = arith.addf %301, %318 : vector<34x1xf32>
    %320 = arith.divf %317, %319 : vector<34x1xf32>
    %cst_96 = arith.constant 0.000000e+00 : f32
    %321 = vector.broadcast %cst_96 : f32 to vector<34x1xf32>
    %322 = arith.subf %321, %320 : vector<34x1xf32>
    %323 = math.exp %322 : vector<34x1xf32>
    %cst_97 = arith.constant 5.000000e-01 : f32
    %324 = vector.broadcast %cst_97 : f32 to vector<34x1xf32>
    %325 = arith.mulf %324, %313 : vector<34x1xf32>
    %cst_98 = arith.constant 5.000000e-01 : f32
    %326 = vector.broadcast %cst_98 : f32 to vector<34x1xf32>
    %327 = arith.mulf %326, %323 : vector<34x1xf32>
    %328 = arith.addf %325, %327 : vector<34x1xf32>
    %cst_99 = arith.constant 0.949999988 : f32
    %329 = vector.broadcast %cst_99 : f32 to vector<34x1xf32>
    %330 = arith.cmpf olt, %328, %329 : vector<34x1xf32>
    %331 = arith.extui %330 : vector<34x1xi1> to vector<34x1xi32>
    %332 = arith.sitofp %331 : vector<34x1xi32> to vector<34x1xf32>
    %cst_100 = arith.constant 9.99999996E-13 : f32
    %cst_101 = arith.constant 1.000000e+00 : f32
    %333 = vector.broadcast %cst_100 : f32 to vector<34x1xf32>
    %334 = arith.maximumf %333, %41 : vector<34x1xf32>
    %335 = vector.broadcast %cst_101 : f32 to vector<34x1xf32>
    %336 = arith.minimumf %335, %334 : vector<34x1xf32>
    %337 = math.log %336 : vector<34x1xf32>
    %338 = arith.mulf %332, %337 : vector<34x1xf32>
    %cst_102 = arith.constant 1.000000e+00 : f32
    %339 = vector.broadcast %cst_102 : f32 to vector<34x1xf32>
    %340 = arith.subf %339, %332 : vector<34x1xf32>
    %cst_103 = arith.constant 1.000000e+00 : f32
    %341 = vector.broadcast %cst_103 : f32 to vector<34x1xf32>
    %342 = arith.subf %341, %336 : vector<34x1xf32>
    %343 = math.log %342 : vector<34x1xf32>
    %344 = arith.mulf %340, %343 : vector<34x1xf32>
    %345 = arith.addf %338, %344 : vector<34x1xf32>
    %cst_104 = arith.constant dense<true> : vector<34x1xi1>
    %346 = arith.xori %278, %cst_104 : vector<34x1xi1>
    %cst_105 = arith.constant 0.000000e+00 : f32
    %347 = vector.broadcast %cst_105 : f32 to vector<34x1xf32>
    %348 = arith.select %346, %345, %347 : vector<34x1xi1>, vector<34x1xf32>
    %cst_106 = arith.constant dense<0.000000e+00> : vector<1xf32>
    %349 = vector.multi_reduction <add>, %348, %cst_106 [0] : vector<34x1xf32> to vector<1xf32>
    %350 = vector.shape_cast %349 : vector<1xf32> to vector<1x1xf32>
    %cst_107 = arith.constant 0.000000e+00 : f32
    %351 = vector.broadcast %cst_107 : f32 to vector<1x1xf32>
    %352 = arith.subf %351, %350 : vector<1x1xf32>
    %cst_108 = arith.constant 3.125000e-02 : f32
    %353 = vector.broadcast %cst_108 : f32 to vector<1x1xf32>
    %354 = arith.mulf %352, %353 : vector<1x1xf32>
    %355 = tpu.concatenate %354, %294 in 1 : vector<1x1xf32>, vector<1x1xf32> -> vector<1x2xf32>
    %c0_109 = arith.constant 0 : index
    %c0_110 = arith.constant 0 : index
    %356 = vector.load %arg10[%c0_109, %c0_110] : memref<1x2xf32, #tpu.memory_space<vmem>>, vector<1x2xf32>
    tpu.vector_store %arg10[%c0_109, %c0_110], %355 {strides = array<i32>} : memref<1x2xf32, #tpu.memory_space<vmem>>, vector<1x2xf32>,
    return
  }
  func.func @transform_0(%arg0: i32) -> (i32, i32) {
    %c0_i32 = arith.constant 0 : i32
    %c0_i32_0 = arith.constant 0 : i32
    %c0_i32_1 = arith.constant 0 : i32
    return %c0_i32, %c0_i32_0 : i32, i32
  }
  func.func @transform_1(%arg0: i32) -> (i32, i32) {
    %c0_i32 = arith.constant 0 : i32
    %c0_i32_0 = arith.constant 0 : i32
    %c0_i32_1 = arith.constant 0 : i32
    return %c0_i32, %c0_i32_0 : i32, i32
  }
  func.func @transform_2(%arg0: i32) -> (i32, i32) {
    %c0_i32 = arith.constant 0 : i32
    %c0_i32_0 = arith.constant 0 : i32
    %c0_i32_1 = arith.constant 0 : i32
    return %c0_i32, %c0_i32_0 : i32, i32
  }
  func.func @transform_3(%arg0: i32) -> (i32, i32) {
    %c0_i32 = arith.constant 0 : i32
    %c0_i32_0 = arith.constant 0 : i32
    %c0_i32_1 = arith.constant 0 : i32
    return %c0_i32, %c0_i32_0 : i32, i32
  }
  func.func @transform_4(%arg0: i32) -> (i32, i32) {
    %c0_i32 = arith.constant 0 : i32
    %c0_i32_0 = arith.constant 0 : i32
    %c0_i32_1 = arith.constant 0 : i32
    return %c0_i32, %c0_i32_0 : i32, i32
  }
  func.func @transform_5(%arg0: i32) -> (i32, i32) {
    %c0_i32 = arith.constant 0 : i32
    %c0_i32_0 = arith.constant 0 : i32
    %c0_i32_1 = arith.constant 0 : i32
    return %c0_i32, %c0_i32_0 : i32, i32
  }
  func.func @transform_6(%arg0: i32) -> (i32, i32) {
    %c0_i32 = arith.constant 0 : i32
    %c0_i32_0 = arith.constant 0 : i32
    %c0_i32_1 = arith.constant 0 : i32
    return %c0_i32, %c0_i32_0 : i32, i32
  }
  func.func @transform_7(%arg0: i32) -> (i32, i32) {
    %c0_i32 = arith.constant 0 : i32
    %c0_i32_0 = arith.constant 0 : i32
    %c0_i32_1 = arith.constant 0 : i32
    return %c0_i32, %c0_i32_0 : i32, i32
  }
  func.func @transform_8(%arg0: i32) -> (i32, i32) {
    %c0_i32 = arith.constant 0 : i32
    %c0_i32_0 = arith.constant 0 : i32
    %c0_i32_1 = arith.constant 0 : i32
    return %c0_i32, %c0_i32_0 : i32, i32
  }
  func.func @transform_9(%arg0: i32) -> (i32, i32) {
    %c0_i32 = arith.constant 0 : i32
    %c0_i32_0 = arith.constant 0 : i32
    %c0_i32_1 = arith.constant 0 : i32
    return %c0_i32, %c0_i32_0 : i32, i32
  }
}

</mosaic_0001>

<llo_original>
// kernel: tpu_custom_call.1
$region0: #{tpu_custom_call.1}
  #allocation0 [shape = 'u32[]', space=smem, size = 0x4, offset = 0x4, fixed_abs, tag = 'smem constant byte address 0x4 - core index']
  #allocation1 [shape = 'u32[144,128]{1,0:T(1,128)}', space=vmem, size = 0x12000, scoped, tag = 'internal scratch']
  %s0 = inlined_call_operand.vmem [shape: f32[34,32], index: 0, kind: input, shape index: {}]
  %s1 = inlined_call_operand.vmem [shape: f32[16,256], index: 1, kind: input, shape index: {}]
  %s2 = inlined_call_operand.vmem [shape: f32[32,192], index: 2, kind: input, shape index: {}]
  %s3 = inlined_call_operand.vmem [shape: f32[64,32], index: 3, kind: input, shape index: {}]
  %s4 = inlined_call_operand.vmem [shape: f32[32,128], index: 4, kind: input, shape index: {}]
  %s5 = inlined_call_operand.vmem [shape: f32[128,32], index: 5, kind: input, shape index: {}]
  %s6 = inlined_call_operand.vmem [shape: f32[32,256], index: 6, kind: input, shape index: {}]
  %s7 = inlined_call_operand.vmem [shape: f32[256,64], index: 7, kind: input, shape index: {}]
  %s8 = inlined_call_operand.vmem [shape: f32[34,32], index: 8, kind: output, shape index: {0}]
  %s9 = inlined_call_operand.hbm [shape: f32[1,2], index: 9, kind: output, shape index: {1}]
  %10 = xla_tuple %s8, %s9
  %s11 = sld [smem:[#allocation0]]
  $region50: #{tpu_custom_call.1} parent=0
    _
  %s13 = ssub.s32 1, %s11
  %s14 = scalar_select 0, %s13, %s11
  $region1: #{tpu_custom_call.1} parent=0
    #allocation2 [shape = 'u8[512]{0}', space=vmem, size = 0x400, scoped, tag = 'output window, operand 1, single buffered']
    #allocation3 [shape = 's32[1]{0}', space=sflag, size = 0x4, scoped, tag = 'scoped memory for tpu_custom_call.1']
    %15 = vsyncpa [#allocation3], 0
    // Predicated region
    $region2: #{tpu_custom_call.1} parent=1 // pred_check
      _
    $region3: #{tpu_custom_call.1} parent=1 // pred_check_branch
      %17 = sbr.rel (0) target = $region5
    $region4: #{tpu_custom_call.1} parent=1 // pred_region
      _
    $region5: #{tpu_custom_call.1} parent=1 // pred_fallthru
      _
    // Predicated region
    $region6: #{tpu_custom_call.1} parent=1 // pred_check
      _
    $region7: #{tpu_custom_call.1} parent=1 // pred_check_branch
      %19 = sbr.rel (0) target = $region9
    $region8: #{tpu_custom_call.1} parent=1 // pred_region
      _
    $region9: #{tpu_custom_call.1} parent=1 // pred_fallthru
      _
    // Predicated region
    $region10: #{tpu_custom_call.1} parent=1 // pred_check
      _
    $region11: #{tpu_custom_call.1} parent=1 // pred_check_branch
      %21 = sbr.rel (0) target = $region13
    $region12: #{tpu_custom_call.1} parent=1 // pred_region
      _
    $region13: #{tpu_custom_call.1} parent=1 // pred_fallthru
      _
    // Predicated region
    $region14: #{tpu_custom_call.1} parent=1 // pred_check
      _
    $region15: #{tpu_custom_call.1} parent=1 // pred_check_branch
      %23 = sbr.rel (0) target = $region17
    $region16: #{tpu_custom_call.1} parent=1 // pred_region
      _
    $region17: #{tpu_custom_call.1} parent=1 // pred_fallthru
      _
    // Predicated region
    $region18: #{tpu_custom_call.1} parent=1 // pred_check
      _
    $region19: #{tpu_custom_call.1} parent=1 // pred_check_branch
      %25 = sbr.rel (0) target = $region21
    $region20: #{tpu_custom_call.1} parent=1 // pred_region
      _
    $region21: #{tpu_custom_call.1} parent=1 // pred_fallthru
      _
    // Predicated region
    $region22: #{tpu_custom_call.1} parent=1 // pred_check
      _
    $region23: #{tpu_custom_call.1} parent=1 // pred_check_branch
      %27 = sbr.rel (0) target = $region25
    $region24: #{tpu_custom_call.1} parent=1 // pred_region
      _
    $region25: #{tpu_custom_call.1} parent=1 // pred_fallthru
      _
    // Predicated region
    $region26: #{tpu_custom_call.1} parent=1 // pred_check
      _
    $region27: #{tpu_custom_call.1} parent=1 // pred_check_branch
      %29 = sbr.rel (0) target = $region29
    $region28: #{tpu_custom_call.1} parent=1 // pred_region
      _
    $region29: #{tpu_custom_call.1} parent=1 // pred_fallthru
      _
    // Predicated region
    $region30: #{tpu_custom_call.1} parent=1 // pred_check
      _
    $region31: #{tpu_custom_call.1} parent=1 // pred_check_branch
      %31 = sbr.rel (0) target = $region33
    $region32: #{tpu_custom_call.1} parent=1 // pred_region
      _
    $region33: #{tpu_custom_call.1} parent=1 // pred_fallthru
      _
    %v32 = vld [vmem:[%s0] sm:$0xff]
    %v33 = vld [vmem:[%s0 + $0x8] sm:$0xff]
    %v34 = vld [vmem:[%s0 + $0x10] sm:$0xff]
    %v35 = vld [vmem:[%s0 + $0x18] sm:$0xff]
    %v36 = vld [vmem:[%s0 + $0x20] sm:$0x3]
    %v37 = vld [vmem:[%s1] sm:$0xff]
    %v38 = vld [vmem:[%s1 + $0x8] sm:$0xff]
    %v39 = vld [vmem:[%s1 + $0x10] sm:$0xff]
    %v40 = vld [vmem:[%s1 + $0x18] sm:$0xff]
    %v41 = vld [vmem:[%s2] sm:$0xff]
    %v42 = vld [vmem:[%s2 + $0x8] sm:$0xff]
    %v43 = vld [vmem:[%s2 + $0x10] sm:$0xff]
    %v44 = vld [vmem:[%s2 + $0x18] sm:$0xff]
    %v45 = vld [vmem:[%s2 + $0x20] sm:$0xff]
    %v46 = vld [vmem:[%s2 + $0x28] sm:$0xff]
    %v47 = vld [vmem:[%s2 + $0x30] sm:$0xff]
    %v48 = vld [vmem:[%s2 + $0x38] sm:$0xff]
    %v49 = vld [vmem:[%s3] sm:$0xff]
    %v50 = vld [vmem:[%s3 + $0x8] sm:$0xff]
    %v51 = vld [vmem:[%s3 + $0x10] sm:$0xff]
    %v52 = vld [vmem:[%s3 + $0x18] sm:$0xff]
    %v53 = vld [vmem:[%s3 + $0x20] sm:$0xff]
    %v54 = vld [vmem:[%s3 + $0x28] sm:$0xff]
    %v55 = vld [vmem:[%s3 + $0x30] sm:$0xff]
    %v56 = vld [vmem:[%s3 + $0x38] sm:$0xff]
    %v57 = vld [vmem:[%s4] sm:$0xff]
    %v58 = vld [vmem:[%s4 + $0x8] sm:$0xff]
    %v59 = vld [vmem:[%s4 + $0x10] sm:$0xff]
    %v60 = vld [vmem:[%s4 + $0x18] sm:$0xff]
    %v61 = vld [vmem:[%s5] sm:$0xff]
    %v62 = vld [vmem:[%s5 + $0x8] sm:$0xff]
    %v63 = vld [vmem:[%s5 + $0x10] sm:$0xff]
    %v64 = vld [vmem:[%s5 + $0x18] sm:$0xff]
    %v65 = vld [vmem:[%s5 + $0x20] sm:$0xff]
    %v66 = vld [vmem:[%s5 + $0x28] sm:$0xff]
    %v67 = vld [vmem:[%s5 + $0x30] sm:$0xff]
    %v68 = vld [vmem:[%s5 + $0x38] sm:$0xff]
    %v69 = vld [vmem:[%s5 + $0x40] sm:$0xff]
    %v70 = vld [vmem:[%s5 + $0x48] sm:$0xff]
    %v71 = vld [vmem:[%s5 + $0x50] sm:$0xff]
    %v72 = vld [vmem:[%s5 + $0x58] sm:$0xff]
    %v73 = vld [vmem:[%s5 + $0x60] sm:$0xff]
    %v74 = vld [vmem:[%s5 + $0x68] sm:$0xff]
    %v75 = vld [vmem:[%s5 + $0x70] sm:$0xff]
    %v76 = vld [vmem:[%s5 + $0x78] sm:$0xff]
    %v77 = vld [vmem:[%s6] sm:$0xff]
    %v78 = vld [vmem:[%s6 + $0x8] sm:$0xff]
    %v79 = vld [vmem:[%s6 + $0x10] sm:$0xff]
    %v80 = vld [vmem:[%s6 + $0x18] sm:$0xff]
    %v81 = vld [vmem:[%s6 + $0x20] sm:$0xff]
    %v82 = vld [vmem:[%s6 + $0x28] sm:$0xff]
    %v83 = vld [vmem:[%s6 + $0x30] sm:$0xff]
    %v84 = vld [vmem:[%s6 + $0x38] sm:$0xff]
    %v85 = vld [vmem:[%s7] sm:$0xff]
    %v86 = vld [vmem:[%s7 + $0x8] sm:$0xff]
    %v87 = vld [vmem:[%s7 + $0x10] sm:$0xff]
    %v88 = vld [vmem:[%s7 + $0x18] sm:$0xff]
    %v89 = vld [vmem:[%s7 + $0x20] sm:$0xff]
    %v90 = vld [vmem:[%s7 + $0x28] sm:$0xff]
    %v91 = vld [vmem:[%s7 + $0x30] sm:$0xff]
    %v92 = vld [vmem:[%s7 + $0x38] sm:$0xff]
    %v93 = vld [vmem:[%s7 + $0x40] sm:$0xff]
    %v94 = vld [vmem:[%s7 + $0x48] sm:$0xff]
    %v95 = vld [vmem:[%s7 + $0x50] sm:$0xff]
    %v96 = vld [vmem:[%s7 + $0x58] sm:$0xff]
    %v97 = vld [vmem:[%s7 + $0x60] sm:$0xff]
    %v98 = vld [vmem:[%s7 + $0x68] sm:$0xff]
    %v99 = vld [vmem:[%s7 + $0x70] sm:$0xff]
    %v100 = vld [vmem:[%s7 + $0x78] sm:$0xff]
    %v101 = vld [vmem:[%s7 + $0x80] sm:$0xff]
    %v102 = vld [vmem:[%s7 + $0x88] sm:$0xff]
    %v103 = vld [vmem:[%s7 + $0x90] sm:$0xff]
    %v104 = vld [vmem:[%s7 + $0x98] sm:$0xff]
    %v105 = vld [vmem:[%s7 + $0xa0] sm:$0xff]
    %v106 = vld [vmem:[%s7 + $0xa8] sm:$0xff]
    %v107 = vld [vmem:[%s7 + $0xb0] sm:$0xff]
    %v108 = vld [vmem:[%s7 + $0xb8] sm:$0xff]
    %v109 = vld [vmem:[%s7 + $0xc0] sm:$0xff]
    %v110 = vld [vmem:[%s7 + $0xc8] sm:$0xff]
    %v111 = vld [vmem:[%s7 + $0xd0] sm:$0xff]
    %v112 = vld [vmem:[%s7 + $0xd8] sm:$0xff]
    %v113 = vld [vmem:[%s7 + $0xe0] sm:$0xff]
    %v114 = vld [vmem:[%s7 + $0xe8] sm:$0xff]
    %v115 = vld [vmem:[%s7 + $0xf0] sm:$0xff]
    %v116 = vld [vmem:[%s7 + $0xf8] sm:$0xff]
    %v117 = vlaneseq
    %v118 = vshrl.u32 %v117, 7
    %v119 = vsub.s32 1, %v118
    %v120 = vrot.slane %v39, %v119
    %v121 = vlaneseq
    %v122 = vshrl.u32 %v121, 7
    %v123 = vsub.s32 1, %v122
    %v124 = vrot.slane %v40, %v123
    %vm125 = vcmask 261120
    %v127 = vsel %vm125, %v32, 0
    %v130 = vsel %vm125, %v33, 0
    %v133 = vsel %vm125, %v34, 0
    %v136 = vsel %vm125, %v35, 0
    %v139 = vsel %vm125, %v36, 0
    %141 = vmatprep.subr.mxu0 0.0
    %142 = vmatpush1.msra.mxu0 0.0
    %143 = vmatprep.subr.mxu0 0.0
    %144 = vmatpush1.msra.mxu0 0.0
    %145 = vmatprep.subr.mxu0 0.0
    %146 = vmatpush1.msra.mxu0 0.0
    %147 = vmatprep.subr.mxu0 0.0
    %148 = vmatpush1.msra.mxu0 0.0
    %149 = vmatprep.subr.mxu0 0.0
    %150 = vmatpush1.msra.mxu0 0.0
    %151 = vmatprep.subr.mxu0 0.0
    %152 = vmatpush1.msra.mxu0 0.0
    %153 = vmatprep.subr.mxu0 0.0
    %154 = vmatpush1.msra.mxu0 0.0
    %155 = vmatprep.subr.mxu0 0.0
    %156 = vmatpush1.msra.mxu0 0.0
    %157 = vmatprep.subr.mxu0 0.0
    %158 = vmatpush1.msra.mxu0 0.0
    %159 = vmatprep.subr.mxu0 0.0
    %160 = vmatpush1.msra.mxu0 0.0
    %161 = vmatprep.subr.mxu0 0.0
    %162 = vmatpush1.msra.mxu0 0.0
    %163 = vmatprep.subr.mxu0 0.0
    %164 = vmatpush1.msra.mxu0 0.0
    %165 = vmatprep.subr.mxu0 %v84
    %166 = vmatpush1.msra.mxu0 %v83
    %167 = vmatprep.subr.mxu0 %v82
    %168 = vmatpush1.msra.mxu0 %v81
    %169 = vmatprep.subr.mxu0 %v80
    %170 = vmatpush1.msra.mxu0 %v79
    %171 = vmatprep.subr.mxu0 %v78
    %172 = vmatpush1.msra.mxu0 %v77
    %173 = vmatprep.subr.mxu0 0.0
    %174 = vmatpush2.msra.mxu0 0.0
    %175 = vmatprep.subr.mxu0 0.0
    %176 = vmatpush2.msra.mxu0 0.0
    %177 = vmatprep.subr.mxu0 0.0
    %178 = vmatpush2.msra.mxu0 0.0
    %179 = vmatprep.subr.mxu0 0.0
    %180 = vmatpush2.msra.mxu0 0.0
    %181 = vmatprep.subr.mxu0 0.0
    %182 = vmatpush2.msra.mxu0 0.0
    %183 = vmatprep.subr.mxu0 0.0
    %184 = vmatpush2.msra.mxu0 0.0
    %185 = vmatprep.subr.mxu0 0.0
    %186 = vmatpush2.msra.mxu0 0.0
    %187 = vmatprep.subr.mxu0 0.0
    %188 = vmatpush2.msra.mxu0 0.0
    %189 = vmatprep.subr.mxu0 0.0
    %190 = vmatpush2.msra.mxu0 0.0
    %191 = vmatprep.subr.mxu0 0.0
    %192 = vmatpush2.msra.mxu0 0.0
    %193 = vmatprep.subr.mxu0 0.0
    %194 = vmatpush2.msra.mxu0 0.0
    %195 = vmatprep.subr.mxu0 0.0
    %196 = vmatpush2.msra.mxu0 0.0
    %197 = vmatprep.subr.mxu0 0.0
    %198 = vmatpush2.msra.mxu0 0.0
    %199 = vmatprep.subr.mxu0 0.0
    %200 = vmatpush2.msra.mxu0 0.0
    %201 = vmatprep.subr.mxu0 0.0
    %202 = vmatpush2.msra.mxu0 0.0
    %203 = vmatprep.subr.mxu0 0.0
    %204 = vmatpush2.msra.mxu0 0.0
    %205 = vmatprep.mubr.f32.mxu0 0.0
    %206 = vmatmul.mubr.f32.gmra.mxu0 %v127
    %v207 = vpop.f32.mrf.mxu0
    %v208 = vadd.f32 %v120, %v207
    %v209 = vpop.f32.mrf.mxu0
    %v210 = vadd.f32 %v124, %v209
    %211 = vmatprep.mubr.f32.mxu0 0.0
    %212 = vmatmul.mubr.f32.gmra.mxu0 %v130
    %v213 = vpop.f32.mrf.mxu0
    %v214 = vadd.f32 %v120, %v213
    %v215 = vpop.f32.mrf.mxu0
    %v216 = vadd.f32 %v124, %v215
    %217 = vmatprep.mubr.f32.mxu0 0.0
    %218 = vmatmul.mubr.f32.gmra.mxu0 %v133
    %v219 = vpop.f32.mrf.mxu0
    %v220 = vadd.f32 %v120, %v219
    %v221 = vpop.f32.mrf.mxu0
    %v222 = vadd.f32 %v124, %v221
    %223 = vmatprep.mubr.f32.mxu0 0.0
    %224 = vmatmul.mubr.f32.gmra.mxu0 %v136
    %v225 = vpop.f32.mrf.mxu0
    %v226 = vadd.f32 %v120, %v225
    %v227 = vpop.f32.mrf.mxu0
    %v228 = vadd.f32 %v124, %v227
    %229 = vmatprep.mubr.f32.mxu0 0.0
    %230 = vmatmul.mubr.f32.gmra.mxu0 %v139
    %v231 = vpop.f32.mrf.mxu0
    %v232 = vadd.f32 %v120, %v231
    %v233 = vpop.f32.mrf.mxu0
    %v234 = vadd.f32 %v124, %v233
    %235 = vdwg.mxu0
    %v236 = vmax.f32 %v208, 0.0
    %v237 = vmax.f32 %v210, 0.0
    %v238 = vmax.f32 %v214, 0.0
    %v239 = vmax.f32 %v216, 0.0
    %v240 = vmax.f32 %v220, 0.0
    %v241 = vmax.f32 %v222, 0.0
    %v242 = vmax.f32 %v226, 0.0
    %v243 = vmax.f32 %v228, 0.0
    %v244 = vmax.f32 %v232, 0.0
    %v245 = vmax.f32 %v234, 0.0
    %v246 = vlaneseq
    %v247 = vshrl.u32 %v246, 7
    %v248 = vsub.s32 2, %v247
    %v249 = vrot.slane %v39, %v248
    %250 = vmatprep.subr.mxu0 0.0
    %251 = vmatpush1.msra.mxu0 %v100
    %252 = vmatprep.subr.mxu0 0.0
    %253 = vmatpush1.msra.mxu0 %v99
    %254 = vmatprep.subr.mxu0 0.0
    %255 = vmatpush1.msra.mxu0 %v98
    %256 = vmatprep.subr.mxu0 0.0
    %257 = vmatpush1.msra.mxu0 %v97
    %258 = vmatprep.subr.mxu0 0.0
    %259 = vmatpush1.msra.mxu0 %v96
    %260 = vmatprep.subr.mxu0 0.0
    %261 = vmatpush1.msra.mxu0 %v95
    %262 = vmatprep.subr.mxu0 0.0
    %263 = vmatpush1.msra.mxu0 %v94
    %264 = vmatprep.subr.mxu0 0.0
    %265 = vmatpush1.msra.mxu0 %v93
    %266 = vmatprep.subr.mxu0 0.0
    %267 = vmatpush1.msra.mxu0 %v92
    %268 = vmatprep.subr.mxu0 0.0
    %269 = vmatpush1.msra.mxu0 %v91
    %270 = vmatprep.subr.mxu0 0.0
    %271 = vmatpush1.msra.mxu0 %v90
    %272 = vmatprep.subr.mxu0 0.0
    %273 = vmatpush1.msra.mxu0 %v89
    %274 = vmatprep.subr.mxu0 0.0
    %275 = vmatpush1.msra.mxu0 %v88
    %276 = vmatprep.subr.mxu0 0.0
    %277 = vmatpush1.msra.mxu0 %v87
    %278 = vmatprep.subr.mxu0 0.0
    %279 = vmatpush1.msra.mxu0 %v86
    %280 = vmatprep.subr.mxu0 0.0
    %281 = vmatpush1.msra.mxu0 %v85
    %282 = vmatprep.subr.mxu0 0.0
    %283 = vmatpush2.msra.mxu0 %v116
    %284 = vmatprep.subr.mxu0 0.0
    %285 = vmatpush2.msra.mxu0 %v115
    %286 = vmatprep.subr.mxu0 0.0
    %287 = vmatpush2.msra.mxu0 %v114
    %288 = vmatprep.subr.mxu0 0.0
    %289 = vmatpush2.msra.mxu0 %v113
    %290 = vmatprep.subr.mxu0 0.0
    %291 = vmatpush2.msra.mxu0 %v112
    %292 = vmatprep.subr.mxu0 0.0
    %293 = vmatpush2.msra.mxu0 %v111
    %294 = vmatprep.subr.mxu0 0.0
    %295 = vmatpush2.msra.mxu0 %v110
    %296 = vmatprep.subr.mxu0 0.0
    %297 = vmatpush2.msra.mxu0 %v109
    %298 = vmatprep.subr.mxu0 0.0
    %299 = vmatpush2.msra.mxu0 %v108
    %300 = vmatprep.subr.mxu0 0.0
    %301 = vmatpush2.msra.mxu0 %v107
    %302 = vmatprep.subr.mxu0 0.0
    %303 = vmatpush2.msra.mxu0 %v106
    %304 = vmatprep.subr.mxu0 0.0
    %305 = vmatpush2.msra.mxu0 %v105
    %306 = vmatprep.subr.mxu0 0.0
    %307 = vmatpush2.msra.mxu0 %v104
    %308 = vmatprep.subr.mxu0 0.0
    %309 = vmatpush2.msra.mxu0 %v103
    %310 = vmatprep.subr.mxu0 0.0
    %311 = vmatpush2.msra.mxu0 %v102
    %312 = vmatprep.subr.mxu0 0.0
    %313 = vmatpush2.msra.mxu0 %v101
    %314 = vmatprep.mubr.f32.mxu0 %v237
    %315 = vmatmul.mubr.f32.gmra.mxu0 %v236
    %v316 = vpop.f32.mrf.mxu0
    %v317 = vadd.f32 %v249, %v316
    %v318 = vpop.f32.mrf.mxu0
    %319 = vmatprep.mubr.f32.mxu0 %v239
    %320 = vmatmul.mubr.f32.gmra.mxu0 %v238
    %v321 = vpop.f32.mrf.mxu0
    %v322 = vadd.f32 %v249, %v321
    %v323 = vpop.f32.mrf.mxu0
    %324 = vmatprep.mubr.f32.mxu0 %v241
    %325 = vmatmul.mubr.f32.gmra.mxu0 %v240
    %v326 = vpop.f32.mrf.mxu0
    %v327 = vadd.f32 %v249, %v326
    %v328 = vpop.f32.mrf.mxu0
    %329 = vmatprep.mubr.f32.mxu0 %v243
    %330 = vmatmul.mubr.f32.gmra.mxu0 %v242
    %v331 = vpop.f32.mrf.mxu0
    %v332 = vadd.f32 %v249, %v331
    %v333 = vpop.f32.mrf.mxu0
    %334 = vmatprep.mubr.f32.mxu0 %v245
    %335 = vmatmul.mubr.f32.gmra.mxu0 %v244
    %v336 = vpop.f32.mrf.mxu0
    %v337 = vadd.f32 %v249, %v336
    %v338 = vpop.f32.mrf.mxu0
    %339 = vdwg.mxu0
    %v340 = vmax.f32 %v317, 0.0
    %v341 = vmax.f32 %v322, 0.0
    %v342 = vmax.f32 %v327, 0.0
    %v343 = vmax.f32 %v332, 0.0
    %v344 = vmax.f32 %v337, 0.0
    %v345 = vlaneseq
    %v346 = vshrl.u32 %v345, 7
    %v347 = vsub.s32 3, %v346
    %v348 = vrot.slane %v39, %v347
    %v349 = vmul.f32 %v340, %v348
    %v350 = vmul.f32 %v341, %v348
    %v351 = vmul.f32 %v342, %v348
    %v352 = vmul.f32 %v343, %v348
    %v353 = vmul.f32 %v344, %v348
    %vm354 = vcmask 523264
    %v355 = vsel %vm354, %v349, 0.0
    %356 = vadd.xlane.f32.xlu0 %v355
    %v357 = vpop.xlane.xlu0 %356
    %v358 = vsel %vm354, %v350, 0.0
    %359 = vadd.xlane.f32.xlu0 %v358
    %v360 = vpop.xlane.xlu0 %359
    %v361 = vsel %vm354, %v351, 0.0
    %362 = vadd.xlane.f32.xlu0 %v361
    %v363 = vpop.xlane.xlu0 %362
    %v364 = vsel %vm354, %v352, 0.0
    %365 = vadd.xlane.f32.xlu0 %v364
    %v366 = vpop.xlane.xlu0 %365
    %vm367 = vcmask 517120
    %v368 = vsel %vm367, %v353, 0.0
    %369 = vadd.xlane.f32.xlu0 %v368
    %v370 = vpop.xlane.xlu0 %369
    %v371 = vlaneseq
    %v372 = vshrl.u32 %v371, 7
    %v373 = vsub.s32 4, %v372
    %v374 = vrot.slane %v39, %v373
    %v375 = vadd.f32 %v357, %v374
    %v376 = vadd.f32 %v360, %v374
    %v377 = vadd.f32 %v363, %v374
    %v378 = vadd.f32 %v366, %v374
    %v379 = vadd.f32 %v370, %v374
    %v380 = vxor.u32 %v375, 2147483648
    %v381 = vxor.u32 %v376, 2147483648
    %v382 = vxor.u32 %v377, 2147483648
    %v383 = vxor.u32 %v378, 2147483648
    %v384 = vxor.u32 %v379, 2147483648
    %v385 = vmul.f32 %v380, 1.442695
    %v386 = vpow.pop %v385
    %v387 = vmul.f32 %v381, 1.442695
    %v388 = vpow.pop %v387
    %v389 = vmul.f32 %v382, 1.442695
    %v390 = vpow.pop %v389
    %v391 = vmul.f32 %v383, 1.442695
    %v392 = vpow.pop %v391
    %v393 = vmul.f32 %v384, 1.442695
    %v394 = vpow.pop %v393
    %v395 = vadd.f32 %v386, 1.0
    %v396 = vadd.f32 %v388, 1.0
    %v397 = vadd.f32 %v390, 1.0
    %v398 = vadd.f32 %v392, 1.0
    %v399 = vadd.f32 %v394, 1.0
    %v400 = vrcp.pop %v395
    %v401 = vmul.f32 1.0, %v400
    %v402 = vrcp.pop %v396
    %v403 = vmul.f32 1.0, %v402
    %v404 = vrcp.pop %v397
    %v405 = vmul.f32 1.0, %v404
    %v406 = vrcp.pop %v398
    %v407 = vmul.f32 1.0, %v406
    %v408 = vrcp.pop %v399
    %v409 = vmul.f32 1.0, %v408
    %v410 = vsel %vm125, %v32, 0.0
    %411 = vadd.xlane.f32.xlu0 %v410
    %v412 = vpop.xlane.xlu0 %411
    %v413 = vsel %vm125, %v33, 0.0
    %414 = vadd.xlane.f32.xlu0 %v413
    %v415 = vpop.xlane.xlu0 %414
    %v416 = vsel %vm125, %v34, 0.0
    %417 = vadd.xlane.f32.xlu0 %v416
    %v418 = vpop.xlane.xlu0 %417
    %v419 = vsel %vm125, %v35, 0.0
    %420 = vadd.xlane.f32.xlu0 %v419
    %v421 = vpop.xlane.xlu0 %420
    %vm422 = vcmask 254976
    %v423 = vsel %vm422, %v36, 0.0
    %424 = vadd.xlane.f32.xlu0 %v423
    %v425 = vpop.xlane.xlu0 %424
    %v426 = vrcp.pop 32.0
    %v427 = vmul.f32 %v412, %v426
    %v428 = vmul.f32 %v415, %v426
    %v429 = vmul.f32 %v418, %v426
    %v430 = vmul.f32 %v421, %v426
    %v431 = vmul.f32 %v425, %v426
    %v432 = vsub.f32 %v32, %v427
    %v433 = vsub.f32 %v33, %v428
    %v434 = vsub.f32 %v34, %v429
    %v435 = vsub.f32 %v35, %v430
    %v436 = vsub.f32 %v36, %v431
    %v437 = vmul.f32 %v432, %v432
    %v438 = vmul.f32 %v433, %v433
    %v439 = vmul.f32 %v434, %v434
    %v440 = vmul.f32 %v435, %v435
    %v441 = vmul.f32 %v436, %v436
    %v442 = vsel %vm125, %v437, 0.0
    %443 = vadd.xlane.f32.xlu0 %v442
    %v444 = vpop.xlane.xlu0 %443
    %v445 = vsel %vm125, %v438, 0.0
    %446 = vadd.xlane.f32.xlu0 %v445
    %v447 = vpop.xlane.xlu0 %446
    %v448 = vsel %vm125, %v439, 0.0
    %449 = vadd.xlane.f32.xlu0 %v448
    %v450 = vpop.xlane.xlu0 %449
    %v451 = vsel %vm125, %v440, 0.0
    %452 = vadd.xlane.f32.xlu0 %v451
    %v453 = vpop.xlane.xlu0 %452
    %v454 = vsel %vm422, %v441, 0.0
    %455 = vadd.xlane.f32.xlu0 %v454
    %v456 = vpop.xlane.xlu0 %455
    %v457 = vmul.f32 %v444, %v426
    %v458 = vmul.f32 %v447, %v426
    %v459 = vmul.f32 %v450, %v426
    %v460 = vmul.f32 %v453, %v426
    %v461 = vmul.f32 %v456, %v426
    %v462 = vadd.f32 %v457, 1e-12
    %v463 = vadd.f32 %v458, 1e-12
    %v464 = vadd.f32 %v459, 1e-12
    %v465 = vadd.f32 %v460, 1e-12
    %v466 = vadd.f32 %v461, 1e-12
    %v467 = vrsqrt.pop %v462
    %v468 = vrsqrt.pop %v463
    %v469 = vrsqrt.pop %v464
    %v470 = vrsqrt.pop %v465
    %v471 = vrsqrt.pop %v466
    %v472 = vmul.f32 %v432, %v467
    %v473 = vmul.f32 %v433, %v468
    %v474 = vmul.f32 %v434, %v469
    %v475 = vmul.f32 %v435, %v470
    %v476 = vmul.f32 %v436, %v471
    %v477 = vlaneseq
    %v478 = vshrl.u32 %v477, 7
    %v479 = vsub.s32 0, %v478
    %v480 = vrot.slane %v37, %v479
    %v481 = vmul.f32 %v472, %v480
    %v482 = vmul.f32 %v473, %v480
    %v483 = vmul.f32 %v474, %v480
    %v484 = vmul.f32 %v475, %v480
    %v485 = vmul.f32 %v476, %v480
    %v486 = vlaneseq
    %v487 = vshrl.u32 %v486, 7
    %v488 = vsub.s32 1, %v487
    %v489 = vrot.slane %v37, %v488
    %v490 = vadd.f32 %v481, %v489
    %v491 = vadd.f32 %v482, %v489
    %v492 = vadd.f32 %v483, %v489
    %v493 = vadd.f32 %v484, %v489
    %v494 = vadd.f32 %v485, %v489
    %v495 = vlaneseq
    %v496 = vshrl.u32 %v495, 7
    %v497 = vsub.s32 4, %v496
    %v498 = vrot.slane %v37, %v497
    %v499 = vlaneseq
    %v500 = vshrl.u32 %v499, 7
    %v501 = vsub.s32 4, %v500
    %v502 = vrot.slane %v38, %v501
    %v504 = vsel %vm125, %v490, 0
    %v507 = vsel %vm125, %v491, 0
    %v510 = vsel %vm125, %v492, 0
    %v513 = vsel %vm125, %v493, 0
    %v516 = vsel %vm125, %v494, 0
    %518 = vmatprep.subr.mxu0 0.0
    %519 = vmatpush1.msra.mxu0 0.0
    %520 = vmatprep.subr.mxu0 0.0
    %521 = vmatpush1.msra.mxu0 0.0
    %522 = vmatprep.subr.mxu0 0.0
    %523 = vmatpush1.msra.mxu0 0.0
    %524 = vmatprep.subr.mxu0 0.0
    %525 = vmatpush1.msra.mxu0 0.0
    %526 = vmatprep.subr.mxu0 0.0
    %527 = vmatpush1.msra.mxu0 0.0
    %528 = vmatprep.subr.mxu0 0.0
    %529 = vmatpush1.msra.mxu0 0.0
    %530 = vmatprep.subr.mxu0 0.0
    %531 = vmatpush1.msra.mxu0 0.0
    %532 = vmatprep.subr.mxu0 0.0
    %533 = vmatpush1.msra.mxu0 0.0
    %534 = vmatprep.subr.mxu0 0.0
    %535 = vmatpush1.msra.mxu0 0.0
    %536 = vmatprep.subr.mxu0 0.0
    %537 = vmatpush1.msra.mxu0 0.0
    %538 = vmatprep.subr.mxu0 0.0
    %539 = vmatpush1.msra.mxu0 0.0
    %540 = vmatprep.subr.mxu0 0.0
    %541 = vmatpush1.msra.mxu0 0.0
    %542 = vmatprep.subr.mxu0 %v48
    %543 = vmatpush1.msra.mxu0 %v47
    %544 = vmatprep.subr.mxu0 %v46
    %545 = vmatpush1.msra.mxu0 %v45
    %546 = vmatprep.subr.mxu0 %v44
    %547 = vmatpush1.msra.mxu0 %v43
    %548 = vmatprep.subr.mxu0 %v42
    %549 = vmatpush1.msra.mxu0 %v41
    %550 = vmatprep.subr.mxu0 0.0
    %551 = vmatpush2.msra.mxu0 0.0
    %552 = vmatprep.subr.mxu0 0.0
    %553 = vmatpush2.msra.mxu0 0.0
    %554 = vmatprep.subr.mxu0 0.0
    %555 = vmatpush2.msra.mxu0 0.0
    %556 = vmatprep.subr.mxu0 0.0
    %557 = vmatpush2.msra.mxu0 0.0
    %558 = vmatprep.subr.mxu0 0.0
    %559 = vmatpush2.msra.mxu0 0.0
    %560 = vmatprep.subr.mxu0 0.0
    %561 = vmatpush2.msra.mxu0 0.0
    %562 = vmatprep.subr.mxu0 0.0
    %563 = vmatpush2.msra.mxu0 0.0
    %564 = vmatprep.subr.mxu0 0.0
    %565 = vmatpush2.msra.mxu0 0.0
    %566 = vmatprep.subr.mxu0 0.0
    %567 = vmatpush2.msra.mxu0 0.0
    %568 = vmatprep.subr.mxu0 0.0
    %569 = vmatpush2.msra.mxu0 0.0
    %570 = vmatprep.subr.mxu0 0.0
    %571 = vmatpush2.msra.mxu0 0.0
    %572 = vmatprep.subr.mxu0 0.0
    %573 = vmatpush2.msra.mxu0 0.0
    %574 = vmatprep.subr.mxu0 0.0
    %575 = vmatpush2.msra.mxu0 0.0
    %576 = vmatprep.subr.mxu0 0.0
    %577 = vmatpush2.msra.mxu0 0.0
    %578 = vmatprep.subr.mxu0 0.0
    %579 = vmatpush2.msra.mxu0 0.0
    %580 = vmatprep.subr.mxu0 0.0
    %581 = vmatpush2.msra.mxu0 0.0
    %582 = vmatprep.mubr.f32.mxu0 0.0
    %583 = vmatmul.mubr.f32.gmra.mxu0 %v504
    %v584 = vpop.f32.mrf.mxu0
    %v585 = vadd.f32 %v498, %v584
    %v586 = vpop.f32.mrf.mxu0
    %v587 = vadd.f32 %v502, %v586
    %588 = vmatprep.mubr.f32.mxu0 0.0
    %589 = vmatmul.mubr.f32.gmra.mxu0 %v507
    %v590 = vpop.f32.mrf.mxu0
    %v591 = vadd.f32 %v498, %v590
    %v592 = vpop.f32.mrf.mxu0
    %v593 = vadd.f32 %v502, %v592
    %594 = vmatprep.mubr.f32.mxu0 0.0
    %595 = vmatmul.mubr.f32.gmra.mxu0 %v510
    %v596 = vpop.f32.mrf.mxu0
    %v597 = vadd.f32 %v498, %v596
    %v598 = vpop.f32.mrf.mxu0
    %v599 = vadd.f32 %v502, %v598
    %600 = vmatprep.mubr.f32.mxu0 0.0
    %601 = vmatmul.mubr.f32.gmra.mxu0 %v513
    %v602 = vpop.f32.mrf.mxu0
    %v603 = vadd.f32 %v498, %v602
    %v604 = vpop.f32.mrf.mxu0
    %v605 = vadd.f32 %v502, %v604
    %606 = vmatprep.mubr.f32.mxu0 0.0
    %607 = vmatmul.mubr.f32.gmra.mxu0 %v516
    %v608 = vpop.f32.mrf.mxu0
    %v609 = vadd.f32 %v498, %v608
    %v610 = vpop.f32.mrf.mxu0
    %v611 = vadd.f32 %v502, %v610
    %612 = vdwg.mxu0
    %v613 = vlaneseq
    %v614 = vand.u32 %v613, 127
    %vm615 = vcmp.eq.s32.totalorder %v614, 0
    %619 = vrot.lane.b32.xlu0 %v585, 96
    %v620 = vpop.permute.xlu0 %619
    %621 = vrot.lane.b32.xlu0 %v591, 96
    %v622 = vpop.permute.xlu0 %621
    %623 = vrot.lane.b32.xlu0 %v597, 96
    %v624 = vpop.permute.xlu0 %623
    %vm625 = vcmask 130048
    %v626 = vsel %vm625, %v585, 0
    %v628 = vsel %vm625, %v591, 0
    %v630 = vsel %vm625, %v597, 0
    %v632 = vsel %vm625, %v620, 0
    %v634 = vsel %vm625, %v622, 0
    %v636 = vsel %vm625, %v624, 0
    %638 = vmatprep.subr.mxu0 0.0
    %639 = vmatpush1.xpose.msra.mxu0 0.0
    %640 = vmatprep.subr.mxu0 0.0
    %641 = vmatpush1.xpose.msra.mxu0 0.0
    %642 = vmatprep.subr.mxu0 0.0
    %643 = vmatpush1.xpose.msra.mxu0 0.0
    %644 = vmatprep.subr.mxu0 0.0
    %645 = vmatpush1.xpose.msra.mxu0 0.0
    %646 = vmatprep.subr.mxu0 0.0
    %647 = vmatpush1.xpose.msra.mxu0 0.0
    %648 = vmatprep.subr.mxu0 0.0
    %649 = vmatpush1.xpose.msra.mxu0 0.0
    %650 = vmatprep.subr.mxu0 0.0
    %651 = vmatpush1.xpose.msra.mxu0 0.0
    %652 = vmatprep.subr.mxu0 0.0
    %653 = vmatpush1.xpose.msra.mxu0 0.0
    %654 = vmatprep.subr.mxu0 0.0
    %655 = vmatpush1.xpose.msra.mxu0 0.0
    %656 = vmatprep.subr.mxu0 0.0
    %657 = vmatpush1.xpose.msra.mxu0 0.0
    %658 = vmatprep.subr.mxu0 0.0
    %659 = vmatpush1.xpose.msra.mxu0 0.0
    %660 = vmatprep.subr.mxu0 0.0
    %661 = vmatpush1.xpose.msra.mxu0 0.0
    %662 = vmatprep.subr.mxu0 0.0
    %663 = vmatpush1.xpose.msra.mxu0 0.0
    %664 = vmatprep.subr.mxu0 0.0
    %665 = vmatpush1.xpose.msra.mxu0 %v636
    %666 = vmatprep.subr.mxu0 0.0
    %667 = vmatpush1.xpose.msra.mxu0 %v634
    %668 = vmatprep.subr.mxu0 0.0
    %669 = vmatpush1.xpose.msra.mxu0 %v632
    %670 = vmatprep.subr.mxu0 0.0
    %671 = vmatpush2.xpose.msra.mxu0 0.0
    %672 = vmatprep.subr.mxu0 0.0
    %673 = vmatpush2.xpose.msra.mxu0 0.0
    %674 = vmatprep.subr.mxu0 0.0
    %675 = vmatpush2.xpose.msra.mxu0 0.0
    %676 = vmatprep.subr.mxu0 0.0
    %677 = vmatpush2.xpose.msra.mxu0 0.0
    %678 = vmatprep.subr.mxu0 0.0
    %679 = vmatpush2.xpose.msra.mxu0 0.0
    %680 = vmatprep.subr.mxu0 0.0
    %681 = vmatpush2.xpose.msra.mxu0 0.0
    %682 = vmatprep.subr.mxu0 0.0
    %683 = vmatpush2.xpose.msra.mxu0 0.0
    %684 = vmatprep.subr.mxu0 0.0
    %685 = vmatpush2.xpose.msra.mxu0 0.0
    %686 = vmatprep.subr.mxu0 0.0
    %687 = vmatpush2.xpose.msra.mxu0 0.0
    %688 = vmatprep.subr.mxu0 0.0
    %689 = vmatpush2.xpose.msra.mxu0 0.0
    %690 = vmatprep.subr.mxu0 0.0
    %691 = vmatpush2.xpose.msra.mxu0 0.0
    %692 = vmatprep.subr.mxu0 0.0
    %693 = vmatpush2.xpose.msra.mxu0 0.0
    %694 = vmatprep.subr.mxu0 0.0
    %695 = vmatpush2.xpose.msra.mxu0 0.0
    %696 = vmatprep.subr.mxu0 0.0
    %697 = vmatpush2.xpose.msra.mxu0 0.0
    %698 = vmatprep.subr.mxu0 0.0
    %699 = vmatpush2.xpose.msra.mxu0 0.0
    %700 = vmatprep.subr.mxu0 0.0
    %701 = vmatpush2.xpose.msra.mxu0 0.0
    %702 = vmatprep.mubr.f32.mxu0 0.0
    %703 = vmatmul.mubr.f32.gmra.mxu0 %v626
    %v704 = vpop.f32.mrf.mxu0
    %v705 = vadd.f32 0.0, %v704
    %v706 = vpop.f32.mrf.mxu0
    %707 = vmatprep.mubr.f32.mxu0 0.0
    %708 = vmatmul.mubr.f32.gmra.mxu0 %v628
    %v709 = vpop.f32.mrf.mxu0
    %v710 = vadd.f32 0.0, %v709
    %v711 = vpop.f32.mrf.mxu0
    %712 = vmatprep.mubr.f32.mxu0 0.0
    %713 = vmatmul.mubr.f32.gmra.mxu0 %v630
    %v714 = vpop.f32.mrf.mxu0
    %v715 = vadd.f32 0.0, %v714
    %v716 = vpop.f32.mrf.mxu0
    %717 = vdwg.mxu0
    %vm718 = vcmask 138240
    %v719 = vsel %vm718, %v705, -inf
    %720 = vmax.xlane.f32.xlu0 %v719
    %v721 = vpop.xlane.xlu0 %720
    %v722 = vsel %vm718, %v710, -inf
    %723 = vmax.xlane.f32.xlu0 %v722
    %v724 = vpop.xlane.xlu0 %723
    %vm725 = vcmask 131072
    %v726 = vsel %vm725, %v715, -inf
    %727 = vmax.xlane.f32.xlu0 %v726
    %v728 = vpop.xlane.xlu0 %727
    %v729 = vsub.f32 %v705, %v721
    %v730 = vsub.f32 %v710, %v724
    %v731 = vsub.f32 %v715, %v728
    %v732 = vmul.f32 %v729, 1.442695
    %v733 = vpow.pop %v732
    %v734 = vmul.f32 %v730, 1.442695
    %v735 = vpow.pop %v734
    %v736 = vmul.f32 %v731, 1.442695
    %v737 = vpow.pop %v736
    %v738 = vsel %vm718, %v733, 0.0
    %739 = vadd.xlane.f32.xlu0 %v738
    %v740 = vpop.xlane.xlu0 %739
    %v741 = vsel %vm718, %v735, 0.0
    %742 = vadd.xlane.f32.xlu0 %v741
    %v743 = vpop.xlane.xlu0 %742
    %v744 = vsel %vm725, %v737, 0.0
    %745 = vadd.xlane.f32.xlu0 %v744
    %v746 = vpop.xlane.xlu0 %745
    %v747 = vrcp.pop %v740
    %v748 = vmul.f32 %v733, %v747
    %v749 = vrcp.pop %v743
    %v750 = vmul.f32 %v735, %v749
    %v751 = vrcp.pop %v746
    %v752 = vmul.f32 %v737, %v751
    %753 = vrot.lane.b32.xlu0 %v585, 64
    %v754 = vpop.permute.xlu0 %753
    %755 = vrot.lane.b32.xlu0 %v591, 64
    %v756 = vpop.permute.xlu0 %755
    %757 = vrot.lane.b32.xlu0 %v597, 64
    %v758 = vpop.permute.xlu0 %757
    %v762 = vsel %vm718, %v748, 0
    %v765 = vsel %vm718, %v750, 0
    %v768 = vsel %vm718, %v752, 0
    %vm770 = vcmask 1040384
    %v771 = vsel %vm770, %v758, 0
    %773 = vmatprep.subr.mxu0 0.0
    %774 = vmatpush1.msra.mxu0 0.0
    %775 = vmatprep.subr.mxu0 0.0
    %776 = vmatpush1.msra.mxu0 0.0
    %777 = vmatprep.subr.mxu0 0.0
    %778 = vmatpush1.msra.mxu0 0.0
    %779 = vmatprep.subr.mxu0 0.0
    %780 = vmatpush1.msra.mxu0 0.0
    %781 = vmatprep.subr.mxu0 0.0
    %782 = vmatpush1.msra.mxu0 0.0
    %783 = vmatprep.subr.mxu0 0.0
    %784 = vmatpush1.msra.mxu0 0.0
    %785 = vmatprep.subr.mxu0 0.0
    %786 = vmatpush1.msra.mxu0 0.0
    %787 = vmatprep.subr.mxu0 0.0
    %788 = vmatpush1.msra.mxu0 0.0
    %789 = vmatprep.subr.mxu0 0.0
    %790 = vmatpush1.msra.mxu0 0.0
    %791 = vmatprep.subr.mxu0 0.0
    %792 = vmatpush1.msra.mxu0 0.0
    %793 = vmatprep.subr.mxu0 0.0
    %794 = vmatpush1.msra.mxu0 0.0
    %795 = vmatprep.subr.mxu0 0.0
    %796 = vmatpush1.msra.mxu0 0.0
    %797 = vmatprep.subr.mxu0 0.0
    %798 = vmatpush1.msra.mxu0 0.0
    %799 = vmatprep.subr.mxu0 0.0
    %800 = vmatpush1.msra.mxu0 %v771
    %801 = vmatprep.subr.mxu0 0.0
    %802 = vmatpush1.msra.mxu0 %v756
    %803 = vmatprep.subr.mxu0 0.0
    %804 = vmatpush1.msra.mxu0 %v754
    %805 = vmatprep.subr.mxu0 0.0
    %806 = vmatpush2.msra.mxu0 0.0
    %807 = vmatprep.subr.mxu0 0.0
    %808 = vmatpush2.msra.mxu0 0.0
    %809 = vmatprep.subr.mxu0 0.0
    %810 = vmatpush2.msra.mxu0 0.0
    %811 = vmatprep.subr.mxu0 0.0
    %812 = vmatpush2.msra.mxu0 0.0
    %813 = vmatprep.subr.mxu0 0.0
    %814 = vmatpush2.msra.mxu0 0.0
    %815 = vmatprep.subr.mxu0 0.0
    %816 = vmatpush2.msra.mxu0 0.0
    %817 = vmatprep.subr.mxu0 0.0
    %818 = vmatpush2.msra.mxu0 0.0
    %819 = vmatprep.subr.mxu0 0.0
    %820 = vmatpush2.msra.mxu0 0.0
    %821 = vmatprep.subr.mxu0 0.0
    %822 = vmatpush2.msra.mxu0 0.0
    %823 = vmatprep.subr.mxu0 0.0
    %824 = vmatpush2.msra.mxu0 0.0
    %825 = vmatprep.subr.mxu0 0.0
    %826 = vmatpush2.msra.mxu0 0.0
    %827 = vmatprep.subr.mxu0 0.0
    %828 = vmatpush2.msra.mxu0 0.0
    %829 = vmatprep.subr.mxu0 0.0
    %830 = vmatpush2.msra.mxu0 0.0
    %831 = vmatprep.subr.mxu0 0.0
    %832 = vmatpush2.msra.mxu0 0.0
    %833 = vmatprep.subr.mxu0 0.0
    %834 = vmatpush2.msra.mxu0 0.0
    %835 = vmatprep.subr.mxu0 0.0
    %836 = vmatpush2.msra.mxu0 0.0
    %837 = vmatprep.mubr.f32.mxu0 0.0
    %838 = vmatmul.mubr.f32.gmra.mxu0 %v762
    %v839 = vpop.f32.mrf.mxu0
    %v840 = vadd.f32 0.0, %v839
    %v841 = vpop.f32.mrf.mxu0
    %842 = vmatprep.mubr.f32.mxu0 0.0
    %843 = vmatmul.mubr.f32.gmra.mxu0 %v765
    %v844 = vpop.f32.mrf.mxu0
    %v845 = vadd.f32 0.0, %v844
    %v846 = vpop.f32.mrf.mxu0
    %847 = vmatprep.mubr.f32.mxu0 0.0
    %848 = vmatmul.mubr.f32.gmra.mxu0 %v768
    %v849 = vpop.f32.mrf.mxu0
    %v850 = vadd.f32 0.0, %v849
    %v851 = vpop.f32.mrf.mxu0
    %852 = vdwg.mxu0
    %853 = vrot.lane.b32.xlu0 %v585, 112
    %v854 = vpop.permute.xlu0 %853
    %855 = vrot.lane.b32.xlu0 %v591, 112
    %v856 = vpop.permute.xlu0 %855
    %857 = vrot.lane.b32.xlu0 %v597, 112
    %v858 = vpop.permute.xlu0 %857
    %859 = vrot.lane.b32.xlu0 %v585, 80
    %v860 = vpop.permute.xlu0 %859
    %861 = vrot.lane.b32.xlu0 %v591, 80
    %v862 = vpop.permute.xlu0 %861
    %863 = vrot.lane.b32.xlu0 %v597, 80
    %v864 = vpop.permute.xlu0 %863
    %v865 = vsel %vm625, %v854, 0
    %v867 = vsel %vm625, %v856, 0
    %v869 = vsel %vm625, %v858, 0
    %v871 = vsel %vm625, %v860, 0
    %v873 = vsel %vm625, %v862, 0
    %v875 = vsel %vm625, %v864, 0
    %877 = vmatprep.subr.mxu0 0.0
    %878 = vmatpush1.xpose.msra.mxu0 0.0
    %879 = vmatprep.subr.mxu0 0.0
    %880 = vmatpush1.xpose.msra.mxu0 0.0
    %881 = vmatprep.subr.mxu0 0.0
    %882 = vmatpush1.xpose.msra.mxu0 0.0
    %883 = vmatprep.subr.mxu0 0.0
    %884 = vmatpush1.xpose.msra.mxu0 0.0
    %885 = vmatprep.subr.mxu0 0.0
    %886 = vmatpush1.xpose.msra.mxu0 0.0
    %887 = vmatprep.subr.mxu0 0.0
    %888 = vmatpush1.xpose.msra.mxu0 0.0
    %889 = vmatprep.subr.mxu0 0.0
    %890 = vmatpush1.xpose.msra.mxu0 0.0
    %891 = vmatprep.subr.mxu0 0.0
    %892 = vmatpush1.xpose.msra.mxu0 0.0
    %893 = vmatprep.subr.mxu0 0.0
    %894 = vmatpush1.xpose.msra.mxu0 0.0
    %895 = vmatprep.subr.mxu0 0.0
    %896 = vmatpush1.xpose.msra.mxu0 0.0
    %897 = vmatprep.subr.mxu0 0.0
    %898 = vmatpush1.xpose.msra.mxu0 0.0
    %899 = vmatprep.subr.mxu0 0.0
    %900 = vmatpush1.xpose.msra.mxu0 0.0
    %901 = vmatprep.subr.mxu0 0.0
    %902 = vmatpush1.xpose.msra.mxu0 0.0
    %903 = vmatprep.subr.mxu0 0.0
    %904 = vmatpush1.xpose.msra.mxu0 %v875
    %905 = vmatprep.subr.mxu0 0.0
    %906 = vmatpush1.xpose.msra.mxu0 %v873
    %907 = vmatprep.subr.mxu0 0.0
    %908 = vmatpush1.xpose.msra.mxu0 %v871
    %909 = vmatprep.subr.mxu0 0.0
    %910 = vmatpush2.xpose.msra.mxu0 0.0
    %911 = vmatprep.subr.mxu0 0.0
    %912 = vmatpush2.xpose.msra.mxu0 0.0
    %913 = vmatprep.subr.mxu0 0.0
    %914 = vmatpush2.xpose.msra.mxu0 0.0
    %915 = vmatprep.subr.mxu0 0.0
    %916 = vmatpush2.xpose.msra.mxu0 0.0
    %917 = vmatprep.subr.mxu0 0.0
    %918 = vmatpush2.xpose.msra.mxu0 0.0
    %919 = vmatprep.subr.mxu0 0.0
    %920 = vmatpush2.xpose.msra.mxu0 0.0
    %921 = vmatprep.subr.mxu0 0.0
    %922 = vmatpush2.xpose.msra.mxu0 0.0
    %923 = vmatprep.subr.mxu0 0.0
    %924 = vmatpush2.xpose.msra.mxu0 0.0
    %925 = vmatprep.subr.mxu0 0.0
    %926 = vmatpush2.xpose.msra.mxu0 0.0
    %927 = vmatprep.subr.mxu0 0.0
    %928 = vmatpush2.xpose.msra.mxu0 0.0
    %929 = vmatprep.subr.mxu0 0.0
    %930 = vmatpush2.xpose.msra.mxu0 0.0
    %931 = vmatprep.subr.mxu0 0.0
    %932 = vmatpush2.xpose.msra.mxu0 0.0
    %933 = vmatprep.subr.mxu0 0.0
    %934 = vmatpush2.xpose.msra.mxu0 0.0
    %935 = vmatprep.subr.mxu0 0.0
    %936 = vmatpush2.xpose.msra.mxu0 0.0
    %937 = vmatprep.subr.mxu0 0.0
    %938 = vmatpush2.xpose.msra.mxu0 0.0
    %939 = vmatprep.subr.mxu0 0.0
    %940 = vmatpush2.xpose.msra.mxu0 0.0
    %941 = vmatprep.mubr.f32.mxu0 0.0
    %942 = vmatmul.mubr.f32.gmra.mxu0 %v865
    %v943 = vpop.f32.mrf.mxu0
    %v944 = vadd.f32 0.0, %v943
    %v945 = vpop.f32.mrf.mxu0
    %946 = vmatprep.mubr.f32.mxu0 0.0
    %947 = vmatmul.mubr.f32.gmra.mxu0 %v867
    %v948 = vpop.f32.mrf.mxu0
    %v949 = vadd.f32 0.0, %v948
    %v950 = vpop.f32.mrf.mxu0
    %951 = vmatprep.mubr.f32.mxu0 0.0
    %952 = vmatmul.mubr.f32.gmra.mxu0 %v869
    %v953 = vpop.f32.mrf.mxu0
    %v954 = vadd.f32 0.0, %v953
    %v955 = vpop.f32.mrf.mxu0
    %956 = vdwg.mxu0
    %v957 = vsel %vm718, %v944, -inf
    %958 = vmax.xlane.f32.xlu0 %v957
    %v959 = vpop.xlane.xlu0 %958
    %v960 = vsel %vm718, %v949, -inf
    %961 = vmax.xlane.f32.xlu0 %v960
    %v962 = vpop.xlane.xlu0 %961
    %v963 = vsel %vm725, %v954, -inf
    %964 = vmax.xlane.f32.xlu0 %v963
    %v965 = vpop.xlane.xlu0 %964
    %v966 = vsub.f32 %v944, %v959
    %v967 = vsub.f32 %v949, %v962
    %v968 = vsub.f32 %v954, %v965
    %v969 = vmul.f32 %v966, 1.442695
    %v970 = vpow.pop %v969
    %v971 = vmul.f32 %v967, 1.442695
    %v972 = vpow.pop %v971
    %v973 = vmul.f32 %v968, 1.442695
    %v974 = vpow.pop %v973
    %v975 = vsel %vm718, %v970, 0.0
    %976 = vadd.xlane.f32.xlu0 %v975
    %v977 = vpop.xlane.xlu0 %976
    %v978 = vsel %vm718, %v972, 0.0
    %979 = vadd.xlane.f32.xlu0 %v978
    %v980 = vpop.xlane.xlu0 %979
    %v981 = vsel %vm725, %v974, 0.0
    %982 = vadd.xlane.f32.xlu0 %v981
    %v983 = vpop.xlane.xlu0 %982
    %v984 = vrcp.pop %v977
    %v985 = vmul.f32 %v970, %v984
    %v986 = vrcp.pop %v980
    %v987 = vmul.f32 %v972, %v986
    %v988 = vrcp.pop %v983
    %v989 = vmul.f32 %v974, %v988
    %990 = vrot.lane.b32.xlu0 %v585, 48
    %v991 = vpop.permute.xlu0 %990
    %992 = vrot.lane.b32.xlu0 %v591, 48
    %v993 = vpop.permute.xlu0 %992
    %994 = vrot.lane.b32.xlu0 %v597, 48
    %v995 = vpop.permute.xlu0 %994
    %v999 = vsel %vm718, %v985, 0
    %v1002 = vsel %vm718, %v987, 0
    %v1005 = vsel %vm718, %v989, 0
    %v1007 = vsel %vm770, %v995, 0
    %1009 = vmatprep.subr.mxu0 0.0
    %1010 = vmatpush1.msra.mxu0 0.0
    %1011 = vmatprep.subr.mxu0 0.0
    %1012 = vmatpush1.msra.mxu0 0.0
    %1013 = vmatprep.subr.mxu0 0.0
    %1014 = vmatpush1.msra.mxu0 0.0
    %1015 = vmatprep.subr.mxu0 0.0
    %1016 = vmatpush1.msra.mxu0 0.0
    %1017 = vmatprep.subr.mxu0 0.0
    %1018 = vmatpush1.msra.mxu0 0.0
    %1019 = vmatprep.subr.mxu0 0.0
    %1020 = vmatpush1.msra.mxu0 0.0
    %1021 = vmatprep.subr.mxu0 0.0
    %1022 = vmatpush1.msra.mxu0 0.0
    %1023 = vmatprep.subr.mxu0 0.0
    %1024 = vmatpush1.msra.mxu0 0.0
    %1025 = vmatprep.subr.mxu0 0.0
    %1026 = vmatpush1.msra.mxu0 0.0
    %1027 = vmatprep.subr.mxu0 0.0
    %1028 = vmatpush1.msra.mxu0 0.0
    %1029 = vmatprep.subr.mxu0 0.0
    %1030 = vmatpush1.msra.mxu0 0.0
    %1031 = vmatprep.subr.mxu0 0.0
    %1032 = vmatpush1.msra.mxu0 0.0
    %1033 = vmatprep.subr.mxu0 0.0
    %1034 = vmatpush1.msra.mxu0 0.0
    %1035 = vmatprep.subr.mxu0 0.0
    %1036 = vmatpush1.msra.mxu0 %v1007
    %1037 = vmatprep.subr.mxu0 0.0
    %1038 = vmatpush1.msra.mxu0 %v993
    %1039 = vmatprep.subr.mxu0 0.0
    %1040 = vmatpush1.msra.mxu0 %v991
    %1041 = vmatprep.subr.mxu0 0.0
    %1042 = vmatpush2.msra.mxu0 0.0
    %1043 = vmatprep.subr.mxu0 0.0
    %1044 = vmatpush2.msra.mxu0 0.0
    %1045 = vmatprep.subr.mxu0 0.0
    %1046 = vmatpush2.msra.mxu0 0.0
    %1047 = vmatprep.subr.mxu0 0.0
    %1048 = vmatpush2.msra.mxu0 0.0
    %1049 = vmatprep.subr.mxu0 0.0
    %1050 = vmatpush2.msra.mxu0 0.0
    %1051 = vmatprep.subr.mxu0 0.0
    %1052 = vmatpush2.msra.mxu0 0.0
    %1053 = vmatprep.subr.mxu0 0.0
    %1054 = vmatpush2.msra.mxu0 0.0
    %1055 = vmatprep.subr.mxu0 0.0
    %1056 = vmatpush2.msra.mxu0 0.0
    %1057 = vmatprep.subr.mxu0 0.0
    %1058 = vmatpush2.msra.mxu0 0.0
    %1059 = vmatprep.subr.mxu0 0.0
    %1060 = vmatpush2.msra.mxu0 0.0
    %1061 = vmatprep.subr.mxu0 0.0
    %1062 = vmatpush2.msra.mxu0 0.0
    %1063 = vmatprep.subr.mxu0 0.0
    %1064 = vmatpush2.msra.mxu0 0.0
    %1065 = vmatprep.subr.mxu0 0.0
    %1066 = vmatpush2.msra.mxu0 0.0
    %1067 = vmatprep.subr.mxu0 0.0
    %1068 = vmatpush2.msra.mxu0 0.0
    %1069 = vmatprep.subr.mxu0 0.0
    %1070 = vmatpush2.msra.mxu0 0.0
    %1071 = vmatprep.subr.mxu0 0.0
    %1072 = vmatpush2.msra.mxu0 0.0
    %1073 = vmatprep.mubr.f32.mxu0 0.0
    %1074 = vmatmul.mubr.f32.gmra.mxu0 %v999
    %v1075 = vpop.f32.mrf.mxu0
    %v1076 = vadd.f32 0.0, %v1075
    %v1077 = vpop.f32.mrf.mxu0
    %1078 = vmatprep.mubr.f32.mxu0 0.0
    %1079 = vmatmul.mubr.f32.gmra.mxu0 %v1002
    %v1080 = vpop.f32.mrf.mxu0
    %v1081 = vadd.f32 0.0, %v1080
    %v1082 = vpop.f32.mrf.mxu0
    %1083 = vmatprep.mubr.f32.mxu0 0.0
    %1084 = vmatmul.mubr.f32.gmra.mxu0 %v1005
    %v1085 = vpop.f32.mrf.mxu0
    %v1086 = vadd.f32 0.0, %v1085
    %v1087 = vpop.f32.mrf.mxu0
    %1088 = vdwg.mxu0
    %v1090 = vsel %vm625, %v1076, 0
    %v1093 = vsel %vm625, %v1081, 0
    %v1096 = vsel %vm625, %v1086, 0
    %1098 = vmatprep.subr.mxu0 0.0
    %1099 = vmatpush1.msra.mxu0 0.0
    %1100 = vmatprep.subr.mxu0 0.0
    %1101 = vmatpush1.msra.mxu0 0.0
    %1102 = vmatprep.subr.mxu0 0.0
    %1103 = vmatpush1.msra.mxu0 0.0
    %1104 = vmatprep.subr.mxu0 0.0
    %1105 = vmatpush1.msra.mxu0 0.0
    %1106 = vmatprep.subr.mxu0 0.0
    %1107 = vmatpush1.msra.mxu0 0.0
    %1108 = vmatprep.subr.mxu0 0.0
    %1109 = vmatpush1.msra.mxu0 0.0
    %1110 = vmatprep.subr.mxu0 0.0
    %1111 = vmatpush1.msra.mxu0 0.0
    %1112 = vmatprep.subr.mxu0 0.0
    %1113 = vmatpush1.msra.mxu0 0.0
    %1114 = vmatprep.subr.mxu0 0.0
    %1115 = vmatpush1.msra.mxu0 0.0
    %1116 = vmatprep.subr.mxu0 0.0
    %1117 = vmatpush1.msra.mxu0 0.0
    %1118 = vmatprep.subr.mxu0 0.0
    %1119 = vmatpush1.msra.mxu0 0.0
    %1120 = vmatprep.subr.mxu0 0.0
    %1121 = vmatpush1.msra.mxu0 0.0
    %1122 = vmatprep.subr.mxu0 0.0
    %1123 = vmatpush1.msra.mxu0 0.0
    %1124 = vmatprep.subr.mxu0 0.0
    %1125 = vmatpush1.msra.mxu0 0.0
    %1126 = vmatprep.subr.mxu0 0.0
    %1127 = vmatpush1.msra.mxu0 %v52
    %1128 = vmatprep.subr.mxu0 0.0
    %1129 = vmatpush1.msra.mxu0 %v51
    %1130 = vmatprep.subr.mxu0 0.0
    %1131 = vmatpush2.msra.mxu0 0.0
    %1132 = vmatprep.subr.mxu0 0.0
    %1133 = vmatpush2.msra.mxu0 0.0
    %1134 = vmatprep.subr.mxu0 0.0
    %1135 = vmatpush2.msra.mxu0 0.0
    %1136 = vmatprep.subr.mxu0 0.0
    %1137 = vmatpush2.msra.mxu0 0.0
    %1138 = vmatprep.subr.mxu0 0.0
    %1139 = vmatpush2.msra.mxu0 0.0
    %1140 = vmatprep.subr.mxu0 0.0
    %1141 = vmatpush2.msra.mxu0 0.0
    %1142 = vmatprep.subr.mxu0 0.0
    %1143 = vmatpush2.msra.mxu0 0.0
    %1144 = vmatprep.subr.mxu0 0.0
    %1145 = vmatpush2.msra.mxu0 0.0
    %1146 = vmatprep.subr.mxu0 0.0
    %1147 = vmatpush2.msra.mxu0 0.0
    %1148 = vmatprep.subr.mxu0 0.0
    %1149 = vmatpush2.msra.mxu0 0.0
    %1150 = vmatprep.subr.mxu0 0.0
    %1151 = vmatpush2.msra.mxu0 0.0
    %1152 = vmatprep.subr.mxu0 0.0
    %1153 = vmatpush2.msra.mxu0 0.0
    %1154 = vmatprep.subr.mxu0 0.0
    %1155 = vmatpush2.msra.mxu0 0.0
    %1156 = vmatprep.subr.mxu0 0.0
    %1157 = vmatpush2.msra.mxu0 0.0
    %1158 = vmatprep.subr.mxu0 0.0
    %1159 = vmatpush2.msra.mxu0 0.0
    %1160 = vmatprep.subr.mxu0 0.0
    %1161 = vmatpush2.msra.mxu0 0.0
    %1162 = vmatprep.mubr.f32.mxu0 0.0
    %1163 = vmatmul.mubr.f32.gmra.mxu0 %v1090
    %v1164 = vpop.f32.mrf.mxu0
    %v1165 = vadd.f32 0.0, %v1164
    %v1166 = vpop.f32.mrf.mxu0
    %1167 = vmatprep.mubr.f32.mxu0 0.0
    %1168 = vmatmul.mubr.f32.gmra.mxu0 %v1093
    %v1169 = vpop.f32.mrf.mxu0
    %v1170 = vadd.f32 0.0, %v1169
    %v1171 = vpop.f32.mrf.mxu0
    %1172 = vmatprep.mubr.f32.mxu0 0.0
    %1173 = vmatmul.mubr.f32.gmra.mxu0 %v1096
    %v1174 = vpop.f32.mrf.mxu0
    %v1175 = vadd.f32 0.0, %v1174
    %v1176 = vpop.f32.mrf.mxu0
    %1177 = vdwg.mxu0
    %v1179 = vsel %vm625, %v840, 0
    %v1182 = vsel %vm625, %v845, 0
    %v1185 = vsel %vm625, %v850, 0
    %1187 = vmatprep.subr.mxu0 0.0
    %1188 = vmatpush1.msra.mxu0 0.0
    %1189 = vmatprep.subr.mxu0 0.0
    %1190 = vmatpush1.msra.mxu0 0.0
    %1191 = vmatprep.subr.mxu0 0.0
    %1192 = vmatpush1.msra.mxu0 0.0
    %1193 = vmatprep.subr.mxu0 0.0
    %1194 = vmatpush1.msra.mxu0 0.0
    %1195 = vmatprep.subr.mxu0 0.0
    %1196 = vmatpush1.msra.mxu0 0.0
    %1197 = vmatprep.subr.mxu0 0.0
    %1198 = vmatpush1.msra.mxu0 0.0
    %1199 = vmatprep.subr.mxu0 0.0
    %1200 = vmatpush1.msra.mxu0 0.0
    %1201 = vmatprep.subr.mxu0 0.0
    %1202 = vmatpush1.msra.mxu0 0.0
    %1203 = vmatprep.subr.mxu0 0.0
    %1204 = vmatpush1.msra.mxu0 0.0
    %1205 = vmatprep.subr.mxu0 0.0
    %1206 = vmatpush1.msra.mxu0 0.0
    %1207 = vmatprep.subr.mxu0 0.0
    %1208 = vmatpush1.msra.mxu0 0.0
    %1209 = vmatprep.subr.mxu0 0.0
    %1210 = vmatpush1.msra.mxu0 0.0
    %1211 = vmatprep.subr.mxu0 0.0
    %1212 = vmatpush1.msra.mxu0 0.0
    %1213 = vmatprep.subr.mxu0 0.0
    %1214 = vmatpush1.msra.mxu0 0.0
    %1215 = vmatprep.subr.mxu0 0.0
    %1216 = vmatpush1.msra.mxu0 %v50
    %1217 = vmatprep.subr.mxu0 0.0
    %1218 = vmatpush1.msra.mxu0 %v49
    %1219 = vmatprep.subr.mxu0 0.0
    %1220 = vmatpush2.msra.mxu0 0.0
    %1221 = vmatprep.subr.mxu0 0.0
    %1222 = vmatpush2.msra.mxu0 0.0
    %1223 = vmatprep.subr.mxu0 0.0
    %1224 = vmatpush2.msra.mxu0 0.0
    %1225 = vmatprep.subr.mxu0 0.0
    %1226 = vmatpush2.msra.mxu0 0.0
    %1227 = vmatprep.subr.mxu0 0.0
    %1228 = vmatpush2.msra.mxu0 0.0
    %1229 = vmatprep.subr.mxu0 0.0
    %1230 = vmatpush2.msra.mxu0 0.0
    %1231 = vmatprep.subr.mxu0 0.0
    %1232 = vmatpush2.msra.mxu0 0.0
    %1233 = vmatprep.subr.mxu0 0.0
    %1234 = vmatpush2.msra.mxu0 0.0
    %1235 = vmatprep.subr.mxu0 0.0
    %1236 = vmatpush2.msra.mxu0 0.0
    %1237 = vmatprep.subr.mxu0 0.0
    %1238 = vmatpush2.msra.mxu0 0.0
    %1239 = vmatprep.subr.mxu0 0.0
    %1240 = vmatpush2.msra.mxu0 0.0
    %1241 = vmatprep.subr.mxu0 0.0
    %1242 = vmatpush2.msra.mxu0 0.0
    %1243 = vmatprep.subr.mxu0 0.0
    %1244 = vmatpush2.msra.mxu0 0.0
    %1245 = vmatprep.subr.mxu0 0.0
    %1246 = vmatpush2.msra.mxu0 0.0
    %1247 = vmatprep.subr.mxu0 0.0
    %1248 = vmatpush2.msra.mxu0 0.0
    %1249 = vmatprep.subr.mxu0 0.0
    %1250 = vmatpush2.msra.mxu0 0.0
    %1251 = vmatprep.mubr.f32.mxu0 0.0
    %1252 = vmatmul.mubr.f32.gmra.mxu0 %v1179
    %v1253 = vpop.f32.mrf.mxu0
    %v1254 = vadd.f32 %v1165, %v1253
    %v1255 = vpop.f32.mrf.mxu0
    %1256 = vmatprep.mubr.f32.mxu0 0.0
    %1257 = vmatmul.mubr.f32.gmra.mxu0 %v1182
    %v1258 = vpop.f32.mrf.mxu0
    %v1259 = vadd.f32 %v1170, %v1258
    %v1260 = vpop.f32.mrf.mxu0
    %1261 = vmatprep.mubr.f32.mxu0 0.0
    %1262 = vmatmul.mubr.f32.gmra.mxu0 %v1185
    %v1263 = vpop.f32.mrf.mxu0
    %v1264 = vadd.f32 %v1175, %v1263
    %v1265 = vpop.f32.mrf.mxu0
    %1266 = vdwg.mxu0
    %v1267 = vlaneseq
    %v1268 = vshrl.u32 %v1267, 7
    %v1269 = vsub.s32 5, %v1268
    %v1270 = vrot.slane %v37, %v1269
    %v1271 = vadd.f32 %v1254, %v1270
    %v1272 = vadd.f32 %v1259, %v1270
    %v1273 = vadd.f32 %v1264, %v1270
    %vm1276 = vcmask 1046528
    %v1277 = vrot.slane %v597, 1
    %v1278 = vrot.slane %v603, 1
    %v1279 = vsel %vm1276, %v1277, %v1278
    %v1280 = vrot.slane %v609, 1
    %v1281 = vsel %vm1276, %v1278, %v1280
    %1282 = vrot.lane.b32.xlu0 %v1279, 96
    %v1283 = vpop.permute.xlu0 %1282
    %1284 = vrot.lane.b32.xlu0 %v1281, 96
    %v1285 = vpop.permute.xlu0 %1284
    %1286 = vrot.lane.b32.xlu0 %v1280, 96
    %v1287 = vpop.permute.xlu0 %1286
    %v1288 = vsel %vm625, %v1279, 0
    %v1290 = vsel %vm625, %v1281, 0
    %v1292 = vsel %vm625, %v1280, 0
    %v1294 = vsel %vm625, %v1283, 0
    %v1296 = vsel %vm625, %v1285, 0
    %v1298 = vsel %vm625, %v1287, 0
    %1300 = vmatprep.subr.mxu0 0.0
    %1301 = vmatpush1.xpose.msra.mxu0 0.0
    %1302 = vmatprep.subr.mxu0 0.0
    %1303 = vmatpush1.xpose.msra.mxu0 0.0
    %1304 = vmatprep.subr.mxu0 0.0
    %1305 = vmatpush1.xpose.msra.mxu0 0.0
    %1306 = vmatprep.subr.mxu0 0.0
    %1307 = vmatpush1.xpose.msra.mxu0 0.0
    %1308 = vmatprep.subr.mxu0 0.0
    %1309 = vmatpush1.xpose.msra.mxu0 0.0
    %1310 = vmatprep.subr.mxu0 0.0
    %1311 = vmatpush1.xpose.msra.mxu0 0.0
    %1312 = vmatprep.subr.mxu0 0.0
    %1313 = vmatpush1.xpose.msra.mxu0 0.0
    %1314 = vmatprep.subr.mxu0 0.0
    %1315 = vmatpush1.xpose.msra.mxu0 0.0
    %1316 = vmatprep.subr.mxu0 0.0
    %1317 = vmatpush1.xpose.msra.mxu0 0.0
    %1318 = vmatprep.subr.mxu0 0.0
    %1319 = vmatpush1.xpose.msra.mxu0 0.0
    %1320 = vmatprep.subr.mxu0 0.0
    %1321 = vmatpush1.xpose.msra.mxu0 0.0
    %1322 = vmatprep.subr.mxu0 0.0
    %1323 = vmatpush1.xpose.msra.mxu0 0.0
    %1324 = vmatprep.subr.mxu0 0.0
    %1325 = vmatpush1.xpose.msra.mxu0 0.0
    %1326 = vmatprep.subr.mxu0 0.0
    %1327 = vmatpush1.xpose.msra.mxu0 %v1298
    %1328 = vmatprep.subr.mxu0 0.0
    %1329 = vmatpush1.xpose.msra.mxu0 %v1296
    %1330 = vmatprep.subr.mxu0 0.0
    %1331 = vmatpush1.xpose.msra.mxu0 %v1294
    %1332 = vmatprep.subr.mxu0 0.0
    %1333 = vmatpush2.xpose.msra.mxu0 0.0
    %1334 = vmatprep.subr.mxu0 0.0
    %1335 = vmatpush2.xpose.msra.mxu0 0.0
    %1336 = vmatprep.subr.mxu0 0.0
    %1337 = vmatpush2.xpose.msra.mxu0 0.0
    %1338 = vmatprep.subr.mxu0 0.0
    %1339 = vmatpush2.xpose.msra.mxu0 0.0
    %1340 = vmatprep.subr.mxu0 0.0
    %1341 = vmatpush2.xpose.msra.mxu0 0.0
    %1342 = vmatprep.subr.mxu0 0.0
    %1343 = vmatpush2.xpose.msra.mxu0 0.0
    %1344 = vmatprep.subr.mxu0 0.0
    %1345 = vmatpush2.xpose.msra.mxu0 0.0
    %1346 = vmatprep.subr.mxu0 0.0
    %1347 = vmatpush2.xpose.msra.mxu0 0.0
    %1348 = vmatprep.subr.mxu0 0.0
    %1349 = vmatpush2.xpose.msra.mxu0 0.0
    %1350 = vmatprep.subr.mxu0 0.0
    %1351 = vmatpush2.xpose.msra.mxu0 0.0
    %1352 = vmatprep.subr.mxu0 0.0
    %1353 = vmatpush2.xpose.msra.mxu0 0.0
    %1354 = vmatprep.subr.mxu0 0.0
    %1355 = vmatpush2.xpose.msra.mxu0 0.0
    %1356 = vmatprep.subr.mxu0 0.0
    %1357 = vmatpush2.xpose.msra.mxu0 0.0
    %1358 = vmatprep.subr.mxu0 0.0
    %1359 = vmatpush2.xpose.msra.mxu0 0.0
    %1360 = vmatprep.subr.mxu0 0.0
    %1361 = vmatpush2.xpose.msra.mxu0 0.0
    %1362 = vmatprep.subr.mxu0 0.0
    %1363 = vmatpush2.xpose.msra.mxu0 0.0
    %1364 = vmatprep.mubr.f32.mxu0 0.0
    %1365 = vmatmul.mubr.f32.gmra.mxu0 %v1288
    %v1366 = vpop.f32.mrf.mxu0
    %v1367 = vadd.f32 0.0, %v1366
    %v1368 = vpop.f32.mrf.mxu0
    %1369 = vmatprep.mubr.f32.mxu0 0.0
    %1370 = vmatmul.mubr.f32.gmra.mxu0 %v1290
    %v1371 = vpop.f32.mrf.mxu0
    %v1372 = vadd.f32 0.0, %v1371
    %v1373 = vpop.f32.mrf.mxu0
    %1374 = vmatprep.mubr.f32.mxu0 0.0
    %1375 = vmatmul.mubr.f32.gmra.mxu0 %v1292
    %v1376 = vpop.f32.mrf.mxu0
    %v1377 = vadd.f32 0.0, %v1376
    %v1378 = vpop.f32.mrf.mxu0
    %1379 = vdwg.mxu0
    %v1380 = vsel %vm718, %v1367, -inf
    %1381 = vmax.xlane.f32.xlu0 %v1380
    %v1382 = vpop.xlane.xlu0 %1381
    %v1383 = vsel %vm718, %v1372, -inf
    %1384 = vmax.xlane.f32.xlu0 %v1383
    %v1385 = vpop.xlane.xlu0 %1384
    %v1386 = vsel %vm725, %v1377, -inf
    %1387 = vmax.xlane.f32.xlu0 %v1386
    %v1388 = vpop.xlane.xlu0 %1387
    %v1389 = vsub.f32 %v1367, %v1382
    %v1390 = vsub.f32 %v1372, %v1385
    %v1391 = vsub.f32 %v1377, %v1388
    %v1392 = vmul.f32 %v1389, 1.442695
    %v1393 = vpow.pop %v1392
    %v1394 = vmul.f32 %v1390, 1.442695
    %v1395 = vpow.pop %v1394
    %v1396 = vmul.f32 %v1391, 1.442695
    %v1397 = vpow.pop %v1396
    %v1398 = vsel %vm718, %v1393, 0.0
    %1399 = vadd.xlane.f32.xlu0 %v1398
    %v1400 = vpop.xlane.xlu0 %1399
    %v1401 = vsel %vm718, %v1395, 0.0
    %1402 = vadd.xlane.f32.xlu0 %v1401
    %v1403 = vpop.xlane.xlu0 %1402
    %v1404 = vsel %vm725, %v1397, 0.0
    %1405 = vadd.xlane.f32.xlu0 %v1404
    %v1406 = vpop.xlane.xlu0 %1405
    %v1407 = vrcp.pop %v1400
    %v1408 = vmul.f32 %v1393, %v1407
    %v1409 = vrcp.pop %v1403
    %v1410 = vmul.f32 %v1395, %v1409
    %v1411 = vrcp.pop %v1406
    %v1412 = vmul.f32 %v1397, %v1411
    %1413 = vrot.lane.b32.xlu0 %v1279, 64
    %v1414 = vpop.permute.xlu0 %1413
    %1415 = vrot.lane.b32.xlu0 %v1281, 64
    %v1416 = vpop.permute.xlu0 %1415
    %1417 = vrot.lane.b32.xlu0 %v1280, 64
    %v1418 = vpop.permute.xlu0 %1417
    %v1422 = vsel %vm718, %v1408, 0
    %v1425 = vsel %vm718, %v1410, 0
    %v1428 = vsel %vm718, %v1412, 0
    %v1430 = vsel %vm770, %v1418, 0
    %1432 = vmatprep.subr.mxu0 0.0
    %1433 = vmatpush1.msra.mxu0 0.0
    %1434 = vmatprep.subr.mxu0 0.0
    %1435 = vmatpush1.msra.mxu0 0.0
    %1436 = vmatprep.subr.mxu0 0.0
    %1437 = vmatpush1.msra.mxu0 0.0
    %1438 = vmatprep.subr.mxu0 0.0
    %1439 = vmatpush1.msra.mxu0 0.0
    %1440 = vmatprep.subr.mxu0 0.0
    %1441 = vmatpush1.msra.mxu0 0.0
    %1442 = vmatprep.subr.mxu0 0.0
    %1443 = vmatpush1.msra.mxu0 0.0
    %1444 = vmatprep.subr.mxu0 0.0
    %1445 = vmatpush1.msra.mxu0 0.0
    %1446 = vmatprep.subr.mxu0 0.0
    %1447 = vmatpush1.msra.mxu0 0.0
    %1448 = vmatprep.subr.mxu0 0.0
    %1449 = vmatpush1.msra.mxu0 0.0
    %1450 = vmatprep.subr.mxu0 0.0
    %1451 = vmatpush1.msra.mxu0 0.0
    %1452 = vmatprep.subr.mxu0 0.0
    %1453 = vmatpush1.msra.mxu0 0.0
    %1454 = vmatprep.subr.mxu0 0.0
    %1455 = vmatpush1.msra.mxu0 0.0
    %1456 = vmatprep.subr.mxu0 0.0
    %1457 = vmatpush1.msra.mxu0 0.0
    %1458 = vmatprep.subr.mxu0 0.0
    %1459 = vmatpush1.msra.mxu0 %v1430
    %1460 = vmatprep.subr.mxu0 0.0
    %1461 = vmatpush1.msra.mxu0 %v1416
    %1462 = vmatprep.subr.mxu0 0.0
    %1463 = vmatpush1.msra.mxu0 %v1414
    %1464 = vmatprep.subr.mxu0 0.0
    %1465 = vmatpush2.msra.mxu0 0.0
    %1466 = vmatprep.subr.mxu0 0.0
    %1467 = vmatpush2.msra.mxu0 0.0
    %1468 = vmatprep.subr.mxu0 0.0
    %1469 = vmatpush2.msra.mxu0 0.0
    %1470 = vmatprep.subr.mxu0 0.0
    %1471 = vmatpush2.msra.mxu0 0.0
    %1472 = vmatprep.subr.mxu0 0.0
    %1473 = vmatpush2.msra.mxu0 0.0
    %1474 = vmatprep.subr.mxu0 0.0
    %1475 = vmatpush2.msra.mxu0 0.0
    %1476 = vmatprep.subr.mxu0 0.0
    %1477 = vmatpush2.msra.mxu0 0.0
    %1478 = vmatprep.subr.mxu0 0.0
    %1479 = vmatpush2.msra.mxu0 0.0
    %1480 = vmatprep.subr.mxu0 0.0
    %1481 = vmatpush2.msra.mxu0 0.0
    %1482 = vmatprep.subr.mxu0 0.0
    %1483 = vmatpush2.msra.mxu0 0.0
    %1484 = vmatprep.subr.mxu0 0.0
    %1485 = vmatpush2.msra.mxu0 0.0
    %1486 = vmatprep.subr.mxu0 0.0
    %1487 = vmatpush2.msra.mxu0 0.0
    %1488 = vmatprep.subr.mxu0 0.0
    %1489 = vmatpush2.msra.mxu0 0.0
    %1490 = vmatprep.subr.mxu0 0.0
    %1491 = vmatpush2.msra.mxu0 0.0
    %1492 = vmatprep.subr.mxu0 0.0
    %1493 = vmatpush2.msra.mxu0 0.0
    %1494 = vmatprep.subr.mxu0 0.0
    %1495 = vmatpush2.msra.mxu0 0.0
    %1496 = vmatprep.mubr.f32.mxu0 0.0
    %1497 = vmatmul.mubr.f32.gmra.mxu0 %v1422
    %v1498 = vpop.f32.mrf.mxu0
    %v1499 = vadd.f32 0.0, %v1498
    %v1500 = vpop.f32.mrf.mxu0
    %1501 = vmatprep.mubr.f32.mxu0 0.0
    %1502 = vmatmul.mubr.f32.gmra.mxu0 %v1425
    %v1503 = vpop.f32.mrf.mxu0
    %v1504 = vadd.f32 0.0, %v1503
    %v1505 = vpop.f32.mrf.mxu0
    %1506 = vmatprep.mubr.f32.mxu0 0.0
    %1507 = vmatmul.mubr.f32.gmra.mxu0 %v1428
    %v1508 = vpop.f32.mrf.mxu0
    %v1509 = vadd.f32 0.0, %v1508
    %v1510 = vpop.f32.mrf.mxu0
    %1511 = vdwg.mxu0
    %1512 = vrot.lane.b32.xlu0 %v1279, 112
    %v1513 = vpop.permute.xlu0 %1512
    %1514 = vrot.lane.b32.xlu0 %v1281, 112
    %v1515 = vpop.permute.xlu0 %1514
    %1516 = vrot.lane.b32.xlu0 %v1280, 112
    %v1517 = vpop.permute.xlu0 %1516
    %1518 = vrot.lane.b32.xlu0 %v1279, 80
    %v1519 = vpop.permute.xlu0 %1518
    %1520 = vrot.lane.b32.xlu0 %v1281, 80
    %v1521 = vpop.permute.xlu0 %1520
    %1522 = vrot.lane.b32.xlu0 %v1280, 80
    %v1523 = vpop.permute.xlu0 %1522
    %v1524 = vsel %vm625, %v1513, 0
    %v1526 = vsel %vm625, %v1515, 0
    %v1528 = vsel %vm625, %v1517, 0
    %v1530 = vsel %vm625, %v1519, 0
    %v1532 = vsel %vm625, %v1521, 0
    %v1534 = vsel %vm625, %v1523, 0
    %1536 = vmatprep.subr.mxu0 0.0
    %1537 = vmatpush1.xpose.msra.mxu0 0.0
    %1538 = vmatprep.subr.mxu0 0.0
    %1539 = vmatpush1.xpose.msra.mxu0 0.0
    %1540 = vmatprep.subr.mxu0 0.0
    %1541 = vmatpush1.xpose.msra.mxu0 0.0
    %1542 = vmatprep.subr.mxu0 0.0
    %1543 = vmatpush1.xpose.msra.mxu0 0.0
    %1544 = vmatprep.subr.mxu0 0.0
    %1545 = vmatpush1.xpose.msra.mxu0 0.0
    %1546 = vmatprep.subr.mxu0 0.0
    %1547 = vmatpush1.xpose.msra.mxu0 0.0
    %1548 = vmatprep.subr.mxu0 0.0
    %1549 = vmatpush1.xpose.msra.mxu0 0.0
    %1550 = vmatprep.subr.mxu0 0.0
    %1551 = vmatpush1.xpose.msra.mxu0 0.0
    %1552 = vmatprep.subr.mxu0 0.0
    %1553 = vmatpush1.xpose.msra.mxu0 0.0
    %1554 = vmatprep.subr.mxu0 0.0
    %1555 = vmatpush1.xpose.msra.mxu0 0.0
    %1556 = vmatprep.subr.mxu0 0.0
    %1557 = vmatpush1.xpose.msra.mxu0 0.0
    %1558 = vmatprep.subr.mxu0 0.0
    %1559 = vmatpush1.xpose.msra.mxu0 0.0
    %1560 = vmatprep.subr.mxu0 0.0
    %1561 = vmatpush1.xpose.msra.mxu0 0.0
    %1562 = vmatprep.subr.mxu0 0.0
    %1563 = vmatpush1.xpose.msra.mxu0 %v1534
    %1564 = vmatprep.subr.mxu0 0.0
    %1565 = vmatpush1.xpose.msra.mxu0 %v1532
    %1566 = vmatprep.subr.mxu0 0.0
    %1567 = vmatpush1.xpose.msra.mxu0 %v1530
    %1568 = vmatprep.subr.mxu0 0.0
    %1569 = vmatpush2.xpose.msra.mxu0 0.0
    %1570 = vmatprep.subr.mxu0 0.0
    %1571 = vmatpush2.xpose.msra.mxu0 0.0
    %1572 = vmatprep.subr.mxu0 0.0
    %1573 = vmatpush2.xpose.msra.mxu0 0.0
    %1574 = vmatprep.subr.mxu0 0.0
    %1575 = vmatpush2.xpose.msra.mxu0 0.0
    %1576 = vmatprep.subr.mxu0 0.0
    %1577 = vmatpush2.xpose.msra.mxu0 0.0
    %1578 = vmatprep.subr.mxu0 0.0
    %1579 = vmatpush2.xpose.msra.mxu0 0.0
    %1580 = vmatprep.subr.mxu0 0.0
    %1581 = vmatpush2.xpose.msra.mxu0 0.0
    %1582 = vmatprep.subr.mxu0 0.0
    %1583 = vmatpush2.xpose.msra.mxu0 0.0
    %1584 = vmatprep.subr.mxu0 0.0
    %1585 = vmatpush2.xpose.msra.mxu0 0.0
    %1586 = vmatprep.subr.mxu0 0.0
    %1587 = vmatpush2.xpose.msra.mxu0 0.0
    %1588 = vmatprep.subr.mxu0 0.0
    %1589 = vmatpush2.xpose.msra.mxu0 0.0
    %1590 = vmatprep.subr.mxu0 0.0
    %1591 = vmatpush2.xpose.msra.mxu0 0.0
    %1592 = vmatprep.subr.mxu0 0.0
    %1593 = vmatpush2.xpose.msra.mxu0 0.0
    %1594 = vmatprep.subr.mxu0 0.0
    %1595 = vmatpush2.xpose.msra.mxu0 0.0
    %1596 = vmatprep.subr.mxu0 0.0
    %1597 = vmatpush2.xpose.msra.mxu0 0.0
    %1598 = vmatprep.subr.mxu0 0.0
    %1599 = vmatpush2.xpose.msra.mxu0 0.0
    %1600 = vmatprep.mubr.f32.mxu0 0.0
    %1601 = vmatmul.mubr.f32.gmra.mxu0 %v1524
    %v1602 = vpop.f32.mrf.mxu0
    %v1603 = vadd.f32 0.0, %v1602
    %v1604 = vpop.f32.mrf.mxu0
    %1605 = vmatprep.mubr.f32.mxu0 0.0
    %1606 = vmatmul.mubr.f32.gmra.mxu0 %v1526
    %v1607 = vpop.f32.mrf.mxu0
    %v1608 = vadd.f32 0.0, %v1607
    %v1609 = vpop.f32.mrf.mxu0
    %1610 = vmatprep.mubr.f32.mxu0 0.0
    %1611 = vmatmul.mubr.f32.gmra.mxu0 %v1528
    %v1612 = vpop.f32.mrf.mxu0
    %v1613 = vadd.f32 0.0, %v1612
    %v1614 = vpop.f32.mrf.mxu0
    %1615 = vdwg.mxu0
    %v1616 = vsel %vm718, %v1603, -inf
    %1617 = vmax.xlane.f32.xlu0 %v1616
    %v1618 = vpop.xlane.xlu0 %1617
    %v1619 = vsel %vm718, %v1608, -inf
    %1620 = vmax.xlane.f32.xlu0 %v1619
    %v1621 = vpop.xlane.xlu0 %1620
    %v1622 = vsel %vm725, %v1613, -inf
    %1623 = vmax.xlane.f32.xlu0 %v1622
    %v1624 = vpop.xlane.xlu0 %1623
    %v1625 = vsub.f32 %v1603, %v1618
    %v1626 = vsub.f32 %v1608, %v1621
    %v1627 = vsub.f32 %v1613, %v1624
    %v1628 = vmul.f32 %v1625, 1.442695
    %v1629 = vpow.pop %v1628
    %v1630 = vmul.f32 %v1626, 1.442695
    %v1631 = vpow.pop %v1630
    %v1632 = vmul.f32 %v1627, 1.442695
    %v1633 = vpow.pop %v1632
    %v1634 = vsel %vm718, %v1629, 0.0
    %1635 = vadd.xlane.f32.xlu0 %v1634
    %v1636 = vpop.xlane.xlu0 %1635
    %v1637 = vsel %vm718, %v1631, 0.0
    %1638 = vadd.xlane.f32.xlu0 %v1637
    %v1639 = vpop.xlane.xlu0 %1638
    %v1640 = vsel %vm725, %v1633, 0.0
    %1641 = vadd.xlane.f32.xlu0 %v1640
    %v1642 = vpop.xlane.xlu0 %1641
    %v1643 = vrcp.pop %v1636
    %v1644 = vmul.f32 %v1629, %v1643
    %v1645 = vrcp.pop %v1639
    %v1646 = vmul.f32 %v1631, %v1645
    %v1647 = vrcp.pop %v1642
    %v1648 = vmul.f32 %v1633, %v1647
    %1649 = vrot.lane.b32.xlu0 %v1279, 48
    %v1650 = vpop.permute.xlu0 %1649
    %1651 = vrot.lane.b32.xlu0 %v1281, 48
    %v1652 = vpop.permute.xlu0 %1651
    %1653 = vrot.lane.b32.xlu0 %v1280, 48
    %v1654 = vpop.permute.xlu0 %1653
    %v1658 = vsel %vm718, %v1644, 0
    %v1661 = vsel %vm718, %v1646, 0
    %v1664 = vsel %vm718, %v1648, 0
    %v1666 = vsel %vm770, %v1654, 0
    %1668 = vmatprep.subr.mxu0 0.0
    %1669 = vmatpush1.msra.mxu0 0.0
    %1670 = vmatprep.subr.mxu0 0.0
    %1671 = vmatpush1.msra.mxu0 0.0
    %1672 = vmatprep.subr.mxu0 0.0
    %1673 = vmatpush1.msra.mxu0 0.0
    %1674 = vmatprep.subr.mxu0 0.0
    %1675 = vmatpush1.msra.mxu0 0.0
    %1676 = vmatprep.subr.mxu0 0.0
    %1677 = vmatpush1.msra.mxu0 0.0
    %1678 = vmatprep.subr.mxu0 0.0
    %1679 = vmatpush1.msra.mxu0 0.0
    %1680 = vmatprep.subr.mxu0 0.0
    %1681 = vmatpush1.msra.mxu0 0.0
    %1682 = vmatprep.subr.mxu0 0.0
    %1683 = vmatpush1.msra.mxu0 0.0
    %1684 = vmatprep.subr.mxu0 0.0
    %1685 = vmatpush1.msra.mxu0 0.0
    %1686 = vmatprep.subr.mxu0 0.0
    %1687 = vmatpush1.msra.mxu0 0.0
    %1688 = vmatprep.subr.mxu0 0.0
    %1689 = vmatpush1.msra.mxu0 0.0
    %1690 = vmatprep.subr.mxu0 0.0
    %1691 = vmatpush1.msra.mxu0 0.0
    %1692 = vmatprep.subr.mxu0 0.0
    %1693 = vmatpush1.msra.mxu0 0.0
    %1694 = vmatprep.subr.mxu0 0.0
    %1695 = vmatpush1.msra.mxu0 %v1666
    %1696 = vmatprep.subr.mxu0 0.0
    %1697 = vmatpush1.msra.mxu0 %v1652
    %1698 = vmatprep.subr.mxu0 0.0
    %1699 = vmatpush1.msra.mxu0 %v1650
    %1700 = vmatprep.subr.mxu0 0.0
    %1701 = vmatpush2.msra.mxu0 0.0
    %1702 = vmatprep.subr.mxu0 0.0
    %1703 = vmatpush2.msra.mxu0 0.0
    %1704 = vmatprep.subr.mxu0 0.0
    %1705 = vmatpush2.msra.mxu0 0.0
    %1706 = vmatprep.subr.mxu0 0.0
    %1707 = vmatpush2.msra.mxu0 0.0
    %1708 = vmatprep.subr.mxu0 0.0
    %1709 = vmatpush2.msra.mxu0 0.0
    %1710 = vmatprep.subr.mxu0 0.0
    %1711 = vmatpush2.msra.mxu0 0.0
    %1712 = vmatprep.subr.mxu0 0.0
    %1713 = vmatpush2.msra.mxu0 0.0
    %1714 = vmatprep.subr.mxu0 0.0
    %1715 = vmatpush2.msra.mxu0 0.0
    %1716 = vmatprep.subr.mxu0 0.0
    %1717 = vmatpush2.msra.mxu0 0.0
    %1718 = vmatprep.subr.mxu0 0.0
    %1719 = vmatpush2.msra.mxu0 0.0
    %1720 = vmatprep.subr.mxu0 0.0
    %1721 = vmatpush2.msra.mxu0 0.0
    %1722 = vmatprep.subr.mxu0 0.0
    %1723 = vmatpush2.msra.mxu0 0.0
    %1724 = vmatprep.subr.mxu0 0.0
    %1725 = vmatpush2.msra.mxu0 0.0
    %1726 = vmatprep.subr.mxu0 0.0
    %1727 = vmatpush2.msra.mxu0 0.0
    %1728 = vmatprep.subr.mxu0 0.0
    %1729 = vmatpush2.msra.mxu0 0.0
    %1730 = vmatprep.subr.mxu0 0.0
    %1731 = vmatpush2.msra.mxu0 0.0
    %1732 = vmatprep.mubr.f32.mxu0 0.0
    %1733 = vmatmul.mubr.f32.gmra.mxu0 %v1658
    %v1734 = vpop.f32.mrf.mxu0
    %v1735 = vadd.f32 0.0, %v1734
    %v1736 = vpop.f32.mrf.mxu0
    %1737 = vmatprep.mubr.f32.mxu0 0.0
    %1738 = vmatmul.mubr.f32.gmra.mxu0 %v1661
    %v1739 = vpop.f32.mrf.mxu0
    %v1740 = vadd.f32 0.0, %v1739
    %v1741 = vpop.f32.mrf.mxu0
    %1742 = vmatprep.mubr.f32.mxu0 0.0
    %1743 = vmatmul.mubr.f32.gmra.mxu0 %v1664
    %v1744 = vpop.f32.mrf.mxu0
    %v1745 = vadd.f32 0.0, %v1744
    %v1746 = vpop.f32.mrf.mxu0
    %1747 = vdwg.mxu0
    %v1749 = vsel %vm625, %v1735, 0
    %v1752 = vsel %vm625, %v1740, 0
    %v1755 = vsel %vm625, %v1745, 0
    %1757 = vmatprep.subr.mxu0 0.0
    %1758 = vmatpush1.msra.mxu0 0.0
    %1759 = vmatprep.subr.mxu0 0.0
    %1760 = vmatpush1.msra.mxu0 0.0
    %1761 = vmatprep.subr.mxu0 0.0
    %1762 = vmatpush1.msra.mxu0 0.0
    %1763 = vmatprep.subr.mxu0 0.0
    %1764 = vmatpush1.msra.mxu0 0.0
    %1765 = vmatprep.subr.mxu0 0.0
    %1766 = vmatpush1.msra.mxu0 0.0
    %1767 = vmatprep.subr.mxu0 0.0
    %1768 = vmatpush1.msra.mxu0 0.0
    %1769 = vmatprep.subr.mxu0 0.0
    %1770 = vmatpush1.msra.mxu0 0.0
    %1771 = vmatprep.subr.mxu0 0.0
    %1772 = vmatpush1.msra.mxu0 0.0
    %1773 = vmatprep.subr.mxu0 0.0
    %1774 = vmatpush1.msra.mxu0 0.0
    %1775 = vmatprep.subr.mxu0 0.0
    %1776 = vmatpush1.msra.mxu0 0.0
    %1777 = vmatprep.subr.mxu0 0.0
    %1778 = vmatpush1.msra.mxu0 0.0
    %1779 = vmatprep.subr.mxu0 0.0
    %1780 = vmatpush1.msra.mxu0 0.0
    %1781 = vmatprep.subr.mxu0 0.0
    %1782 = vmatpush1.msra.mxu0 0.0
    %1783 = vmatprep.subr.mxu0 0.0
    %1784 = vmatpush1.msra.mxu0 0.0
    %1785 = vmatprep.subr.mxu0 0.0
    %1786 = vmatpush1.msra.mxu0 %v52
    %1787 = vmatprep.subr.mxu0 0.0
    %1788 = vmatpush1.msra.mxu0 %v51
    %1789 = vmatprep.subr.mxu0 0.0
    %1790 = vmatpush2.msra.mxu0 0.0
    %1791 = vmatprep.subr.mxu0 0.0
    %1792 = vmatpush2.msra.mxu0 0.0
    %1793 = vmatprep.subr.mxu0 0.0
    %1794 = vmatpush2.msra.mxu0 0.0
    %1795 = vmatprep.subr.mxu0 0.0
    %1796 = vmatpush2.msra.mxu0 0.0
    %1797 = vmatprep.subr.mxu0 0.0
    %1798 = vmatpush2.msra.mxu0 0.0
    %1799 = vmatprep.subr.mxu0 0.0
    %1800 = vmatpush2.msra.mxu0 0.0
    %1801 = vmatprep.subr.mxu0 0.0
    %1802 = vmatpush2.msra.mxu0 0.0
    %1803 = vmatprep.subr.mxu0 0.0
    %1804 = vmatpush2.msra.mxu0 0.0
    %1805 = vmatprep.subr.mxu0 0.0
    %1806 = vmatpush2.msra.mxu0 0.0
    %1807 = vmatprep.subr.mxu0 0.0
    %1808 = vmatpush2.msra.mxu0 0.0
    %1809 = vmatprep.subr.mxu0 0.0
    %1810 = vmatpush2.msra.mxu0 0.0
    %1811 = vmatprep.subr.mxu0 0.0
    %1812 = vmatpush2.msra.mxu0 0.0
    %1813 = vmatprep.subr.mxu0 0.0
    %1814 = vmatpush2.msra.mxu0 0.0
    %1815 = vmatprep.subr.mxu0 0.0
    %1816 = vmatpush2.msra.mxu0 0.0
    %1817 = vmatprep.subr.mxu0 0.0
    %1818 = vmatpush2.msra.mxu0 0.0
    %1819 = vmatprep.subr.mxu0 0.0
    %1820 = vmatpush2.msra.mxu0 0.0
    %1821 = vmatprep.mubr.f32.mxu0 0.0
    %1822 = vmatmul.mubr.f32.gmra.mxu0 %v1749
    %v1823 = vpop.f32.mrf.mxu0
    %v1824 = vadd.f32 0.0, %v1823
    %v1825 = vpop.f32.mrf.mxu0
    %1826 = vmatprep.mubr.f32.mxu0 0.0
    %1827 = vmatmul.mubr.f32.gmra.mxu0 %v1752
    %v1828 = vpop.f32.mrf.mxu0
    %v1829 = vadd.f32 0.0, %v1828
    %v1830 = vpop.f32.mrf.mxu0
    %1831 = vmatprep.mubr.f32.mxu0 0.0
    %1832 = vmatmul.mubr.f32.gmra.mxu0 %v1755
    %v1833 = vpop.f32.mrf.mxu0
    %v1834 = vadd.f32 0.0, %v1833
    %v1835 = vpop.f32.mrf.mxu0
    %1836 = vdwg.mxu0
    %v1838 = vsel %vm625, %v1499, 0
    %v1841 = vsel %vm625, %v1504, 0
    %v1844 = vsel %vm625, %v1509, 0
    %1846 = vmatprep.subr.mxu0 0.0
    %1847 = vmatpush1.msra.mxu0 0.0
    %1848 = vmatprep.subr.mxu0 0.0
    %1849 = vmatpush1.msra.mxu0 0.0
    %1850 = vmatprep.subr.mxu0 0.0
    %1851 = vmatpush1.msra.mxu0 0.0
    %1852 = vmatprep.subr.mxu0 0.0
    %1853 = vmatpush1.msra.mxu0 0.0
    %1854 = vmatprep.subr.mxu0 0.0
    %1855 = vmatpush1.msra.mxu0 0.0
    %1856 = vmatprep.subr.mxu0 0.0
    %1857 = vmatpush1.msra.mxu0 0.0
    %1858 = vmatprep.subr.mxu0 0.0
    %1859 = vmatpush1.msra.mxu0 0.0
    %1860 = vmatprep.subr.mxu0 0.0
    %1861 = vmatpush1.msra.mxu0 0.0
    %1862 = vmatprep.subr.mxu0 0.0
    %1863 = vmatpush1.msra.mxu0 0.0
    %1864 = vmatprep.subr.mxu0 0.0
    %1865 = vmatpush1.msra.mxu0 0.0
    %1866 = vmatprep.subr.mxu0 0.0
    %1867 = vmatpush1.msra.mxu0 0.0
    %1868 = vmatprep.subr.mxu0 0.0
    %1869 = vmatpush1.msra.mxu0 0.0
    %1870 = vmatprep.subr.mxu0 0.0
    %1871 = vmatpush1.msra.mxu0 0.0
    %1872 = vmatprep.subr.mxu0 0.0
    %1873 = vmatpush1.msra.mxu0 0.0
    %1874 = vmatprep.subr.mxu0 0.0
    %1875 = vmatpush1.msra.mxu0 %v50
    %1876 = vmatprep.subr.mxu0 0.0
    %1877 = vmatpush1.msra.mxu0 %v49
    %1878 = vmatprep.subr.mxu0 0.0
    %1879 = vmatpush2.msra.mxu0 0.0
    %1880 = vmatprep.subr.mxu0 0.0
    %1881 = vmatpush2.msra.mxu0 0.0
    %1882 = vmatprep.subr.mxu0 0.0
    %1883 = vmatpush2.msra.mxu0 0.0
    %1884 = vmatprep.subr.mxu0 0.0
    %1885 = vmatpush2.msra.mxu0 0.0
    %1886 = vmatprep.subr.mxu0 0.0
    %1887 = vmatpush2.msra.mxu0 0.0
    %1888 = vmatprep.subr.mxu0 0.0
    %1889 = vmatpush2.msra.mxu0 0.0
    %1890 = vmatprep.subr.mxu0 0.0
    %1891 = vmatpush2.msra.mxu0 0.0
    %1892 = vmatprep.subr.mxu0 0.0
    %1893 = vmatpush2.msra.mxu0 0.0
    %1894 = vmatprep.subr.mxu0 0.0
    %1895 = vmatpush2.msra.mxu0 0.0
    %1896 = vmatprep.subr.mxu0 0.0
    %1897 = vmatpush2.msra.mxu0 0.0
    %1898 = vmatprep.subr.mxu0 0.0
    %1899 = vmatpush2.msra.mxu0 0.0
    %1900 = vmatprep.subr.mxu0 0.0
    %1901 = vmatpush2.msra.mxu0 0.0
    %1902 = vmatprep.subr.mxu0 0.0
    %1903 = vmatpush2.msra.mxu0 0.0
    %1904 = vmatprep.subr.mxu0 0.0
    %1905 = vmatpush2.msra.mxu0 0.0
    %1906 = vmatprep.subr.mxu0 0.0
    %1907 = vmatpush2.msra.mxu0 0.0
    %1908 = vmatprep.subr.mxu0 0.0
    %1909 = vmatpush2.msra.mxu0 0.0
    %1910 = vmatprep.mubr.f32.mxu0 0.0
    %1911 = vmatmul.mubr.f32.gmra.mxu0 %v1838
    %v1912 = vpop.f32.mrf.mxu0
    %v1913 = vadd.f32 %v1824, %v1912
    %v1914 = vpop.f32.mrf.mxu0
    %1915 = vmatprep.mubr.f32.mxu0 0.0
    %1916 = vmatmul.mubr.f32.gmra.mxu0 %v1841
    %v1917 = vpop.f32.mrf.mxu0
    %v1918 = vadd.f32 %v1829, %v1917
    %v1919 = vpop.f32.mrf.mxu0
    %1920 = vmatprep.mubr.f32.mxu0 0.0
    %1921 = vmatmul.mubr.f32.gmra.mxu0 %v1844
    %v1922 = vpop.f32.mrf.mxu0
    %v1923 = vadd.f32 %v1834, %v1922
    %v1924 = vpop.f32.mrf.mxu0
    %1925 = vdwg.mxu0
    %v1926 = vadd.f32 %v1913, %v1270
    %v1927 = vadd.f32 %v1918, %v1270
    %v1928 = vadd.f32 %v1923, %v1270
    %1929 = vrot.lane.b32.xlu0 %v585, 32
    %v1930 = vpop.permute.xlu0 %1929
    %1931 = vrot.lane.b32.xlu0 %v591, 32
    %v1932 = vpop.permute.xlu0 %1931
    %1933 = vrot.lane.b32.xlu0 %v597, 32
    %v1934 = vpop.permute.xlu0 %1933
    %v1935 = vsel %vm625, %v1930, 0
    %v1937 = vsel %vm625, %v1932, 0
    %v1939 = vsel %vm625, %v1934, 0
    %v1942 = vsel %vm625, %v587, 0
    %v1945 = vsel %vm625, %v593, 0
    %v1948 = vsel %vm625, %v599, 0
    %1950 = vmatprep.subr.mxu0 0.0
    %1951 = vmatpush1.xpose.msra.mxu0 0.0
    %1952 = vmatprep.subr.mxu0 0.0
    %1953 = vmatpush1.xpose.msra.mxu0 0.0
    %1954 = vmatprep.subr.mxu0 0.0
    %1955 = vmatpush1.xpose.msra.mxu0 0.0
    %1956 = vmatprep.subr.mxu0 0.0
    %1957 = vmatpush1.xpose.msra.mxu0 0.0
    %1958 = vmatprep.subr.mxu0 0.0
    %1959 = vmatpush1.xpose.msra.mxu0 0.0
    %1960 = vmatprep.subr.mxu0 0.0
    %1961 = vmatpush1.xpose.msra.mxu0 0.0
    %1962 = vmatprep.subr.mxu0 0.0
    %1963 = vmatpush1.xpose.msra.mxu0 0.0
    %1964 = vmatprep.subr.mxu0 0.0
    %1965 = vmatpush1.xpose.msra.mxu0 0.0
    %1966 = vmatprep.subr.mxu0 0.0
    %1967 = vmatpush1.xpose.msra.mxu0 0.0
    %1968 = vmatprep.subr.mxu0 0.0
    %1969 = vmatpush1.xpose.msra.mxu0 0.0
    %1970 = vmatprep.subr.mxu0 0.0
    %1971 = vmatpush1.xpose.msra.mxu0 0.0
    %1972 = vmatprep.subr.mxu0 0.0
    %1973 = vmatpush1.xpose.msra.mxu0 0.0
    %1974 = vmatprep.subr.mxu0 0.0
    %1975 = vmatpush1.xpose.msra.mxu0 0.0
    %1976 = vmatprep.subr.mxu0 0.0
    %1977 = vmatpush1.xpose.msra.mxu0 %v1948
    %1978 = vmatprep.subr.mxu0 0.0
    %1979 = vmatpush1.xpose.msra.mxu0 %v1945
    %1980 = vmatprep.subr.mxu0 0.0
    %1981 = vmatpush1.xpose.msra.mxu0 %v1942
    %1982 = vmatprep.subr.mxu0 0.0
    %1983 = vmatpush2.xpose.msra.mxu0 0.0
    %1984 = vmatprep.subr.mxu0 0.0
    %1985 = vmatpush2.xpose.msra.mxu0 0.0
    %1986 = vmatprep.subr.mxu0 0.0
    %1987 = vmatpush2.xpose.msra.mxu0 0.0
    %1988 = vmatprep.subr.mxu0 0.0
    %1989 = vmatpush2.xpose.msra.mxu0 0.0
    %1990 = vmatprep.subr.mxu0 0.0
    %1991 = vmatpush2.xpose.msra.mxu0 0.0
    %1992 = vmatprep.subr.mxu0 0.0
    %1993 = vmatpush2.xpose.msra.mxu0 0.0
    %1994 = vmatprep.subr.mxu0 0.0
    %1995 = vmatpush2.xpose.msra.mxu0 0.0
    %1996 = vmatprep.subr.mxu0 0.0
    %1997 = vmatpush2.xpose.msra.mxu0 0.0
    %1998 = vmatprep.subr.mxu0 0.0
    %1999 = vmatpush2.xpose.msra.mxu0 0.0
    %2000 = vmatprep.subr.mxu0 0.0
    %2001 = vmatpush2.xpose.msra.mxu0 0.0
    %2002 = vmatprep.subr.mxu0 0.0
    %2003 = vmatpush2.xpose.msra.mxu0 0.0
    %2004 = vmatprep.subr.mxu0 0.0
    %2005 = vmatpush2.xpose.msra.mxu0 0.0
    %2006 = vmatprep.subr.mxu0 0.0
    %2007 = vmatpush2.xpose.msra.mxu0 0.0
    %2008 = vmatprep.subr.mxu0 0.0
    %2009 = vmatpush2.xpose.msra.mxu0 0.0
    %2010 = vmatprep.subr.mxu0 0.0
    %2011 = vmatpush2.xpose.msra.mxu0 0.0
    %2012 = vmatprep.subr.mxu0 0.0
    %2013 = vmatpush2.xpose.msra.mxu0 0.0
    %2014 = vmatprep.mubr.f32.mxu0 0.0
    %2015 = vmatmul.mubr.f32.gmra.mxu0 %v1935
    %v2016 = vpop.f32.mrf.mxu0
    %v2017 = vadd.f32 0.0, %v2016
    %v2018 = vpop.f32.mrf.mxu0
    %2019 = vmatprep.mubr.f32.mxu0 0.0
    %2020 = vmatmul.mubr.f32.gmra.mxu0 %v1937
    %v2021 = vpop.f32.mrf.mxu0
    %v2022 = vadd.f32 0.0, %v2021
    %v2023 = vpop.f32.mrf.mxu0
    %2024 = vmatprep.mubr.f32.mxu0 0.0
    %2025 = vmatmul.mubr.f32.gmra.mxu0 %v1939
    %v2026 = vpop.f32.mrf.mxu0
    %v2027 = vadd.f32 0.0, %v2026
    %v2028 = vpop.f32.mrf.mxu0
    %2029 = vdwg.mxu0
    %v2030 = vsel %vm615, -1e+30, %v2017
    %v2031 = vsel %vm615, -1e+30, %v2022
    %v2032 = vsel %vm615, -1e+30, %v2027
    %v2033 = vsel %vm718, %v2030, -inf
    %2034 = vmax.xlane.f32.xlu0 %v2033
    %v2035 = vpop.xlane.xlu0 %2034
    %v2036 = vsel %vm718, %v2031, -inf
    %2037 = vmax.xlane.f32.xlu0 %v2036
    %v2038 = vpop.xlane.xlu0 %2037
    %v2039 = vsel %vm725, %v2032, -inf
    %2040 = vmax.xlane.f32.xlu0 %v2039
    %v2041 = vpop.xlane.xlu0 %2040
    %v2042 = vsub.f32 %v2030, %v2035
    %v2043 = vsub.f32 %v2031, %v2038
    %v2044 = vsub.f32 %v2032, %v2041
    %v2045 = vmul.f32 %v2042, 1.442695
    %v2046 = vpow.pop %v2045
    %v2047 = vmul.f32 %v2043, 1.442695
    %v2048 = vpow.pop %v2047
    %v2049 = vmul.f32 %v2044, 1.442695
    %v2050 = vpow.pop %v2049
    %v2051 = vsel %vm718, %v2046, 0.0
    %2052 = vadd.xlane.f32.xlu0 %v2051
    %v2053 = vpop.xlane.xlu0 %2052
    %v2054 = vsel %vm718, %v2048, 0.0
    %2055 = vadd.xlane.f32.xlu0 %v2054
    %v2056 = vpop.xlane.xlu0 %2055
    %v2057 = vsel %vm725, %v2050, 0.0
    %2058 = vadd.xlane.f32.xlu0 %v2057
    %v2059 = vpop.xlane.xlu0 %2058
    %v2060 = vrcp.pop %v2053
    %v2061 = vmul.f32 %v2046, %v2060
    %v2062 = vrcp.pop %v2056
    %v2063 = vmul.f32 %v2048, %v2062
    %v2064 = vrcp.pop %v2059
    %v2065 = vmul.f32 %v2050, %v2064
    %2066 = vrot.lane.b32.xlu0 %v587, 96
    %v2067 = vpop.permute.xlu0 %2066
    %2068 = vrot.lane.b32.xlu0 %v593, 96
    %v2069 = vpop.permute.xlu0 %2068
    %2070 = vrot.lane.b32.xlu0 %v599, 96
    %v2071 = vpop.permute.xlu0 %2070
    %v2075 = vsel %vm718, %v2061, 0
    %v2078 = vsel %vm718, %v2063, 0
    %v2081 = vsel %vm718, %v2065, 0
    %v2083 = vsel %vm770, %v2071, 0
    %2085 = vmatprep.subr.mxu0 0.0
    %2086 = vmatpush1.msra.mxu0 0.0
    %2087 = vmatprep.subr.mxu0 0.0
    %2088 = vmatpush1.msra.mxu0 0.0
    %2089 = vmatprep.subr.mxu0 0.0
    %2090 = vmatpush1.msra.mxu0 0.0
    %2091 = vmatprep.subr.mxu0 0.0
    %2092 = vmatpush1.msra.mxu0 0.0
    %2093 = vmatprep.subr.mxu0 0.0
    %2094 = vmatpush1.msra.mxu0 0.0
    %2095 = vmatprep.subr.mxu0 0.0
    %2096 = vmatpush1.msra.mxu0 0.0
    %2097 = vmatprep.subr.mxu0 0.0
    %2098 = vmatpush1.msra.mxu0 0.0
    %2099 = vmatprep.subr.mxu0 0.0
    %2100 = vmatpush1.msra.mxu0 0.0
    %2101 = vmatprep.subr.mxu0 0.0
    %2102 = vmatpush1.msra.mxu0 0.0
    %2103 = vmatprep.subr.mxu0 0.0
    %2104 = vmatpush1.msra.mxu0 0.0
    %2105 = vmatprep.subr.mxu0 0.0
    %2106 = vmatpush1.msra.mxu0 0.0
    %2107 = vmatprep.subr.mxu0 0.0
    %2108 = vmatpush1.msra.mxu0 0.0
    %2109 = vmatprep.subr.mxu0 0.0
    %2110 = vmatpush1.msra.mxu0 0.0
    %2111 = vmatprep.subr.mxu0 0.0
    %2112 = vmatpush1.msra.mxu0 %v2083
    %2113 = vmatprep.subr.mxu0 0.0
    %2114 = vmatpush1.msra.mxu0 %v2069
    %2115 = vmatprep.subr.mxu0 0.0
    %2116 = vmatpush1.msra.mxu0 %v2067
    %2117 = vmatprep.subr.mxu0 0.0
    %2118 = vmatpush2.msra.mxu0 0.0
    %2119 = vmatprep.subr.mxu0 0.0
    %2120 = vmatpush2.msra.mxu0 0.0
    %2121 = vmatprep.subr.mxu0 0.0
    %2122 = vmatpush2.msra.mxu0 0.0
    %2123 = vmatprep.subr.mxu0 0.0
    %2124 = vmatpush2.msra.mxu0 0.0
    %2125 = vmatprep.subr.mxu0 0.0
    %2126 = vmatpush2.msra.mxu0 0.0
    %2127 = vmatprep.subr.mxu0 0.0
    %2128 = vmatpush2.msra.mxu0 0.0
    %2129 = vmatprep.subr.mxu0 0.0
    %2130 = vmatpush2.msra.mxu0 0.0
    %2131 = vmatprep.subr.mxu0 0.0
    %2132 = vmatpush2.msra.mxu0 0.0
    %2133 = vmatprep.subr.mxu0 0.0
    %2134 = vmatpush2.msra.mxu0 0.0
    %2135 = vmatprep.subr.mxu0 0.0
    %2136 = vmatpush2.msra.mxu0 0.0
    %2137 = vmatprep.subr.mxu0 0.0
    %2138 = vmatpush2.msra.mxu0 0.0
    %2139 = vmatprep.subr.mxu0 0.0
    %2140 = vmatpush2.msra.mxu0 0.0
    %2141 = vmatprep.subr.mxu0 0.0
    %2142 = vmatpush2.msra.mxu0 0.0
    %2143 = vmatprep.subr.mxu0 0.0
    %2144 = vmatpush2.msra.mxu0 0.0
    %2145 = vmatprep.subr.mxu0 0.0
    %2146 = vmatpush2.msra.mxu0 0.0
    %2147 = vmatprep.subr.mxu0 0.0
    %2148 = vmatpush2.msra.mxu0 0.0
    %2149 = vmatprep.mubr.f32.mxu0 0.0
    %2150 = vmatmul.mubr.f32.gmra.mxu0 %v2075
    %v2151 = vpop.f32.mrf.mxu0
    %v2152 = vadd.f32 0.0, %v2151
    %v2153 = vpop.f32.mrf.mxu0
    %2154 = vmatprep.mubr.f32.mxu0 0.0
    %2155 = vmatmul.mubr.f32.gmra.mxu0 %v2078
    %v2156 = vpop.f32.mrf.mxu0
    %v2157 = vadd.f32 0.0, %v2156
    %v2158 = vpop.f32.mrf.mxu0
    %2159 = vmatprep.mubr.f32.mxu0 0.0
    %2160 = vmatmul.mubr.f32.gmra.mxu0 %v2081
    %v2161 = vpop.f32.mrf.mxu0
    %v2162 = vadd.f32 0.0, %v2161
    %v2163 = vpop.f32.mrf.mxu0
    %2164 = vdwg.mxu0
    %2165 = vrot.lane.b32.xlu0 %v585, 16
    %v2166 = vpop.permute.xlu0 %2165
    %2167 = vrot.lane.b32.xlu0 %v591, 16
    %v2168 = vpop.permute.xlu0 %2167
    %2169 = vrot.lane.b32.xlu0 %v597, 16
    %v2170 = vpop.permute.xlu0 %2169
    %2171 = vrot.lane.b32.xlu0 %v587, 112
    %v2172 = vpop.permute.xlu0 %2171
    %2173 = vrot.lane.b32.xlu0 %v593, 112
    %v2174 = vpop.permute.xlu0 %2173
    %2175 = vrot.lane.b32.xlu0 %v599, 112
    %v2176 = vpop.permute.xlu0 %2175
    %v2177 = vsel %vm625, %v2166, 0
    %v2179 = vsel %vm625, %v2168, 0
    %v2181 = vsel %vm625, %v2170, 0
    %v2183 = vsel %vm625, %v2172, 0
    %v2185 = vsel %vm625, %v2174, 0
    %v2187 = vsel %vm625, %v2176, 0
    %2189 = vmatprep.subr.mxu0 0.0
    %2190 = vmatpush1.xpose.msra.mxu0 0.0
    %2191 = vmatprep.subr.mxu0 0.0
    %2192 = vmatpush1.xpose.msra.mxu0 0.0
    %2193 = vmatprep.subr.mxu0 0.0
    %2194 = vmatpush1.xpose.msra.mxu0 0.0
    %2195 = vmatprep.subr.mxu0 0.0
    %2196 = vmatpush1.xpose.msra.mxu0 0.0
    %2197 = vmatprep.subr.mxu0 0.0
    %2198 = vmatpush1.xpose.msra.mxu0 0.0
    %2199 = vmatprep.subr.mxu0 0.0
    %2200 = vmatpush1.xpose.msra.mxu0 0.0
    %2201 = vmatprep.subr.mxu0 0.0
    %2202 = vmatpush1.xpose.msra.mxu0 0.0
    %2203 = vmatprep.subr.mxu0 0.0
    %2204 = vmatpush1.xpose.msra.mxu0 0.0
    %2205 = vmatprep.subr.mxu0 0.0
    %2206 = vmatpush1.xpose.msra.mxu0 0.0
    %2207 = vmatprep.subr.mxu0 0.0
    %2208 = vmatpush1.xpose.msra.mxu0 0.0
    %2209 = vmatprep.subr.mxu0 0.0
    %2210 = vmatpush1.xpose.msra.mxu0 0.0
    %2211 = vmatprep.subr.mxu0 0.0
    %2212 = vmatpush1.xpose.msra.mxu0 0.0
    %2213 = vmatprep.subr.mxu0 0.0
    %2214 = vmatpush1.xpose.msra.mxu0 0.0
    %2215 = vmatprep.subr.mxu0 0.0
    %2216 = vmatpush1.xpose.msra.mxu0 %v2187
    %2217 = vmatprep.subr.mxu0 0.0
    %2218 = vmatpush1.xpose.msra.mxu0 %v2185
    %2219 = vmatprep.subr.mxu0 0.0
    %2220 = vmatpush1.xpose.msra.mxu0 %v2183
    %2221 = vmatprep.subr.mxu0 0.0
    %2222 = vmatpush2.xpose.msra.mxu0 0.0
    %2223 = vmatprep.subr.mxu0 0.0
    %2224 = vmatpush2.xpose.msra.mxu0 0.0
    %2225 = vmatprep.subr.mxu0 0.0
    %2226 = vmatpush2.xpose.msra.mxu0 0.0
    %2227 = vmatprep.subr.mxu0 0.0
    %2228 = vmatpush2.xpose.msra.mxu0 0.0
    %2229 = vmatprep.subr.mxu0 0.0
    %2230 = vmatpush2.xpose.msra.mxu0 0.0
    %2231 = vmatprep.subr.mxu0 0.0
    %2232 = vmatpush2.xpose.msra.mxu0 0.0
    %2233 = vmatprep.subr.mxu0 0.0
    %2234 = vmatpush2.xpose.msra.mxu0 0.0
    %2235 = vmatprep.subr.mxu0 0.0
    %2236 = vmatpush2.xpose.msra.mxu0 0.0
    %2237 = vmatprep.subr.mxu0 0.0
    %2238 = vmatpush2.xpose.msra.mxu0 0.0
    %2239 = vmatprep.subr.mxu0 0.0
    %2240 = vmatpush2.xpose.msra.mxu0 0.0
    %2241 = vmatprep.subr.mxu0 0.0
    %2242 = vmatpush2.xpose.msra.mxu0 0.0
    %2243 = vmatprep.subr.mxu0 0.0
    %2244 = vmatpush2.xpose.msra.mxu0 0.0
    %2245 = vmatprep.subr.mxu0 0.0
    %2246 = vmatpush2.xpose.msra.mxu0 0.0
    %2247 = vmatprep.subr.mxu0 0.0
    %2248 = vmatpush2.xpose.msra.mxu0 0.0
    %2249 = vmatprep.subr.mxu0 0.0
    %2250 = vmatpush2.xpose.msra.mxu0 0.0
    %2251 = vmatprep.subr.mxu0 0.0
    %2252 = vmatpush2.xpose.msra.mxu0 0.0
    %2253 = vmatprep.mubr.f32.mxu0 0.0
    %2254 = vmatmul.mubr.f32.gmra.mxu0 %v2177
    %v2255 = vpop.f32.mrf.mxu0
    %v2256 = vadd.f32 0.0, %v2255
    %v2257 = vpop.f32.mrf.mxu0
    %2258 = vmatprep.mubr.f32.mxu0 0.0
    %2259 = vmatmul.mubr.f32.gmra.mxu0 %v2179
    %v2260 = vpop.f32.mrf.mxu0
    %v2261 = vadd.f32 0.0, %v2260
    %v2262 = vpop.f32.mrf.mxu0
    %2263 = vmatprep.mubr.f32.mxu0 0.0
    %2264 = vmatmul.mubr.f32.gmra.mxu0 %v2181
    %v2265 = vpop.f32.mrf.mxu0
    %v2266 = vadd.f32 0.0, %v2265
    %v2267 = vpop.f32.mrf.mxu0
    %2268 = vdwg.mxu0
    %v2269 = vsel %vm615, -1e+30, %v2256
    %v2270 = vsel %vm615, -1e+30, %v2261
    %v2271 = vsel %vm615, -1e+30, %v2266
    %v2272 = vsel %vm718, %v2269, -inf
    %2273 = vmax.xlane.f32.xlu0 %v2272
    %v2274 = vpop.xlane.xlu0 %2273
    %v2275 = vsel %vm718, %v2270, -inf
    %2276 = vmax.xlane.f32.xlu0 %v2275
    %v2277 = vpop.xlane.xlu0 %2276
    %v2278 = vsel %vm725, %v2271, -inf
    %2279 = vmax.xlane.f32.xlu0 %v2278
    %v2280 = vpop.xlane.xlu0 %2279
    %v2281 = vsub.f32 %v2269, %v2274
    %v2282 = vsub.f32 %v2270, %v2277
    %v2283 = vsub.f32 %v2271, %v2280
    %v2284 = vmul.f32 %v2281, 1.442695
    %v2285 = vpow.pop %v2284
    %v2286 = vmul.f32 %v2282, 1.442695
    %v2287 = vpow.pop %v2286
    %v2288 = vmul.f32 %v2283, 1.442695
    %v2289 = vpow.pop %v2288
    %v2290 = vsel %vm718, %v2285, 0.0
    %2291 = vadd.xlane.f32.xlu0 %v2290
    %v2292 = vpop.xlane.xlu0 %2291
    %v2293 = vsel %vm718, %v2287, 0.0
    %2294 = vadd.xlane.f32.xlu0 %v2293
    %v2295 = vpop.xlane.xlu0 %2294
    %v2296 = vsel %vm725, %v2289, 0.0
    %2297 = vadd.xlane.f32.xlu0 %v2296
    %v2298 = vpop.xlane.xlu0 %2297
    %v2299 = vrcp.pop %v2292
    %v2300 = vmul.f32 %v2285, %v2299
    %v2301 = vrcp.pop %v2295
    %v2302 = vmul.f32 %v2287, %v2301
    %v2303 = vrcp.pop %v2298
    %v2304 = vmul.f32 %v2289, %v2303
    %2305 = vrot.lane.b32.xlu0 %v587, 80
    %v2306 = vpop.permute.xlu0 %2305
    %2307 = vrot.lane.b32.xlu0 %v593, 80
    %v2308 = vpop.permute.xlu0 %2307
    %2309 = vrot.lane.b32.xlu0 %v599, 80
    %v2310 = vpop.permute.xlu0 %2309
    %v2314 = vsel %vm718, %v2300, 0
    %v2317 = vsel %vm718, %v2302, 0
    %v2320 = vsel %vm718, %v2304, 0
    %v2322 = vsel %vm770, %v2310, 0
    %2324 = vmatprep.subr.mxu0 0.0
    %2325 = vmatpush1.msra.mxu0 0.0
    %2326 = vmatprep.subr.mxu0 0.0
    %2327 = vmatpush1.msra.mxu0 0.0
    %2328 = vmatprep.subr.mxu0 0.0
    %2329 = vmatpush1.msra.mxu0 0.0
    %2330 = vmatprep.subr.mxu0 0.0
    %2331 = vmatpush1.msra.mxu0 0.0
    %2332 = vmatprep.subr.mxu0 0.0
    %2333 = vmatpush1.msra.mxu0 0.0
    %2334 = vmatprep.subr.mxu0 0.0
    %2335 = vmatpush1.msra.mxu0 0.0
    %2336 = vmatprep.subr.mxu0 0.0
    %2337 = vmatpush1.msra.mxu0 0.0
    %2338 = vmatprep.subr.mxu0 0.0
    %2339 = vmatpush1.msra.mxu0 0.0
    %2340 = vmatprep.subr.mxu0 0.0
    %2341 = vmatpush1.msra.mxu0 0.0
    %2342 = vmatprep.subr.mxu0 0.0
    %2343 = vmatpush1.msra.mxu0 0.0
    %2344 = vmatprep.subr.mxu0 0.0
    %2345 = vmatpush1.msra.mxu0 0.0
    %2346 = vmatprep.subr.mxu0 0.0
    %2347 = vmatpush1.msra.mxu0 0.0
    %2348 = vmatprep.subr.mxu0 0.0
    %2349 = vmatpush1.msra.mxu0 0.0
    %2350 = vmatprep.subr.mxu0 0.0
    %2351 = vmatpush1.msra.mxu0 %v2322
    %2352 = vmatprep.subr.mxu0 0.0
    %2353 = vmatpush1.msra.mxu0 %v2308
    %2354 = vmatprep.subr.mxu0 0.0
    %2355 = vmatpush1.msra.mxu0 %v2306
    %2356 = vmatprep.subr.mxu0 0.0
    %2357 = vmatpush2.msra.mxu0 0.0
    %2358 = vmatprep.subr.mxu0 0.0
    %2359 = vmatpush2.msra.mxu0 0.0
    %2360 = vmatprep.subr.mxu0 0.0
    %2361 = vmatpush2.msra.mxu0 0.0
    %2362 = vmatprep.subr.mxu0 0.0
    %2363 = vmatpush2.msra.mxu0 0.0
    %2364 = vmatprep.subr.mxu0 0.0
    %2365 = vmatpush2.msra.mxu0 0.0
    %2366 = vmatprep.subr.mxu0 0.0
    %2367 = vmatpush2.msra.mxu0 0.0
    %2368 = vmatprep.subr.mxu0 0.0
    %2369 = vmatpush2.msra.mxu0 0.0
    %2370 = vmatprep.subr.mxu0 0.0
    %2371 = vmatpush2.msra.mxu0 0.0
    %2372 = vmatprep.subr.mxu0 0.0
    %2373 = vmatpush2.msra.mxu0 0.0
    %2374 = vmatprep.subr.mxu0 0.0
    %2375 = vmatpush2.msra.mxu0 0.0
    %2376 = vmatprep.subr.mxu0 0.0
    %2377 = vmatpush2.msra.mxu0 0.0
    %2378 = vmatprep.subr.mxu0 0.0
    %2379 = vmatpush2.msra.mxu0 0.0
    %2380 = vmatprep.subr.mxu0 0.0
    %2381 = vmatpush2.msra.mxu0 0.0
    %2382 = vmatprep.subr.mxu0 0.0
    %2383 = vmatpush2.msra.mxu0 0.0
    %2384 = vmatprep.subr.mxu0 0.0
    %2385 = vmatpush2.msra.mxu0 0.0
    %2386 = vmatprep.subr.mxu0 0.0
    %2387 = vmatpush2.msra.mxu0 0.0
    %2388 = vmatprep.mubr.f32.mxu0 0.0
    %2389 = vmatmul.mubr.f32.gmra.mxu0 %v2314
    %v2390 = vpop.f32.mrf.mxu0
    %v2391 = vadd.f32 0.0, %v2390
    %v2392 = vpop.f32.mrf.mxu0
    %2393 = vmatprep.mubr.f32.mxu0 0.0
    %2394 = vmatmul.mubr.f32.gmra.mxu0 %v2317
    %v2395 = vpop.f32.mrf.mxu0
    %v2396 = vadd.f32 0.0, %v2395
    %v2397 = vpop.f32.mrf.mxu0
    %2398 = vmatprep.mubr.f32.mxu0 0.0
    %2399 = vmatmul.mubr.f32.gmra.mxu0 %v2320
    %v2400 = vpop.f32.mrf.mxu0
    %v2401 = vadd.f32 0.0, %v2400
    %v2402 = vpop.f32.mrf.mxu0
    %2403 = vdwg.mxu0
    %v2405 = vsel %vm625, %v2391, 0
    %v2408 = vsel %vm625, %v2396, 0
    %v2411 = vsel %vm625, %v2401, 0
    %2413 = vmatprep.subr.mxu0 0.0
    %2414 = vmatpush1.msra.mxu0 0.0
    %2415 = vmatprep.subr.mxu0 0.0
    %2416 = vmatpush1.msra.mxu0 0.0
    %2417 = vmatprep.subr.mxu0 0.0
    %2418 = vmatpush1.msra.mxu0 0.0
    %2419 = vmatprep.subr.mxu0 0.0
    %2420 = vmatpush1.msra.mxu0 0.0
    %2421 = vmatprep.subr.mxu0 0.0
    %2422 = vmatpush1.msra.mxu0 0.0
    %2423 = vmatprep.subr.mxu0 0.0
    %2424 = vmatpush1.msra.mxu0 0.0
    %2425 = vmatprep.subr.mxu0 0.0
    %2426 = vmatpush1.msra.mxu0 0.0
    %2427 = vmatprep.subr.mxu0 0.0
    %2428 = vmatpush1.msra.mxu0 0.0
    %2429 = vmatprep.subr.mxu0 0.0
    %2430 = vmatpush1.msra.mxu0 0.0
    %2431 = vmatprep.subr.mxu0 0.0
    %2432 = vmatpush1.msra.mxu0 0.0
    %2433 = vmatprep.subr.mxu0 0.0
    %2434 = vmatpush1.msra.mxu0 0.0
    %2435 = vmatprep.subr.mxu0 0.0
    %2436 = vmatpush1.msra.mxu0 0.0
    %2437 = vmatprep.subr.mxu0 0.0
    %2438 = vmatpush1.msra.mxu0 0.0
    %2439 = vmatprep.subr.mxu0 0.0
    %2440 = vmatpush1.msra.mxu0 0.0
    %2441 = vmatprep.subr.mxu0 0.0
    %2442 = vmatpush1.msra.mxu0 %v56
    %2443 = vmatprep.subr.mxu0 0.0
    %2444 = vmatpush1.msra.mxu0 %v55
    %2445 = vmatprep.subr.mxu0 0.0
    %2446 = vmatpush2.msra.mxu0 0.0
    %2447 = vmatprep.subr.mxu0 0.0
    %2448 = vmatpush2.msra.mxu0 0.0
    %2449 = vmatprep.subr.mxu0 0.0
    %2450 = vmatpush2.msra.mxu0 0.0
    %2451 = vmatprep.subr.mxu0 0.0
    %2452 = vmatpush2.msra.mxu0 0.0
    %2453 = vmatprep.subr.mxu0 0.0
    %2454 = vmatpush2.msra.mxu0 0.0
    %2455 = vmatprep.subr.mxu0 0.0
    %2456 = vmatpush2.msra.mxu0 0.0
    %2457 = vmatprep.subr.mxu0 0.0
    %2458 = vmatpush2.msra.mxu0 0.0
    %2459 = vmatprep.subr.mxu0 0.0
    %2460 = vmatpush2.msra.mxu0 0.0
    %2461 = vmatprep.subr.mxu0 0.0
    %2462 = vmatpush2.msra.mxu0 0.0
    %2463 = vmatprep.subr.mxu0 0.0
    %2464 = vmatpush2.msra.mxu0 0.0
    %2465 = vmatprep.subr.mxu0 0.0
    %2466 = vmatpush2.msra.mxu0 0.0
    %2467 = vmatprep.subr.mxu0 0.0
    %2468 = vmatpush2.msra.mxu0 0.0
    %2469 = vmatprep.subr.mxu0 0.0
    %2470 = vmatpush2.msra.mxu0 0.0
    %2471 = vmatprep.subr.mxu0 0.0
    %2472 = vmatpush2.msra.mxu0 0.0
    %2473 = vmatprep.subr.mxu0 0.0
    %2474 = vmatpush2.msra.mxu0 0.0
    %2475 = vmatprep.subr.mxu0 0.0
    %2476 = vmatpush2.msra.mxu0 0.0
    %2477 = vmatprep.mubr.f32.mxu0 0.0
    %2478 = vmatmul.mubr.f32.gmra.mxu0 %v2405
    %v2479 = vpop.f32.mrf.mxu0
    %v2480 = vadd.f32 0.0, %v2479
    %v2481 = vpop.f32.mrf.mxu0
    %2482 = vmatprep.mubr.f32.mxu0 0.0
    %2483 = vmatmul.mubr.f32.gmra.mxu0 %v2408
    %v2484 = vpop.f32.mrf.mxu0
    %v2485 = vadd.f32 0.0, %v2484
    %v2486 = vpop.f32.mrf.mxu0
    %2487 = vmatprep.mubr.f32.mxu0 0.0
    %2488 = vmatmul.mubr.f32.gmra.mxu0 %v2411
    %v2489 = vpop.f32.mrf.mxu0
    %v2490 = vadd.f32 0.0, %v2489
    %v2491 = vpop.f32.mrf.mxu0
    %2492 = vdwg.mxu0
    %v2494 = vsel %vm625, %v2152, 0
    %v2497 = vsel %vm625, %v2157, 0
    %v2500 = vsel %vm625, %v2162, 0
    %2502 = vmatprep.subr.mxu0 0.0
    %2503 = vmatpush1.msra.mxu0 0.0
    %2504 = vmatprep.subr.mxu0 0.0
    %2505 = vmatpush1.msra.mxu0 0.0
    %2506 = vmatprep.subr.mxu0 0.0
    %2507 = vmatpush1.msra.mxu0 0.0
    %2508 = vmatprep.subr.mxu0 0.0
    %2509 = vmatpush1.msra.mxu0 0.0
    %2510 = vmatprep.subr.mxu0 0.0
    %2511 = vmatpush1.msra.mxu0 0.0
    %2512 = vmatprep.subr.mxu0 0.0
    %2513 = vmatpush1.msra.mxu0 0.0
    %2514 = vmatprep.subr.mxu0 0.0
    %2515 = vmatpush1.msra.mxu0 0.0
    %2516 = vmatprep.subr.mxu0 0.0
    %2517 = vmatpush1.msra.mxu0 0.0
    %2518 = vmatprep.subr.mxu0 0.0
    %2519 = vmatpush1.msra.mxu0 0.0
    %2520 = vmatprep.subr.mxu0 0.0
    %2521 = vmatpush1.msra.mxu0 0.0
    %2522 = vmatprep.subr.mxu0 0.0
    %2523 = vmatpush1.msra.mxu0 0.0
    %2524 = vmatprep.subr.mxu0 0.0
    %2525 = vmatpush1.msra.mxu0 0.0
    %2526 = vmatprep.subr.mxu0 0.0
    %2527 = vmatpush1.msra.mxu0 0.0
    %2528 = vmatprep.subr.mxu0 0.0
    %2529 = vmatpush1.msra.mxu0 0.0
    %2530 = vmatprep.subr.mxu0 0.0
    %2531 = vmatpush1.msra.mxu0 %v54
    %2532 = vmatprep.subr.mxu0 0.0
    %2533 = vmatpush1.msra.mxu0 %v53
    %2534 = vmatprep.subr.mxu0 0.0
    %2535 = vmatpush2.msra.mxu0 0.0
    %2536 = vmatprep.subr.mxu0 0.0
    %2537 = vmatpush2.msra.mxu0 0.0
    %2538 = vmatprep.subr.mxu0 0.0
    %2539 = vmatpush2.msra.mxu0 0.0
    %2540 = vmatprep.subr.mxu0 0.0
    %2541 = vmatpush2.msra.mxu0 0.0
    %2542 = vmatprep.subr.mxu0 0.0
    %2543 = vmatpush2.msra.mxu0 0.0
    %2544 = vmatprep.subr.mxu0 0.0
    %2545 = vmatpush2.msra.mxu0 0.0
    %2546 = vmatprep.subr.mxu0 0.0
    %2547 = vmatpush2.msra.mxu0 0.0
    %2548 = vmatprep.subr.mxu0 0.0
    %2549 = vmatpush2.msra.mxu0 0.0
    %2550 = vmatprep.subr.mxu0 0.0
    %2551 = vmatpush2.msra.mxu0 0.0
    %2552 = vmatprep.subr.mxu0 0.0
    %2553 = vmatpush2.msra.mxu0 0.0
    %2554 = vmatprep.subr.mxu0 0.0
    %2555 = vmatpush2.msra.mxu0 0.0
    %2556 = vmatprep.subr.mxu0 0.0
    %2557 = vmatpush2.msra.mxu0 0.0
    %2558 = vmatprep.subr.mxu0 0.0
    %2559 = vmatpush2.msra.mxu0 0.0
    %2560 = vmatprep.subr.mxu0 0.0
    %2561 = vmatpush2.msra.mxu0 0.0
    %2562 = vmatprep.subr.mxu0 0.0
    %2563 = vmatpush2.msra.mxu0 0.0
    %2564 = vmatprep.subr.mxu0 0.0
    %2565 = vmatpush2.msra.mxu0 0.0
    %2566 = vmatprep.mubr.f32.mxu0 0.0
    %2567 = vmatmul.mubr.f32.gmra.mxu0 %v2494
    %v2568 = vpop.f32.mrf.mxu0
    %v2569 = vadd.f32 %v2480, %v2568
    %v2570 = vpop.f32.mrf.mxu0
    %2571 = vmatprep.mubr.f32.mxu0 0.0
    %2572 = vmatmul.mubr.f32.gmra.mxu0 %v2497
    %v2573 = vpop.f32.mrf.mxu0
    %v2574 = vadd.f32 %v2485, %v2573
    %v2575 = vpop.f32.mrf.mxu0
    %2576 = vmatprep.mubr.f32.mxu0 0.0
    %2577 = vmatmul.mubr.f32.gmra.mxu0 %v2500
    %v2578 = vpop.f32.mrf.mxu0
    %v2579 = vadd.f32 %v2490, %v2578
    %v2580 = vpop.f32.mrf.mxu0
    %2581 = vdwg.mxu0
    %v2582 = vlaneseq
    %v2583 = vshrl.u32 %v2582, 7
    %v2584 = vsub.s32 6, %v2583
    %v2585 = vrot.slane %v37, %v2584
    %v2586 = vadd.f32 %v2569, %v2585
    %v2587 = vadd.f32 %v2574, %v2585
    %v2588 = vadd.f32 %v2579, %v2585
    %2589 = vrot.lane.b32.xlu0 %v1279, 32
    %v2590 = vpop.permute.xlu0 %2589
    %2591 = vrot.lane.b32.xlu0 %v1281, 32
    %v2592 = vpop.permute.xlu0 %2591
    %2593 = vrot.lane.b32.xlu0 %v1280, 32
    %v2594 = vpop.permute.xlu0 %2593
    %v2597 = vrot.slane %v599, 1
    %v2598 = vrot.slane %v605, 1
    %v2599 = vsel %vm1276, %v2597, %v2598
    %v2600 = vrot.slane %v611, 1
    %v2601 = vsel %vm1276, %v2598, %v2600
    %v2602 = vsel %vm625, %v2590, 0
    %v2604 = vsel %vm625, %v2592, 0
    %v2606 = vsel %vm625, %v2594, 0
    %v2608 = vsel %vm625, %v2599, 0
    %v2610 = vsel %vm625, %v2601, 0
    %v2612 = vsel %vm625, %v2600, 0
    %2614 = vmatprep.subr.mxu0 0.0
    %2615 = vmatpush1.xpose.msra.mxu0 0.0
    %2616 = vmatprep.subr.mxu0 0.0
    %2617 = vmatpush1.xpose.msra.mxu0 0.0
    %2618 = vmatprep.subr.mxu0 0.0
    %2619 = vmatpush1.xpose.msra.mxu0 0.0
    %2620 = vmatprep.subr.mxu0 0.0
    %2621 = vmatpush1.xpose.msra.mxu0 0.0
    %2622 = vmatprep.subr.mxu0 0.0
    %2623 = vmatpush1.xpose.msra.mxu0 0.0
    %2624 = vmatprep.subr.mxu0 0.0
    %2625 = vmatpush1.xpose.msra.mxu0 0.0
    %2626 = vmatprep.subr.mxu0 0.0
    %2627 = vmatpush1.xpose.msra.mxu0 0.0
    %2628 = vmatprep.subr.mxu0 0.0
    %2629 = vmatpush1.xpose.msra.mxu0 0.0
    %2630 = vmatprep.subr.mxu0 0.0
    %2631 = vmatpush1.xpose.msra.mxu0 0.0
    %2632 = vmatprep.subr.mxu0 0.0
    %2633 = vmatpush1.xpose.msra.mxu0 0.0
    %2634 = vmatprep.subr.mxu0 0.0
    %2635 = vmatpush1.xpose.msra.mxu0 0.0
    %2636 = vmatprep.subr.mxu0 0.0
    %2637 = vmatpush1.xpose.msra.mxu0 0.0
    %2638 = vmatprep.subr.mxu0 0.0
    %2639 = vmatpush1.xpose.msra.mxu0 0.0
    %2640 = vmatprep.subr.mxu0 0.0
    %2641 = vmatpush1.xpose.msra.mxu0 %v2612
    %2642 = vmatprep.subr.mxu0 0.0
    %2643 = vmatpush1.xpose.msra.mxu0 %v2610
    %2644 = vmatprep.subr.mxu0 0.0
    %2645 = vmatpush1.xpose.msra.mxu0 %v2608
    %2646 = vmatprep.subr.mxu0 0.0
    %2647 = vmatpush2.xpose.msra.mxu0 0.0
    %2648 = vmatprep.subr.mxu0 0.0
    %2649 = vmatpush2.xpose.msra.mxu0 0.0
    %2650 = vmatprep.subr.mxu0 0.0
    %2651 = vmatpush2.xpose.msra.mxu0 0.0
    %2652 = vmatprep.subr.mxu0 0.0
    %2653 = vmatpush2.xpose.msra.mxu0 0.0
    %2654 = vmatprep.subr.mxu0 0.0
    %2655 = vmatpush2.xpose.msra.mxu0 0.0
    %2656 = vmatprep.subr.mxu0 0.0
    %2657 = vmatpush2.xpose.msra.mxu0 0.0
    %2658 = vmatprep.subr.mxu0 0.0
    %2659 = vmatpush2.xpose.msra.mxu0 0.0
    %2660 = vmatprep.subr.mxu0 0.0
    %2661 = vmatpush2.xpose.msra.mxu0 0.0
    %2662 = vmatprep.subr.mxu0 0.0
    %2663 = vmatpush2.xpose.msra.mxu0 0.0
    %2664 = vmatprep.subr.mxu0 0.0
    %2665 = vmatpush2.xpose.msra.mxu0 0.0
    %2666 = vmatprep.subr.mxu0 0.0
    %2667 = vmatpush2.xpose.msra.mxu0 0.0
    %2668 = vmatprep.subr.mxu0 0.0
    %2669 = vmatpush2.xpose.msra.mxu0 0.0
    %2670 = vmatprep.subr.mxu0 0.0
    %2671 = vmatpush2.xpose.msra.mxu0 0.0
    %2672 = vmatprep.subr.mxu0 0.0
    %2673 = vmatpush2.xpose.msra.mxu0 0.0
    %2674 = vmatprep.subr.mxu0 0.0
    %2675 = vmatpush2.xpose.msra.mxu0 0.0
    %2676 = vmatprep.subr.mxu0 0.0
    %2677 = vmatpush2.xpose.msra.mxu0 0.0
    %2678 = vmatprep.mubr.f32.mxu0 0.0
    %2679 = vmatmul.mubr.f32.gmra.mxu0 %v2602
    %v2680 = vpop.f32.mrf.mxu0
    %v2681 = vadd.f32 0.0, %v2680
    %v2682 = vpop.f32.mrf.mxu0
    %2683 = vmatprep.mubr.f32.mxu0 0.0
    %2684 = vmatmul.mubr.f32.gmra.mxu0 %v2604
    %v2685 = vpop.f32.mrf.mxu0
    %v2686 = vadd.f32 0.0, %v2685
    %v2687 = vpop.f32.mrf.mxu0
    %2688 = vmatprep.mubr.f32.mxu0 0.0
    %2689 = vmatmul.mubr.f32.gmra.mxu0 %v2606
    %v2690 = vpop.f32.mrf.mxu0
    %v2691 = vadd.f32 0.0, %v2690
    %v2692 = vpop.f32.mrf.mxu0
    %2693 = vdwg.mxu0
    %v2694 = vsel %vm615, -1e+30, %v2681
    %v2695 = vsel %vm615, -1e+30, %v2686
    %v2696 = vsel %vm615, -1e+30, %v2691
    %v2697 = vsel %vm718, %v2694, -inf
    %2698 = vmax.xlane.f32.xlu0 %v2697
    %v2699 = vpop.xlane.xlu0 %2698
    %v2700 = vsel %vm718, %v2695, -inf
    %2701 = vmax.xlane.f32.xlu0 %v2700
    %v2702 = vpop.xlane.xlu0 %2701
    %v2703 = vsel %vm725, %v2696, -inf
    %2704 = vmax.xlane.f32.xlu0 %v2703
    %v2705 = vpop.xlane.xlu0 %2704
    %v2706 = vsub.f32 %v2694, %v2699
    %v2707 = vsub.f32 %v2695, %v2702
    %v2708 = vsub.f32 %v2696, %v2705
    %v2709 = vmul.f32 %v2706, 1.442695
    %v2710 = vpow.pop %v2709
    %v2711 = vmul.f32 %v2707, 1.442695
    %v2712 = vpow.pop %v2711
    %v2713 = vmul.f32 %v2708, 1.442695
    %v2714 = vpow.pop %v2713
    %v2715 = vsel %vm718, %v2710, 0.0
    %2716 = vadd.xlane.f32.xlu0 %v2715
    %v2717 = vpop.xlane.xlu0 %2716
    %v2718 = vsel %vm718, %v2712, 0.0
    %2719 = vadd.xlane.f32.xlu0 %v2718
    %v2720 = vpop.xlane.xlu0 %2719
    %v2721 = vsel %vm725, %v2714, 0.0
    %2722 = vadd.xlane.f32.xlu0 %v2721
    %v2723 = vpop.xlane.xlu0 %2722
    %v2724 = vrcp.pop %v2717
    %v2725 = vmul.f32 %v2710, %v2724
    %v2726 = vrcp.pop %v2720
    %v2727 = vmul.f32 %v2712, %v2726
    %v2728 = vrcp.pop %v2723
    %v2729 = vmul.f32 %v2714, %v2728
    %2730 = vrot.lane.b32.xlu0 %v2599, 96
    %v2731 = vpop.permute.xlu0 %2730
    %2732 = vrot.lane.b32.xlu0 %v2601, 96
    %v2733 = vpop.permute.xlu0 %2732
    %2734 = vrot.lane.b32.xlu0 %v2600, 96
    %v2735 = vpop.permute.xlu0 %2734
    %v2739 = vsel %vm718, %v2725, 0
    %v2742 = vsel %vm718, %v2727, 0
    %v2745 = vsel %vm718, %v2729, 0
    %v2747 = vsel %vm770, %v2735, 0
    %2749 = vmatprep.subr.mxu0 0.0
    %2750 = vmatpush1.msra.mxu0 0.0
    %2751 = vmatprep.subr.mxu0 0.0
    %2752 = vmatpush1.msra.mxu0 0.0
    %2753 = vmatprep.subr.mxu0 0.0
    %2754 = vmatpush1.msra.mxu0 0.0
    %2755 = vmatprep.subr.mxu0 0.0
    %2756 = vmatpush1.msra.mxu0 0.0
    %2757 = vmatprep.subr.mxu0 0.0
    %2758 = vmatpush1.msra.mxu0 0.0
    %2759 = vmatprep.subr.mxu0 0.0
    %2760 = vmatpush1.msra.mxu0 0.0
    %2761 = vmatprep.subr.mxu0 0.0
    %2762 = vmatpush1.msra.mxu0 0.0
    %2763 = vmatprep.subr.mxu0 0.0
    %2764 = vmatpush1.msra.mxu0 0.0
    %2765 = vmatprep.subr.mxu0 0.0
    %2766 = vmatpush1.msra.mxu0 0.0
    %2767 = vmatprep.subr.mxu0 0.0
    %2768 = vmatpush1.msra.mxu0 0.0
    %2769 = vmatprep.subr.mxu0 0.0
    %2770 = vmatpush1.msra.mxu0 0.0
    %2771 = vmatprep.subr.mxu0 0.0
    %2772 = vmatpush1.msra.mxu0 0.0
    %2773 = vmatprep.subr.mxu0 0.0
    %2774 = vmatpush1.msra.mxu0 0.0
    %2775 = vmatprep.subr.mxu0 0.0
    %2776 = vmatpush1.msra.mxu0 %v2747
    %2777 = vmatprep.subr.mxu0 0.0
    %2778 = vmatpush1.msra.mxu0 %v2733
    %2779 = vmatprep.subr.mxu0 0.0
    %2780 = vmatpush1.msra.mxu0 %v2731
    %2781 = vmatprep.subr.mxu0 0.0
    %2782 = vmatpush2.msra.mxu0 0.0
    %2783 = vmatprep.subr.mxu0 0.0
    %2784 = vmatpush2.msra.mxu0 0.0
    %2785 = vmatprep.subr.mxu0 0.0
    %2786 = vmatpush2.msra.mxu0 0.0
    %2787 = vmatprep.subr.mxu0 0.0
    %2788 = vmatpush2.msra.mxu0 0.0
    %2789 = vmatprep.subr.mxu0 0.0
    %2790 = vmatpush2.msra.mxu0 0.0
    %2791 = vmatprep.subr.mxu0 0.0
    %2792 = vmatpush2.msra.mxu0 0.0
    %2793 = vmatprep.subr.mxu0 0.0
    %2794 = vmatpush2.msra.mxu0 0.0
    %2795 = vmatprep.subr.mxu0 0.0
    %2796 = vmatpush2.msra.mxu0 0.0
    %2797 = vmatprep.subr.mxu0 0.0
    %2798 = vmatpush2.msra.mxu0 0.0
    %2799 = vmatprep.subr.mxu0 0.0
    %2800 = vmatpush2.msra.mxu0 0.0
    %2801 = vmatprep.subr.mxu0 0.0
    %2802 = vmatpush2.msra.mxu0 0.0
    %2803 = vmatprep.subr.mxu0 0.0
    %2804 = vmatpush2.msra.mxu0 0.0
    %2805 = vmatprep.subr.mxu0 0.0
    %2806 = vmatpush2.msra.mxu0 0.0
    %2807 = vmatprep.subr.mxu0 0.0
    %2808 = vmatpush2.msra.mxu0 0.0
    %2809 = vmatprep.subr.mxu0 0.0
    %2810 = vmatpush2.msra.mxu0 0.0
    %2811 = vmatprep.subr.mxu0 0.0
    %2812 = vmatpush2.msra.mxu0 0.0
    %2813 = vmatprep.mubr.f32.mxu0 0.0
    %2814 = vmatmul.mubr.f32.gmra.mxu0 %v2739
    %v2815 = vpop.f32.mrf.mxu0
    %v2816 = vadd.f32 0.0, %v2815
    %v2817 = vpop.f32.mrf.mxu0
    %2818 = vmatprep.mubr.f32.mxu0 0.0
    %2819 = vmatmul.mubr.f32.gmra.mxu0 %v2742
    %v2820 = vpop.f32.mrf.mxu0
    %v2821 = vadd.f32 0.0, %v2820
    %v2822 = vpop.f32.mrf.mxu0
    %2823 = vmatprep.mubr.f32.mxu0 0.0
    %2824 = vmatmul.mubr.f32.gmra.mxu0 %v2745
    %v2825 = vpop.f32.mrf.mxu0
    %v2826 = vadd.f32 0.0, %v2825
    %v2827 = vpop.f32.mrf.mxu0
    %2828 = vdwg.mxu0
    %2829 = vrot.lane.b32.xlu0 %v1279, 16
    %v2830 = vpop.permute.xlu0 %2829
    %2831 = vrot.lane.b32.xlu0 %v1281, 16
    %v2832 = vpop.permute.xlu0 %2831
    %2833 = vrot.lane.b32.xlu0 %v1280, 16
    %v2834 = vpop.permute.xlu0 %2833
    %2835 = vrot.lane.b32.xlu0 %v2599, 112
    %v2836 = vpop.permute.xlu0 %2835
    %2837 = vrot.lane.b32.xlu0 %v2601, 112
    %v2838 = vpop.permute.xlu0 %2837
    %2839 = vrot.lane.b32.xlu0 %v2600, 112
    %v2840 = vpop.permute.xlu0 %2839
    %v2841 = vsel %vm625, %v2830, 0
    %v2843 = vsel %vm625, %v2832, 0
    %v2845 = vsel %vm625, %v2834, 0
    %v2847 = vsel %vm625, %v2836, 0
    %v2849 = vsel %vm625, %v2838, 0
    %v2851 = vsel %vm625, %v2840, 0
    %2853 = vmatprep.subr.mxu0 0.0
    %2854 = vmatpush1.xpose.msra.mxu0 0.0
    %2855 = vmatprep.subr.mxu0 0.0
    %2856 = vmatpush1.xpose.msra.mxu0 0.0
    %2857 = vmatprep.subr.mxu0 0.0
    %2858 = vmatpush1.xpose.msra.mxu0 0.0
    %2859 = vmatprep.subr.mxu0 0.0
    %2860 = vmatpush1.xpose.msra.mxu0 0.0
    %2861 = vmatprep.subr.mxu0 0.0
    %2862 = vmatpush1.xpose.msra.mxu0 0.0
    %2863 = vmatprep.subr.mxu0 0.0
    %2864 = vmatpush1.xpose.msra.mxu0 0.0
    %2865 = vmatprep.subr.mxu0 0.0
    %2866 = vmatpush1.xpose.msra.mxu0 0.0
    %2867 = vmatprep.subr.mxu0 0.0
    %2868 = vmatpush1.xpose.msra.mxu0 0.0
    %2869 = vmatprep.subr.mxu0 0.0
    %2870 = vmatpush1.xpose.msra.mxu0 0.0
    %2871 = vmatprep.subr.mxu0 0.0
    %2872 = vmatpush1.xpose.msra.mxu0 0.0
    %2873 = vmatprep.subr.mxu0 0.0
    %2874 = vmatpush1.xpose.msra.mxu0 0.0
    %2875 = vmatprep.subr.mxu0 0.0
    %2876 = vmatpush1.xpose.msra.mxu0 0.0
    %2877 = vmatprep.subr.mxu0 0.0
    %2878 = vmatpush1.xpose.msra.mxu0 0.0
    %2879 = vmatprep.subr.mxu0 0.0
    %2880 = vmatpush1.xpose.msra.mxu0 %v2851
    %2881 = vmatprep.subr.mxu0 0.0
    %2882 = vmatpush1.xpose.msra.mxu0 %v2849
    %2883 = vmatprep.subr.mxu0 0.0
    %2884 = vmatpush1.xpose.msra.mxu0 %v2847
    %2885 = vmatprep.subr.mxu0 0.0
    %2886 = vmatpush2.xpose.msra.mxu0 0.0
    %2887 = vmatprep.subr.mxu0 0.0
    %2888 = vmatpush2.xpose.msra.mxu0 0.0
    %2889 = vmatprep.subr.mxu0 0.0
    %2890 = vmatpush2.xpose.msra.mxu0 0.0
    %2891 = vmatprep.subr.mxu0 0.0
    %2892 = vmatpush2.xpose.msra.mxu0 0.0
    %2893 = vmatprep.subr.mxu0 0.0
    %2894 = vmatpush2.xpose.msra.mxu0 0.0
    %2895 = vmatprep.subr.mxu0 0.0
    %2896 = vmatpush2.xpose.msra.mxu0 0.0
    %2897 = vmatprep.subr.mxu0 0.0
    %2898 = vmatpush2.xpose.msra.mxu0 0.0
    %2899 = vmatprep.subr.mxu0 0.0
    %2900 = vmatpush2.xpose.msra.mxu0 0.0
    %2901 = vmatprep.subr.mxu0 0.0
    %2902 = vmatpush2.xpose.msra.mxu0 0.0
    %2903 = vmatprep.subr.mxu0 0.0
    %2904 = vmatpush2.xpose.msra.mxu0 0.0
    %2905 = vmatprep.subr.mxu0 0.0
    %2906 = vmatpush2.xpose.msra.mxu0 0.0
    %2907 = vmatprep.subr.mxu0 0.0
    %2908 = vmatpush2.xpose.msra.mxu0 0.0
    %2909 = vmatprep.subr.mxu0 0.0
    %2910 = vmatpush2.xpose.msra.mxu0 0.0
    %2911 = vmatprep.subr.mxu0 0.0
    %2912 = vmatpush2.xpose.msra.mxu0 0.0
    %2913 = vmatprep.subr.mxu0 0.0
    %2914 = vmatpush2.xpose.msra.mxu0 0.0
    %2915 = vmatprep.subr.mxu0 0.0
    %2916 = vmatpush2.xpose.msra.mxu0 0.0
    %2917 = vmatprep.mubr.f32.mxu0 0.0
    %2918 = vmatmul.mubr.f32.gmra.mxu0 %v2841
    %v2919 = vpop.f32.mrf.mxu0
    %v2920 = vadd.f32 0.0, %v2919
    %v2921 = vpop.f32.mrf.mxu0
    %2922 = vmatprep.mubr.f32.mxu0 0.0
    %2923 = vmatmul.mubr.f32.gmra.mxu0 %v2843
    %v2924 = vpop.f32.mrf.mxu0
    %v2925 = vadd.f32 0.0, %v2924
    %v2926 = vpop.f32.mrf.mxu0
    %2927 = vmatprep.mubr.f32.mxu0 0.0
    %2928 = vmatmul.mubr.f32.gmra.mxu0 %v2845
    %v2929 = vpop.f32.mrf.mxu0
    %v2930 = vadd.f32 0.0, %v2929
    %v2931 = vpop.f32.mrf.mxu0
    %2932 = vdwg.mxu0
    %v2933 = vsel %vm615, -1e+30, %v2920
    %v2934 = vsel %vm615, -1e+30, %v2925
    %v2935 = vsel %vm615, -1e+30, %v2930
    %v2936 = vsel %vm718, %v2933, -inf
    %2937 = vmax.xlane.f32.xlu0 %v2936
    %v2938 = vpop.xlane.xlu0 %2937
    %v2939 = vsel %vm718, %v2934, -inf
    %2940 = vmax.xlane.f32.xlu0 %v2939
    %v2941 = vpop.xlane.xlu0 %2940
    %v2942 = vsel %vm725, %v2935, -inf
    %2943 = vmax.xlane.f32.xlu0 %v2942
    %v2944 = vpop.xlane.xlu0 %2943
    %v2945 = vsub.f32 %v2933, %v2938
    %v2946 = vsub.f32 %v2934, %v2941
    %v2947 = vsub.f32 %v2935, %v2944
    %v2948 = vmul.f32 %v2945, 1.442695
    %v2949 = vpow.pop %v2948
    %v2950 = vmul.f32 %v2946, 1.442695
    %v2951 = vpow.pop %v2950
    %v2952 = vmul.f32 %v2947, 1.442695
    %v2953 = vpow.pop %v2952
    %v2954 = vsel %vm718, %v2949, 0.0
    %2955 = vadd.xlane.f32.xlu0 %v2954
    %v2956 = vpop.xlane.xlu0 %2955
    %v2957 = vsel %vm718, %v2951, 0.0
    %2958 = vadd.xlane.f32.xlu0 %v2957
    %v2959 = vpop.xlane.xlu0 %2958
    %v2960 = vsel %vm725, %v2953, 0.0
    %2961 = vadd.xlane.f32.xlu0 %v2960
    %v2962 = vpop.xlane.xlu0 %2961
    %v2963 = vrcp.pop %v2956
    %v2964 = vmul.f32 %v2949, %v2963
    %v2965 = vrcp.pop %v2959
    %v2966 = vmul.f32 %v2951, %v2965
    %v2967 = vrcp.pop %v2962
    %v2968 = vmul.f32 %v2953, %v2967
    %2969 = vrot.lane.b32.xlu0 %v2599, 80
    %v2970 = vpop.permute.xlu0 %2969
    %2971 = vrot.lane.b32.xlu0 %v2601, 80
    %v2972 = vpop.permute.xlu0 %2971
    %2973 = vrot.lane.b32.xlu0 %v2600, 80
    %v2974 = vpop.permute.xlu0 %2973
    %v2978 = vsel %vm718, %v2964, 0
    %v2981 = vsel %vm718, %v2966, 0
    %v2984 = vsel %vm718, %v2968, 0
    %v2986 = vsel %vm770, %v2974, 0
    %2988 = vmatprep.subr.mxu0 0.0
    %2989 = vmatpush1.msra.mxu0 0.0
    %2990 = vmatprep.subr.mxu0 0.0
    %2991 = vmatpush1.msra.mxu0 0.0
    %2992 = vmatprep.subr.mxu0 0.0
    %2993 = vmatpush1.msra.mxu0 0.0
    %2994 = vmatprep.subr.mxu0 0.0
    %2995 = vmatpush1.msra.mxu0 0.0
    %2996 = vmatprep.subr.mxu0 0.0
    %2997 = vmatpush1.msra.mxu0 0.0
    %2998 = vmatprep.subr.mxu0 0.0
    %2999 = vmatpush1.msra.mxu0 0.0
    %3000 = vmatprep.subr.mxu0 0.0
    %3001 = vmatpush1.msra.mxu0 0.0
    %3002 = vmatprep.subr.mxu0 0.0
    %3003 = vmatpush1.msra.mxu0 0.0
    %3004 = vmatprep.subr.mxu0 0.0
    %3005 = vmatpush1.msra.mxu0 0.0
    %3006 = vmatprep.subr.mxu0 0.0
    %3007 = vmatpush1.msra.mxu0 0.0
    %3008 = vmatprep.subr.mxu0 0.0
    %3009 = vmatpush1.msra.mxu0 0.0
    %3010 = vmatprep.subr.mxu0 0.0
    %3011 = vmatpush1.msra.mxu0 0.0
    %3012 = vmatprep.subr.mxu0 0.0
    %3013 = vmatpush1.msra.mxu0 0.0
    %3014 = vmatprep.subr.mxu0 0.0
    %3015 = vmatpush1.msra.mxu0 %v2986
    %3016 = vmatprep.subr.mxu0 0.0
    %3017 = vmatpush1.msra.mxu0 %v2972
    %3018 = vmatprep.subr.mxu0 0.0
    %3019 = vmatpush1.msra.mxu0 %v2970
    %3020 = vmatprep.subr.mxu0 0.0
    %3021 = vmatpush2.msra.mxu0 0.0
    %3022 = vmatprep.subr.mxu0 0.0
    %3023 = vmatpush2.msra.mxu0 0.0
    %3024 = vmatprep.subr.mxu0 0.0
    %3025 = vmatpush2.msra.mxu0 0.0
    %3026 = vmatprep.subr.mxu0 0.0
    %3027 = vmatpush2.msra.mxu0 0.0
    %3028 = vmatprep.subr.mxu0 0.0
    %3029 = vmatpush2.msra.mxu0 0.0
    %3030 = vmatprep.subr.mxu0 0.0
    %3031 = vmatpush2.msra.mxu0 0.0
    %3032 = vmatprep.subr.mxu0 0.0
    %3033 = vmatpush2.msra.mxu0 0.0
    %3034 = vmatprep.subr.mxu0 0.0
    %3035 = vmatpush2.msra.mxu0 0.0
    %3036 = vmatprep.subr.mxu0 0.0
    %3037 = vmatpush2.msra.mxu0 0.0
    %3038 = vmatprep.subr.mxu0 0.0
    %3039 = vmatpush2.msra.mxu0 0.0
    %3040 = vmatprep.subr.mxu0 0.0
    %3041 = vmatpush2.msra.mxu0 0.0
    %3042 = vmatprep.subr.mxu0 0.0
    %3043 = vmatpush2.msra.mxu0 0.0
    %3044 = vmatprep.subr.mxu0 0.0
    %3045 = vmatpush2.msra.mxu0 0.0
    %3046 = vmatprep.subr.mxu0 0.0
    %3047 = vmatpush2.msra.mxu0 0.0
    %3048 = vmatprep.subr.mxu0 0.0
    %3049 = vmatpush2.msra.mxu0 0.0
    %3050 = vmatprep.subr.mxu0 0.0
    %3051 = vmatpush2.msra.mxu0 0.0
    %3052 = vmatprep.mubr.f32.mxu0 0.0
    %3053 = vmatmul.mubr.f32.gmra.mxu0 %v2978
    %v3054 = vpop.f32.mrf.mxu0
    %v3055 = vadd.f32 0.0, %v3054
    %v3056 = vpop.f32.mrf.mxu0
    %3057 = vmatprep.mubr.f32.mxu0 0.0
    %3058 = vmatmul.mubr.f32.gmra.mxu0 %v2981
    %v3059 = vpop.f32.mrf.mxu0
    %v3060 = vadd.f32 0.0, %v3059
    %v3061 = vpop.f32.mrf.mxu0
    %3062 = vmatprep.mubr.f32.mxu0 0.0
    %3063 = vmatmul.mubr.f32.gmra.mxu0 %v2984
    %v3064 = vpop.f32.mrf.mxu0
    %v3065 = vadd.f32 0.0, %v3064
    %v3066 = vpop.f32.mrf.mxu0
    %3067 = vdwg.mxu0
    %v3069 = vsel %vm625, %v3055, 0
    %v3072 = vsel %vm625, %v3060, 0
    %v3075 = vsel %vm625, %v3065, 0
    %3077 = vmatprep.subr.mxu0 0.0
    %3078 = vmatpush1.msra.mxu0 0.0
    %3079 = vmatprep.subr.mxu0 0.0
    %3080 = vmatpush1.msra.mxu0 0.0
    %3081 = vmatprep.subr.mxu0 0.0
    %3082 = vmatpush1.msra.mxu0 0.0
    %3083 = vmatprep.subr.mxu0 0.0
    %3084 = vmatpush1.msra.mxu0 0.0
    %3085 = vmatprep.subr.mxu0 0.0
    %3086 = vmatpush1.msra.mxu0 0.0
    %3087 = vmatprep.subr.mxu0 0.0
    %3088 = vmatpush1.msra.mxu0 0.0
    %3089 = vmatprep.subr.mxu0 0.0
    %3090 = vmatpush1.msra.mxu0 0.0
    %3091 = vmatprep.subr.mxu0 0.0
    %3092 = vmatpush1.msra.mxu0 0.0
    %3093 = vmatprep.subr.mxu0 0.0
    %3094 = vmatpush1.msra.mxu0 0.0
    %3095 = vmatprep.subr.mxu0 0.0
    %3096 = vmatpush1.msra.mxu0 0.0
    %3097 = vmatprep.subr.mxu0 0.0
    %3098 = vmatpush1.msra.mxu0 0.0
    %3099 = vmatprep.subr.mxu0 0.0
    %3100 = vmatpush1.msra.mxu0 0.0
    %3101 = vmatprep.subr.mxu0 0.0
    %3102 = vmatpush1.msra.mxu0 0.0
    %3103 = vmatprep.subr.mxu0 0.0
    %3104 = vmatpush1.msra.mxu0 0.0
    %3105 = vmatprep.subr.mxu0 0.0
    %3106 = vmatpush1.msra.mxu0 %v56
    %3107 = vmatprep.subr.mxu0 0.0
    %3108 = vmatpush1.msra.mxu0 %v55
    %3109 = vmatprep.subr.mxu0 0.0
    %3110 = vmatpush2.msra.mxu0 0.0
    %3111 = vmatprep.subr.mxu0 0.0
    %3112 = vmatpush2.msra.mxu0 0.0
    %3113 = vmatprep.subr.mxu0 0.0
    %3114 = vmatpush2.msra.mxu0 0.0
    %3115 = vmatprep.subr.mxu0 0.0
    %3116 = vmatpush2.msra.mxu0 0.0
    %3117 = vmatprep.subr.mxu0 0.0
    %3118 = vmatpush2.msra.mxu0 0.0
    %3119 = vmatprep.subr.mxu0 0.0
    %3120 = vmatpush2.msra.mxu0 0.0
    %3121 = vmatprep.subr.mxu0 0.0
    %3122 = vmatpush2.msra.mxu0 0.0
    %3123 = vmatprep.subr.mxu0 0.0
    %3124 = vmatpush2.msra.mxu0 0.0
    %3125 = vmatprep.subr.mxu0 0.0
    %3126 = vmatpush2.msra.mxu0 0.0
    %3127 = vmatprep.subr.mxu0 0.0
    %3128 = vmatpush2.msra.mxu0 0.0
    %3129 = vmatprep.subr.mxu0 0.0
    %3130 = vmatpush2.msra.mxu0 0.0
    %3131 = vmatprep.subr.mxu0 0.0
    %3132 = vmatpush2.msra.mxu0 0.0
    %3133 = vmatprep.subr.mxu0 0.0
    %3134 = vmatpush2.msra.mxu0 0.0
    %3135 = vmatprep.subr.mxu0 0.0
    %3136 = vmatpush2.msra.mxu0 0.0
    %3137 = vmatprep.subr.mxu0 0.0
    %3138 = vmatpush2.msra.mxu0 0.0
    %3139 = vmatprep.subr.mxu0 0.0
    %3140 = vmatpush2.msra.mxu0 0.0
    %3141 = vmatprep.mubr.f32.mxu0 0.0
    %3142 = vmatmul.mubr.f32.gmra.mxu0 %v3069
    %v3143 = vpop.f32.mrf.mxu0
    %v3144 = vadd.f32 0.0, %v3143
    %v3145 = vpop.f32.mrf.mxu0
    %3146 = vmatprep.mubr.f32.mxu0 0.0
    %3147 = vmatmul.mubr.f32.gmra.mxu0 %v3072
    %v3148 = vpop.f32.mrf.mxu0
    %v3149 = vadd.f32 0.0, %v3148
    %v3150 = vpop.f32.mrf.mxu0
    %3151 = vmatprep.mubr.f32.mxu0 0.0
    %3152 = vmatmul.mubr.f32.gmra.mxu0 %v3075
    %v3153 = vpop.f32.mrf.mxu0
    %v3154 = vadd.f32 0.0, %v3153
    %v3155 = vpop.f32.mrf.mxu0
    %3156 = vdwg.mxu0
    %v3158 = vsel %vm625, %v2816, 0
    %v3161 = vsel %vm625, %v2821, 0
    %v3164 = vsel %vm625, %v2826, 0
    %3166 = vmatprep.subr.mxu0 0.0
    %3167 = vmatpush1.msra.mxu0 0.0
    %3168 = vmatprep.subr.mxu0 0.0
    %3169 = vmatpush1.msra.mxu0 0.0
    %3170 = vmatprep.subr.mxu0 0.0
    %3171 = vmatpush1.msra.mxu0 0.0
    %3172 = vmatprep.subr.mxu0 0.0
    %3173 = vmatpush1.msra.mxu0 0.0
    %3174 = vmatprep.subr.mxu0 0.0
    %3175 = vmatpush1.msra.mxu0 0.0
    %3176 = vmatprep.subr.mxu0 0.0
    %3177 = vmatpush1.msra.mxu0 0.0
    %3178 = vmatprep.subr.mxu0 0.0
    %3179 = vmatpush1.msra.mxu0 0.0
    %3180 = vmatprep.subr.mxu0 0.0
    %3181 = vmatpush1.msra.mxu0 0.0
    %3182 = vmatprep.subr.mxu0 0.0
    %3183 = vmatpush1.msra.mxu0 0.0
    %3184 = vmatprep.subr.mxu0 0.0
    %3185 = vmatpush1.msra.mxu0 0.0
    %3186 = vmatprep.subr.mxu0 0.0
    %3187 = vmatpush1.msra.mxu0 0.0
    %3188 = vmatprep.subr.mxu0 0.0
    %3189 = vmatpush1.msra.mxu0 0.0
    %3190 = vmatprep.subr.mxu0 0.0
    %3191 = vmatpush1.msra.mxu0 0.0
    %3192 = vmatprep.subr.mxu0 0.0
    %3193 = vmatpush1.msra.mxu0 0.0
    %3194 = vmatprep.subr.mxu0 0.0
    %3195 = vmatpush1.msra.mxu0 %v54
    %3196 = vmatprep.subr.mxu0 0.0
    %3197 = vmatpush1.msra.mxu0 %v53
    %3198 = vmatprep.subr.mxu0 0.0
    %3199 = vmatpush2.msra.mxu0 0.0
    %3200 = vmatprep.subr.mxu0 0.0
    %3201 = vmatpush2.msra.mxu0 0.0
    %3202 = vmatprep.subr.mxu0 0.0
    %3203 = vmatpush2.msra.mxu0 0.0
    %3204 = vmatprep.subr.mxu0 0.0
    %3205 = vmatpush2.msra.mxu0 0.0
    %3206 = vmatprep.subr.mxu0 0.0
    %3207 = vmatpush2.msra.mxu0 0.0
    %3208 = vmatprep.subr.mxu0 0.0
    %3209 = vmatpush2.msra.mxu0 0.0
    %3210 = vmatprep.subr.mxu0 0.0
    %3211 = vmatpush2.msra.mxu0 0.0
    %3212 = vmatprep.subr.mxu0 0.0
    %3213 = vmatpush2.msra.mxu0 0.0
    %3214 = vmatprep.subr.mxu0 0.0
    %3215 = vmatpush2.msra.mxu0 0.0
    %3216 = vmatprep.subr.mxu0 0.0
    %3217 = vmatpush2.msra.mxu0 0.0
    %3218 = vmatprep.subr.mxu0 0.0
    %3219 = vmatpush2.msra.mxu0 0.0
    %3220 = vmatprep.subr.mxu0 0.0
    %3221 = vmatpush2.msra.mxu0 0.0
    %3222 = vmatprep.subr.mxu0 0.0
    %3223 = vmatpush2.msra.mxu0 0.0
    %3224 = vmatprep.subr.mxu0 0.0
    %3225 = vmatpush2.msra.mxu0 0.0
    %3226 = vmatprep.subr.mxu0 0.0
    %3227 = vmatpush2.msra.mxu0 0.0
    %3228 = vmatprep.subr.mxu0 0.0
    %3229 = vmatpush2.msra.mxu0 0.0
    %3230 = vmatprep.mubr.f32.mxu0 0.0
    %3231 = vmatmul.mubr.f32.gmra.mxu0 %v3158
    %v3232 = vpop.f32.mrf.mxu0
    %v3233 = vadd.f32 %v3144, %v3232
    %v3234 = vpop.f32.mrf.mxu0
    %3235 = vmatprep.mubr.f32.mxu0 0.0
    %3236 = vmatmul.mubr.f32.gmra.mxu0 %v3161
    %v3237 = vpop.f32.mrf.mxu0
    %v3238 = vadd.f32 %v3149, %v3237
    %v3239 = vpop.f32.mrf.mxu0
    %3240 = vmatprep.mubr.f32.mxu0 0.0
    %3241 = vmatmul.mubr.f32.gmra.mxu0 %v3164
    %v3242 = vpop.f32.mrf.mxu0
    %v3243 = vadd.f32 %v3154, %v3242
    %v3244 = vpop.f32.mrf.mxu0
    %3245 = vdwg.mxu0
    %v3246 = vadd.f32 %v3233, %v2585
    %v3247 = vadd.f32 %v3238, %v2585
    %v3248 = vadd.f32 %v3243, %v2585
    %vm3249 = vcmask 1041408
    %v3250 = vrot.slane %v32, 6
    %v3251 = vrot.slane %v33, 6
    %v3252 = vsel %vm3249, %v3250, %v3251
    %v3253 = vrot.slane %v34, 6
    %v3254 = vsel %vm3249, %v3251, %v3253
    %v3255 = vrot.slane %v35, 6
    %v3256 = vsel %vm3249, %v3253, %v3255
    %v3257 = vrot.slane %v36, 6
    %v3258 = vsel %vm3249, %v3255, %v3257
    %v3264 = vsel %vm3249, %v36, %v3250
    %v3268 = vrot.slane %v1926, 7
    %v3269 = vrot.slane %v1927, 7
    %v3270 = vsel %vm770, %v3268, %v3269
    %v3271 = vrot.slane %v1928, 7
    %v3272 = vsel %vm770, %v3269, %v3271
    %v3279 = vrot.slane %v2586, 6
    %v3280 = vrot.slane %v2587, 6
    %v3281 = vsel %vm3249, %v3279, %v3280
    %v3282 = vrot.slane %v2588, 6
    %v3283 = vsel %vm3249, %v3280, %v3282
    %vm3290 = vcmask 1042432
    %v3291 = vrot.slane %v3246, 5
    %v3292 = vrot.slane %v3247, 5
    %v3293 = vsel %vm3290, %v3291, %v3292
    %v3294 = vrot.slane %v3248, 5
    %v3295 = vsel %vm3290, %v3292, %v3294
    %v3299 = vsel %vm770, %v1273, %v3268
    %v3300 = vsel %vm3249, %v3272, %v3279
    %v3301 = vsel %vm3290, %v3283, %v3291
    %v3302 = vadd.f32 %v1271, %v32
    %v3303 = vadd.f32 %v1272, %v33
    %v3304 = vadd.f32 %v3299, %v34
    %v3305 = vadd.f32 %v3270, %v35
    %v3306 = vadd.f32 %v3300, %v3264
    %v3307 = vadd.f32 %v3281, %v3252
    %v3308 = vadd.f32 %v3301, %v3254
    %v3309 = vadd.f32 %v3293, %v3256
    %v3310 = vadd.f32 %v3295, %v3258
    %v3311 = vsel %vm125, %v3302, 0.0
    %3312 = vadd.xlane.f32.xlu0 %v3311
    %v3313 = vpop.xlane.xlu0 %3312
    %v3314 = vsel %vm125, %v3303, 0.0
    %3315 = vadd.xlane.f32.xlu0 %v3314
    %v3316 = vpop.xlane.xlu0 %3315
    %v3317 = vsel %vm125, %v3304, 0.0
    %3318 = vadd.xlane.f32.xlu0 %v3317
    %v3319 = vpop.xlane.xlu0 %3318
    %v3320 = vsel %vm125, %v3305, 0.0
    %3321 = vadd.xlane.f32.xlu0 %v3320
    %v3322 = vpop.xlane.xlu0 %3321
    %v3323 = vsel %vm125, %v3306, 0.0
    %3324 = vadd.xlane.f32.xlu0 %v3323
    %v3325 = vpop.xlane.xlu0 %3324
    %v3326 = vsel %vm125, %v3307, 0.0
    %3327 = vadd.xlane.f32.xlu0 %v3326
    %v3328 = vpop.xlane.xlu0 %3327
    %v3329 = vsel %vm125, %v3308, 0.0
    %3330 = vadd.xlane.f32.xlu0 %v3329
    %v3331 = vpop.xlane.xlu0 %3330
    %v3332 = vsel %vm125, %v3309, 0.0
    %3333 = vadd.xlane.f32.xlu0 %v3332
    %v3334 = vpop.xlane.xlu0 %3333
    %vm3335 = vcmask 257024
    %v3336 = vsel %vm3335, %v3310, 0.0
    %3337 = vadd.xlane.f32.xlu0 %v3336
    %v3338 = vpop.xlane.xlu0 %3337
    %v3339 = vmul.f32 %v3313, %v426
    %v3340 = vmul.f32 %v3316, %v426
    %v3341 = vmul.f32 %v3319, %v426
    %v3342 = vmul.f32 %v3322, %v426
    %v3343 = vmul.f32 %v3325, %v426
    %v3344 = vmul.f32 %v3328, %v426
    %v3345 = vmul.f32 %v3331, %v426
    %v3346 = vmul.f32 %v3334, %v426
    %v3347 = vmul.f32 %v3338, %v426
    %v3348 = vsub.f32 %v3302, %v3339
    %v3349 = vsub.f32 %v3303, %v3340
    %v3350 = vsub.f32 %v3304, %v3341
    %v3351 = vsub.f32 %v3305, %v3342
    %v3352 = vsub.f32 %v3306, %v3343
    %v3353 = vsub.f32 %v3307, %v3344
    %v3354 = vsub.f32 %v3308, %v3345
    %v3355 = vsub.f32 %v3309, %v3346
    %v3356 = vsub.f32 %v3310, %v3347
    %v3357 = vmul.f32 %v3348, %v3348
    %v3358 = vmul.f32 %v3349, %v3349
    %v3359 = vmul.f32 %v3350, %v3350
    %v3360 = vmul.f32 %v3351, %v3351
    %v3361 = vmul.f32 %v3352, %v3352
    %v3362 = vmul.f32 %v3353, %v3353
    %v3363 = vmul.f32 %v3354, %v3354
    %v3364 = vmul.f32 %v3355, %v3355
    %v3365 = vmul.f32 %v3356, %v3356
    %v3366 = vsel %vm125, %v3357, 0.0
    %3367 = vadd.xlane.f32.xlu0 %v3366
    %v3368 = vpop.xlane.xlu0 %3367
    %v3369 = vsel %vm125, %v3358, 0.0
    %3370 = vadd.xlane.f32.xlu0 %v3369
    %v3371 = vpop.xlane.xlu0 %3370
    %v3372 = vsel %vm125, %v3359, 0.0
    %3373 = vadd.xlane.f32.xlu0 %v3372
    %v3374 = vpop.xlane.xlu0 %3373
    %v3375 = vsel %vm125, %v3360, 0.0
    %3376 = vadd.xlane.f32.xlu0 %v3375
    %v3377 = vpop.xlane.xlu0 %3376
    %v3378 = vsel %vm125, %v3361, 0.0
    %3379 = vadd.xlane.f32.xlu0 %v3378
    %v3380 = vpop.xlane.xlu0 %3379
    %v3381 = vsel %vm125, %v3362, 0.0
    %3382 = vadd.xlane.f32.xlu0 %v3381
    %v3383 = vpop.xlane.xlu0 %3382
    %v3384 = vsel %vm125, %v3363, 0.0
    %3385 = vadd.xlane.f32.xlu0 %v3384
    %v3386 = vpop.xlane.xlu0 %3385
    %v3387 = vsel %vm125, %v3364, 0.0
    %3388 = vadd.xlane.f32.xlu0 %v3387
    %v3389 = vpop.xlane.xlu0 %3388
    %v3390 = vsel %vm3335, %v3365, 0.0
    %3391 = vadd.xlane.f32.xlu0 %v3390
    %v3392 = vpop.xlane.xlu0 %3391
    %v3393 = vmul.f32 %v3368, %v426
    %v3394 = vmul.f32 %v3371, %v426
    %v3395 = vmul.f32 %v3374, %v426
    %v3396 = vmul.f32 %v3377, %v426
    %v3397 = vmul.f32 %v3380, %v426
    %v3398 = vmul.f32 %v3383, %v426
    %v3399 = vmul.f32 %v3386, %v426
    %v3400 = vmul.f32 %v3389, %v426
    %v3401 = vmul.f32 %v3392, %v426
    %v3402 = vadd.f32 %v3393, 1e-12
    %v3403 = vadd.f32 %v3394, 1e-12
    %v3404 = vadd.f32 %v3395, 1e-12
    %v3405 = vadd.f32 %v3396, 1e-12
    %v3406 = vadd.f32 %v3397, 1e-12
    %v3407 = vadd.f32 %v3398, 1e-12
    %v3408 = vadd.f32 %v3399, 1e-12
    %v3409 = vadd.f32 %v3400, 1e-12
    %v3410 = vadd.f32 %v3401, 1e-12
    %v3411 = vrsqrt.pop %v3402
    %v3412 = vrsqrt.pop %v3403
    %v3413 = vrsqrt.pop %v3404
    %v3414 = vrsqrt.pop %v3405
    %v3415 = vrsqrt.pop %v3406
    %v3416 = vrsqrt.pop %v3407
    %v3417 = vrsqrt.pop %v3408
    %v3418 = vrsqrt.pop %v3409
    %v3419 = vrsqrt.pop %v3410
    %v3420 = vmul.f32 %v3348, %v3411
    %v3421 = vmul.f32 %v3349, %v3412
    %v3422 = vmul.f32 %v3350, %v3413
    %v3423 = vmul.f32 %v3351, %v3414
    %v3424 = vmul.f32 %v3352, %v3415
    %v3425 = vmul.f32 %v3353, %v3416
    %v3426 = vmul.f32 %v3354, %v3417
    %v3427 = vmul.f32 %v3355, %v3418
    %v3428 = vmul.f32 %v3356, %v3419
    %v3429 = vlaneseq
    %v3430 = vshrl.u32 %v3429, 7
    %v3431 = vsub.s32 2, %v3430
    %v3432 = vrot.slane %v37, %v3431
    %v3433 = vmul.f32 %v3420, %v3432
    %v3434 = vmul.f32 %v3421, %v3432
    %v3435 = vmul.f32 %v3422, %v3432
    %v3436 = vmul.f32 %v3423, %v3432
    %v3437 = vmul.f32 %v3424, %v3432
    %v3438 = vmul.f32 %v3425, %v3432
    %v3439 = vmul.f32 %v3426, %v3432
    %v3440 = vmul.f32 %v3427, %v3432
    %v3441 = vmul.f32 %v3428, %v3432
    %v3442 = vlaneseq
    %v3443 = vshrl.u32 %v3442, 7
    %v3444 = vsub.s32 3, %v3443
    %v3445 = vrot.slane %v37, %v3444
    %v3446 = vadd.f32 %v3433, %v3445
    %v3447 = vadd.f32 %v3434, %v3445
    %v3448 = vadd.f32 %v3435, %v3445
    %v3449 = vadd.f32 %v3436, %v3445
    %v3450 = vadd.f32 %v3437, %v3445
    %v3451 = vadd.f32 %v3438, %v3445
    %v3452 = vadd.f32 %v3439, %v3445
    %v3453 = vadd.f32 %v3440, %v3445
    %v3454 = vadd.f32 %v3441, %v3445
    %v3455 = vlaneseq
    %v3456 = vshrl.u32 %v3455, 7
    %v3457 = vsub.s32 7, %v3456
    %v3458 = vrot.slane %v37, %v3457
    %v3460 = vsel %vm125, %v3446, 0
    %v3463 = vsel %vm125, %v3447, 0
    %v3466 = vsel %vm125, %v3448, 0
    %v3469 = vsel %vm125, %v3449, 0
    %v3472 = vsel %vm125, %v3450, 0
    %v3475 = vsel %vm125, %v3451, 0
    %v3478 = vsel %vm125, %v3452, 0
    %v3481 = vsel %vm125, %v3453, 0
    %v3484 = vsel %vm125, %v3454, 0
    %3486 = vmatprep.subr.mxu0 0.0
    %3487 = vmatpush1.msra.mxu0 0.0
    %3488 = vmatprep.subr.mxu0 0.0
    %3489 = vmatpush1.msra.mxu0 0.0
    %3490 = vmatprep.subr.mxu0 0.0
    %3491 = vmatpush1.msra.mxu0 0.0
    %3492 = vmatprep.subr.mxu0 0.0
    %3493 = vmatpush1.msra.mxu0 0.0
    %3494 = vmatprep.subr.mxu0 0.0
    %3495 = vmatpush1.msra.mxu0 0.0
    %3496 = vmatprep.subr.mxu0 0.0
    %3497 = vmatpush1.msra.mxu0 0.0
    %3498 = vmatprep.subr.mxu0 0.0
    %3499 = vmatpush1.msra.mxu0 0.0
    %3500 = vmatprep.subr.mxu0 0.0
    %3501 = vmatpush1.msra.mxu0 0.0
    %3502 = vmatprep.subr.mxu0 0.0
    %3503 = vmatpush1.msra.mxu0 0.0
    %3504 = vmatprep.subr.mxu0 0.0
    %3505 = vmatpush1.msra.mxu0 0.0
    %3506 = vmatprep.subr.mxu0 0.0
    %3507 = vmatpush1.msra.mxu0 0.0
    %3508 = vmatprep.subr.mxu0 0.0
    %3509 = vmatpush1.msra.mxu0 0.0
    %3510 = vmatprep.subr.mxu0 0.0
    %3511 = vmatpush1.msra.mxu0 %v60
    %3512 = vmatprep.subr.mxu0 0.0
    %3513 = vmatpush1.msra.mxu0 %v59
    %3514 = vmatprep.subr.mxu0 0.0
    %3515 = vmatpush1.msra.mxu0 %v58
    %3516 = vmatprep.subr.mxu0 0.0
    %3517 = vmatpush1.msra.mxu0 %v57
    %3518 = vmatprep.subr.mxu0 0.0
    %3519 = vmatpush2.msra.mxu0 0.0
    %3520 = vmatprep.subr.mxu0 0.0
    %3521 = vmatpush2.msra.mxu0 0.0
    %3522 = vmatprep.subr.mxu0 0.0
    %3523 = vmatpush2.msra.mxu0 0.0
    %3524 = vmatprep.subr.mxu0 0.0
    %3525 = vmatpush2.msra.mxu0 0.0
    %3526 = vmatprep.subr.mxu0 0.0
    %3527 = vmatpush2.msra.mxu0 0.0
    %3528 = vmatprep.subr.mxu0 0.0
    %3529 = vmatpush2.msra.mxu0 0.0
    %3530 = vmatprep.subr.mxu0 0.0
    %3531 = vmatpush2.msra.mxu0 0.0
    %3532 = vmatprep.subr.mxu0 0.0
    %3533 = vmatpush2.msra.mxu0 0.0
    %3534 = vmatprep.subr.mxu0 0.0
    %3535 = vmatpush2.msra.mxu0 0.0
    %3536 = vmatprep.subr.mxu0 0.0
    %3537 = vmatpush2.msra.mxu0 0.0
    %3538 = vmatprep.subr.mxu0 0.0
    %3539 = vmatpush2.msra.mxu0 0.0
    %3540 = vmatprep.subr.mxu0 0.0
    %3541 = vmatpush2.msra.mxu0 0.0
    %3542 = vmatprep.subr.mxu0 0.0
    %3543 = vmatpush2.msra.mxu0 0.0
    %3544 = vmatprep.subr.mxu0 0.0
    %3545 = vmatpush2.msra.mxu0 0.0
    %3546 = vmatprep.subr.mxu0 0.0
    %3547 = vmatpush2.msra.mxu0 0.0
    %3548 = vmatprep.subr.mxu0 0.0
    %3549 = vmatpush2.msra.mxu0 0.0
    %3550 = vmatprep.mubr.f32.mxu0 0.0
    %3551 = vmatmul.mubr.f32.gmra.mxu0 %v3460
    %v3552 = vpop.f32.mrf.mxu0
    %v3553 = vadd.f32 %v3458, %v3552
    %v3554 = vpop.f32.mrf.mxu0
    %3555 = vmatprep.mubr.f32.mxu0 0.0
    %3556 = vmatmul.mubr.f32.gmra.mxu0 %v3463
    %v3557 = vpop.f32.mrf.mxu0
    %v3558 = vadd.f32 %v3458, %v3557
    %v3559 = vpop.f32.mrf.mxu0
    %3560 = vmatprep.mubr.f32.mxu0 0.0
    %3561 = vmatmul.mubr.f32.gmra.mxu0 %v3466
    %v3562 = vpop.f32.mrf.mxu0
    %v3563 = vadd.f32 %v3458, %v3562
    %v3564 = vpop.f32.mrf.mxu0
    %3565 = vmatprep.mubr.f32.mxu0 0.0
    %3566 = vmatmul.mubr.f32.gmra.mxu0 %v3469
    %v3567 = vpop.f32.mrf.mxu0
    %v3568 = vadd.f32 %v3458, %v3567
    %v3569 = vpop.f32.mrf.mxu0
    %3570 = vmatprep.mubr.f32.mxu0 0.0
    %3571 = vmatmul.mubr.f32.gmra.mxu0 %v3472
    %v3572 = vpop.f32.mrf.mxu0
    %v3573 = vadd.f32 %v3458, %v3572
    %v3574 = vpop.f32.mrf.mxu0
    %3575 = vmatprep.mubr.f32.mxu0 0.0
    %3576 = vmatmul.mubr.f32.gmra.mxu0 %v3475
    %v3577 = vpop.f32.mrf.mxu0
    %v3578 = vadd.f32 %v3458, %v3577
    %v3579 = vpop.f32.mrf.mxu0
    %3580 = vmatprep.mubr.f32.mxu0 0.0
    %3581 = vmatmul.mubr.f32.gmra.mxu0 %v3478
    %v3582 = vpop.f32.mrf.mxu0
    %v3583 = vadd.f32 %v3458, %v3582
    %v3584 = vpop.f32.mrf.mxu0
    %3585 = vmatprep.mubr.f32.mxu0 0.0
    %3586 = vmatmul.mubr.f32.gmra.mxu0 %v3481
    %v3587 = vpop.f32.mrf.mxu0
    %v3588 = vadd.f32 %v3458, %v3587
    %v3589 = vpop.f32.mrf.mxu0
    %3590 = vmatprep.mubr.f32.mxu0 0.0
    %3591 = vmatmul.mubr.f32.gmra.mxu0 %v3484
    %v3592 = vpop.f32.mrf.mxu0
    %v3593 = vadd.f32 %v3458, %v3592
    %v3594 = vpop.f32.mrf.mxu0
    %3595 = vdwg.mxu0
    %v3596 = vmul.f32 %v3553, 0.5
    %v3597 = vmul.f32 %v3558, 0.5
    %v3598 = vmul.f32 %v3563, 0.5
    %v3599 = vmul.f32 %v3568, 0.5
    %v3600 = vmul.f32 %v3573, 0.5
    %v3601 = vmul.f32 %v3578, 0.5
    %v3602 = vmul.f32 %v3583, 0.5
    %v3603 = vmul.f32 %v3588, 0.5
    %v3604 = vmul.f32 %v3593, 0.5
    %v3605 = vmul.f32 %v3553, 0.70710677
    %v3606 = vmul.f32 %v3558, 0.70710677
    %v3607 = vmul.f32 %v3563, 0.70710677
    %v3608 = vmul.f32 %v3568, 0.70710677
    %v3609 = vmul.f32 %v3573, 0.70710677
    %v3610 = vmul.f32 %v3578, 0.70710677
    %v3611 = vmul.f32 %v3583, 0.70710677
    %v3612 = vmul.f32 %v3588, 0.70710677
    %v3613 = vmul.f32 %v3593, 0.70710677
    %v3614 = verf.f32.pop %v3605
    %v3615 = verf.f32.pop %v3606
    %v3616 = verf.f32.pop %v3607
    %v3617 = verf.f32.pop %v3608
    %v3618 = verf.f32.pop %v3609
    %v3619 = verf.f32.pop %v3610
    %v3620 = verf.f32.pop %v3611
    %v3621 = verf.f32.pop %v3612
    %v3622 = verf.f32.pop %v3613
    %v3623 = vadd.f32 %v3614, 1.0
    %v3624 = vadd.f32 %v3615, 1.0
    %v3625 = vadd.f32 %v3616, 1.0
    %v3626 = vadd.f32 %v3617, 1.0
    %v3627 = vadd.f32 %v3618, 1.0
    %v3628 = vadd.f32 %v3619, 1.0
    %v3629 = vadd.f32 %v3620, 1.0
    %v3630 = vadd.f32 %v3621, 1.0
    %v3631 = vadd.f32 %v3622, 1.0
    %v3632 = vmul.f32 %v3596, %v3623
    %v3633 = vmul.f32 %v3597, %v3624
    %v3634 = vmul.f32 %v3598, %v3625
    %v3635 = vmul.f32 %v3599, %v3626
    %v3636 = vmul.f32 %v3600, %v3627
    %v3637 = vmul.f32 %v3601, %v3628
    %v3638 = vmul.f32 %v3602, %v3629
    %v3639 = vmul.f32 %v3603, %v3630
    %v3640 = vmul.f32 %v3604, %v3631
    %v3641 = vlaneseq
    %v3642 = vshrl.u32 %v3641, 7
    %v3643 = vsub.s32 0, %v3642
    %v3644 = vrot.slane %v39, %v3643
    %3645 = vmatprep.subr.mxu0 0.0
    %3646 = vmatpush1.msra.mxu0 %v76
    %3647 = vmatprep.subr.mxu0 0.0
    %3648 = vmatpush1.msra.mxu0 %v75
    %3649 = vmatprep.subr.mxu0 0.0
    %3650 = vmatpush1.msra.mxu0 %v74
    %3651 = vmatprep.subr.mxu0 0.0
    %3652 = vmatpush1.msra.mxu0 %v73
    %3653 = vmatprep.subr.mxu0 0.0
    %3654 = vmatpush1.msra.mxu0 %v72
    %3655 = vmatprep.subr.mxu0 0.0
    %3656 = vmatpush1.msra.mxu0 %v71
    %3657 = vmatprep.subr.mxu0 0.0
    %3658 = vmatpush1.msra.mxu0 %v70
    %3659 = vmatprep.subr.mxu0 0.0
    %3660 = vmatpush1.msra.mxu0 %v69
    %3661 = vmatprep.subr.mxu0 0.0
    %3662 = vmatpush1.msra.mxu0 %v68
    %3663 = vmatprep.subr.mxu0 0.0
    %3664 = vmatpush1.msra.mxu0 %v67
    %3665 = vmatprep.subr.mxu0 0.0
    %3666 = vmatpush1.msra.mxu0 %v66
    %3667 = vmatprep.subr.mxu0 0.0
    %3668 = vmatpush1.msra.mxu0 %v65
    %3669 = vmatprep.subr.mxu0 0.0
    %3670 = vmatpush1.msra.mxu0 %v64
    %3671 = vmatprep.subr.mxu0 0.0
    %3672 = vmatpush1.msra.mxu0 %v63
    %3673 = vmatprep.subr.mxu0 0.0
    %3674 = vmatpush1.msra.mxu0 %v62
    %3675 = vmatprep.subr.mxu0 0.0
    %3676 = vmatpush1.msra.mxu0 %v61
    %3677 = vmatprep.subr.mxu0 0.0
    %3678 = vmatpush2.msra.mxu0 0.0
    %3679 = vmatprep.subr.mxu0 0.0
    %3680 = vmatpush2.msra.mxu0 0.0
    %3681 = vmatprep.subr.mxu0 0.0
    %3682 = vmatpush2.msra.mxu0 0.0
    %3683 = vmatprep.subr.mxu0 0.0
    %3684 = vmatpush2.msra.mxu0 0.0
    %3685 = vmatprep.subr.mxu0 0.0
    %3686 = vmatpush2.msra.mxu0 0.0
    %3687 = vmatprep.subr.mxu0 0.0
    %3688 = vmatpush2.msra.mxu0 0.0
    %3689 = vmatprep.subr.mxu0 0.0
    %3690 = vmatpush2.msra.mxu0 0.0
    %3691 = vmatprep.subr.mxu0 0.0
    %3692 = vmatpush2.msra.mxu0 0.0
    %3693 = vmatprep.subr.mxu0 0.0
    %3694 = vmatpush2.msra.mxu0 0.0
    %3695 = vmatprep.subr.mxu0 0.0
    %3696 = vmatpush2.msra.mxu0 0.0
    %3697 = vmatprep.subr.mxu0 0.0
    %3698 = vmatpush2.msra.mxu0 0.0
    %3699 = vmatprep.subr.mxu0 0.0
    %3700 = vmatpush2.msra.mxu0 0.0
    %3701 = vmatprep.subr.mxu0 0.0
    %3702 = vmatpush2.msra.mxu0 0.0
    %3703 = vmatprep.subr.mxu0 0.0
    %3704 = vmatpush2.msra.mxu0 0.0
    %3705 = vmatprep.subr.mxu0 0.0
    %3706 = vmatpush2.msra.mxu0 0.0
    %3707 = vmatprep.subr.mxu0 0.0
    %3708 = vmatpush2.msra.mxu0 0.0
    %3709 = vmatprep.mubr.f32.mxu0 0.0
    %3710 = vmatmul.mubr.f32.gmra.mxu0 %v3632
    %v3711 = vpop.f32.mrf.mxu0
    %v3712 = vadd.f32 %v3644, %v3711
    %v3713 = vpop.f32.mrf.mxu0
    %3714 = vmatprep.mubr.f32.mxu0 0.0
    %3715 = vmatmul.mubr.f32.gmra.mxu0 %v3633
    %v3716 = vpop.f32.mrf.mxu0
    %v3717 = vadd.f32 %v3644, %v3716
    %v3718 = vpop.f32.mrf.mxu0
    %3719 = vmatprep.mubr.f32.mxu0 0.0
    %3720 = vmatmul.mubr.f32.gmra.mxu0 %v3634
    %v3721 = vpop.f32.mrf.mxu0
    %v3722 = vadd.f32 %v3644, %v3721
    %v3723 = vpop.f32.mrf.mxu0
    %3724 = vmatprep.mubr.f32.mxu0 0.0
    %3725 = vmatmul.mubr.f32.gmra.mxu0 %v3635
    %v3726 = vpop.f32.mrf.mxu0
    %v3727 = vadd.f32 %v3644, %v3726
    %v3728 = vpop.f32.mrf.mxu0
    %3729 = vmatprep.mubr.f32.mxu0 0.0
    %3730 = vmatmul.mubr.f32.gmra.mxu0 %v3636
    %v3731 = vpop.f32.mrf.mxu0
    %v3732 = vadd.f32 %v3644, %v3731
    %v3733 = vpop.f32.mrf.mxu0
    %3734 = vmatprep.mubr.f32.mxu0 0.0
    %3735 = vmatmul.mubr.f32.gmra.mxu0 %v3637
    %v3736 = vpop.f32.mrf.mxu0
    %v3737 = vadd.f32 %v3644, %v3736
    %v3738 = vpop.f32.mrf.mxu0
    %3739 = vmatprep.mubr.f32.mxu0 0.0
    %3740 = vmatmul.mubr.f32.gmra.mxu0 %v3638
    %v3741 = vpop.f32.mrf.mxu0
    %v3742 = vadd.f32 %v3644, %v3741
    %v3743 = vpop.f32.mrf.mxu0
    %3744 = vmatprep.mubr.f32.mxu0 0.0
    %3745 = vmatmul.mubr.f32.gmra.mxu0 %v3639
    %v3746 = vpop.f32.mrf.mxu0
    %v3747 = vadd.f32 %v3644, %v3746
    %v3748 = vpop.f32.mrf.mxu0
    %3749 = vmatprep.mubr.f32.mxu0 0.0
    %3750 = vmatmul.mubr.f32.gmra.mxu0 %v3640
    %v3751 = vpop.f32.mrf.mxu0
    %v3752 = vadd.f32 %v3644, %v3751
    %v3753 = vpop.f32.mrf.mxu0
    %3754 = vdwg.mxu0
    %v3755 = vadd.f32 %v3712, %v3302
    %v3756 = vadd.f32 %v3717, %v3303
    %v3757 = vadd.f32 %v3722, %v3304
    %v3758 = vadd.f32 %v3727, %v3305
    %v3759 = vadd.f32 %v3732, %v3306
    %v3760 = vadd.f32 %v3737, %v3307
    %v3761 = vadd.f32 %v3742, %v3308
    %v3762 = vadd.f32 %v3747, %v3309
    %v3763 = vadd.f32 %v3752, %v3310
    %v3764 = vlaneseq
    %v3765 = vshrl.u32 %v3764, 7
    %v3766 = vadd.s32 %v3765, 8
    %v3767 = vadd.s32 %v3765, 16
    %v3768 = vadd.s32 %v3765, 24
    %v3769 = vadd.s32 %v3765, 32
    %vm3770 = vcmp.eq.s32.totalorder %v3765, 0
    %vm3771 = vcmp.eq.s32.totalorder %v3766, 0
    %vm3772 = vcmp.eq.s32.totalorder %v3767, 0
    %vm3773 = vcmp.eq.s32.totalorder %v3768, 0
    %vm3774 = vcmp.eq.s32.totalorder %v3769, 0
    %vm3775 = vcmp.eq.s32.totalorder %v3765, 17
    %vm3776 = vcmp.eq.s32.totalorder %v3766, 17
    %vm3777 = vcmp.eq.s32.totalorder %v3767, 17
    %vm3778 = vcmp.eq.s32.totalorder %v3768, 17
    %vm3779 = vcmp.eq.s32.totalorder %v3769, 17
    %vm3780 = vmor %vm3770, %vm3775
    %vm3781 = vmor %vm3771, %vm3776
    %vm3782 = vmor %vm3772, %vm3777
    %vm3783 = vmor %vm3773, %vm3778
    %vm3784 = vmor %vm3774, %vm3779
    %vm3785 = vcmp.ge.f32.partialorder %v401, 0.05
    %vm3786 = vcmp.ge.f32.partialorder %v403, 0.05
    %vm3787 = vcmp.ge.f32.partialorder %v405, 0.05
    %vm3788 = vcmp.ge.f32.partialorder %v407, 0.05
    %vm3789 = vcmp.ge.f32.partialorder %v409, 0.05
    %vm3790 = vmor %vm3780, %vm3785
    %vm3791 = vmor %vm3781, %vm3786
    %vm3792 = vmor %vm3782, %vm3787
    %vm3793 = vmor %vm3783, %vm3788
    %vm3794 = vmor %vm3784, %vm3789
    %v3795 = vsel %vm3790, 1, 0
    %v3796 = vsel %vm3791, 1, 0
    %v3797 = vsel %vm3792, 1, 0
    %v3798 = vsel %vm3793, 1, 0
    %v3799 = vsel %vm3794, 1, 0
    %3800 = vset.pattern.permute.xlu0 0
    %3801 = vperm.xlu0 %3800, %v3795
    %v3802 = vpop.permute.xlu0 %3801
    %3803 = vset.pattern.permute.xlu0 0
    %3804 = vperm.xlu0 %3803, %v3796
    %v3805 = vpop.permute.xlu0 %3804
    %3806 = vset.pattern.permute.xlu0 0
    %3807 = vperm.xlu0 %3806, %v3797
    %v3808 = vpop.permute.xlu0 %3807
    %3809 = vset.pattern.permute.xlu0 0
    %3810 = vperm.xlu0 %3809, %v3798
    %v3811 = vpop.permute.xlu0 %3810
    %3812 = vset.pattern.permute.xlu0 0
    %3813 = vperm.xlu0 %3812, %v3799
    %v3814 = vpop.permute.xlu0 %3813
    %vm3815 = vcmp.eq.s32.totalorder %v3802, 1
    %vm3816 = vcmp.eq.s32.totalorder %v3805, 1
    %vm3817 = vcmp.eq.s32.totalorder %v3808, 1
    %vm3818 = vcmp.eq.s32.totalorder %v3811, 1
    %vm3819 = vcmp.eq.s32.totalorder %v3814, 1
    %v3820 = vsel %vm3815, %v3755, %v32
    %v3821 = vsel %vm3816, %v3756, %v33
    %v3822 = vsel %vm3817, %v3757, %v34
    %v3823 = vsel %vm3818, %v3758, %v35
    %v3824 = vsel %vm3819, %v3759, %v36
    %3825 = vst.msk [vmem:[%s8] sm:$0xff] %vm125, %v3820
    %3826 = vst.msk [vmem:[%s8 + $0x8] sm:$0xff] %vm125, %v3821
    %3827 = vst.msk [vmem:[%s8 + $0x10] sm:$0xff] %vm125, %v3822
    %3828 = vst.msk [vmem:[%s8 + $0x18] sm:$0xff] %vm125, %v3823
    %3829 = vst.msk [vmem:[%s8 + $0x20] sm:$0x3] %vm422, %v3824
    %vm3830 = vmxor %vm3780, 1
    %vm3831 = vmxor %vm3781, 1
    %vm3832 = vmxor %vm3782, 1
    %vm3833 = vmxor %vm3783, 1
    %vm3834 = vmxor %vm3784, 1
    %vm3835 = vcmp.lt.f32.partialorder %v401, 0.05
    %vm3836 = vcmp.lt.f32.partialorder %v403, 0.05
    %vm3837 = vcmp.lt.f32.partialorder %v405, 0.05
    %vm3838 = vcmp.lt.f32.partialorder %v407, 0.05
    %vm3839 = vcmp.lt.f32.partialorder %v409, 0.05
    %v3840 = vsel %vm3835, 1, 0
    %v3841 = vsel %vm3836, 1, 0
    %v3842 = vsel %vm3837, 1, 0
    %v3843 = vsel %vm3838, 1, 0
    %v3844 = vsel %vm3839, 1, 0
    %v3845 = vcvt.s32.f32 %v3840
    %v3846 = vcvt.s32.f32 %v3841
    %v3847 = vcvt.s32.f32 %v3842
    %v3848 = vcvt.s32.f32 %v3843
    %v3849 = vcvt.s32.f32 %v3844
    %v3850 = vsel %vm3830, %v3845, 0.0
    %v3851 = vsel %vm3831, %v3846, 0.0
    %v3852 = vsel %vm3832, %v3847, 0.0
    %v3853 = vsel %vm3833, %v3848, 0.0
    %v3854 = vsel %vm3834, %v3849, 0.0
    %vm3855 = vcmask 7168
    %v3856 = vsel %vm3855, %v3850, 0.0
    %v3857 = vsel %vm3855, %v3851, 0.0
    %v3858 = vadd.f32 %v3856, %v3857
    %v3859 = vsel %vm3855, %v3852, 0.0
    %v3860 = vadd.f32 %v3858, %v3859
    %v3861 = vsel %vm3855, %v3853, 0.0
    %v3862 = vadd.f32 %v3860, %v3861
    %vm3863 = vcmask 1024
    %v3864 = vsel %vm3863, %v3854, 0.0
    %v3865 = vadd.f32 %v3862, %v3864
    %v3866 = vrot.slane %v3865, 4
    %v3867 = vadd.f32 %v3865, %v3866
    %v3868 = vrot.slane %v3867, 2
    %v3869 = vadd.f32 %v3867, %v3868
    %v3870 = vrot.slane %v3869, 1
    %v3871 = vadd.f32 %v3869, %v3870
    %v3872 = vmul.f32 %v3759, %v3250
    %v3873 = vmul.f32 %v3760, %v3252
    %v3874 = vmul.f32 %v3761, %v3254
    %v3875 = vmul.f32 %v3762, %v3256
    %v3876 = vmul.f32 %v3763, %v3258
    %vm3877 = vcmask 261122
    %v3878 = vsel %vm3877, %v3872, 0.0
    %3879 = vadd.xlane.f32.xlu0 %v3878
    %v3880 = vpop.xlane.xlu0 %3879
    %v3881 = vsel %vm125, %v3873, 0.0
    %3882 = vadd.xlane.f32.xlu0 %v3881
    %v3883 = vpop.xlane.xlu0 %3882
    %v3884 = vsel %vm125, %v3874, 0.0
    %3885 = vadd.xlane.f32.xlu0 %v3884
    %v3886 = vpop.xlane.xlu0 %3885
    %v3887 = vsel %vm125, %v3875, 0.0
    %3888 = vadd.xlane.f32.xlu0 %v3887
    %v3889 = vpop.xlane.xlu0 %3888
    %v3890 = vsel %vm3335, %v3876, 0.0
    %3891 = vadd.xlane.f32.xlu0 %v3890
    %v3892 = vpop.xlane.xlu0 %3891
    %v3893 = vmul.f32 %v3759, %v3759
    %v3894 = vmul.f32 %v3760, %v3760
    %v3895 = vmul.f32 %v3761, %v3761
    %v3896 = vmul.f32 %v3762, %v3762
    %v3897 = vmul.f32 %v3763, %v3763
    %v3898 = vsel %vm3877, %v3893, 0.0
    %3899 = vadd.xlane.f32.xlu0 %v3898
    %v3900 = vpop.xlane.xlu0 %3899
    %v3901 = vsel %vm125, %v3894, 0.0
    %3902 = vadd.xlane.f32.xlu0 %v3901
    %v3903 = vpop.xlane.xlu0 %3902
    %v3904 = vsel %vm125, %v3895, 0.0
    %3905 = vadd.xlane.f32.xlu0 %v3904
    %v3906 = vpop.xlane.xlu0 %3905
    %v3907 = vsel %vm125, %v3896, 0.0
    %3908 = vadd.xlane.f32.xlu0 %v3907
    %v3909 = vpop.xlane.xlu0 %3908
    %v3910 = vsel %vm3335, %v3897, 0.0
    %3911 = vadd.xlane.f32.xlu0 %v3910
    %v3912 = vpop.xlane.xlu0 %3911
    %v3913 = vmul.f32 %v32, %v32
    %v3914 = vmul.f32 %v33, %v33
    %v3915 = vmul.f32 %v34, %v34
    %v3916 = vmul.f32 %v35, %v35
    %v3917 = vmul.f32 %v36, %v36
    %v3918 = vsel %vm125, %v3913, 0.0
    %3919 = vadd.xlane.f32.xlu0 %v3918
    %v3920 = vpop.xlane.xlu0 %3919
    %v3921 = vsel %vm125, %v3914, 0.0
    %3922 = vadd.xlane.f32.xlu0 %v3921
    %v3923 = vpop.xlane.xlu0 %3922
    %v3924 = vsel %vm125, %v3915, 0.0
    %3925 = vadd.xlane.f32.xlu0 %v3924
    %v3926 = vpop.xlane.xlu0 %3925
    %v3927 = vsel %vm125, %v3916, 0.0
    %3928 = vadd.xlane.f32.xlu0 %v3927
    %v3929 = vpop.xlane.xlu0 %3928
    %v3930 = vsel %vm422, %v3917, 0.0
    %3931 = vadd.xlane.f32.xlu0 %v3930
    %v3932 = vpop.xlane.xlu0 %3931
    %v3938 = vrot.slane %v3920, 6
    %v3939 = vrot.slane %v3923, 6
    %v3940 = vsel %vm3249, %v3938, %v3939
    %v3941 = vrot.slane %v3926, 6
    %v3942 = vsel %vm3249, %v3939, %v3941
    %v3943 = vrot.slane %v3929, 6
    %v3944 = vsel %vm3249, %v3941, %v3943
    %v3945 = vrot.slane %v3932, 6
    %v3946 = vsel %vm3249, %v3943, %v3945
    %v3952 = vmul.f32 %v3900, %v3938
    %v3953 = vmul.f32 %v3903, %v3940
    %v3954 = vmul.f32 %v3906, %v3942
    %v3955 = vmul.f32 %v3909, %v3944
    %v3956 = vmul.f32 %v3912, %v3946
    %v3957 = vmax.f32 %v3952, 1e-16
    %v3958 = vmax.f32 %v3953, 1e-16
    %v3959 = vmax.f32 %v3954, 1e-16
    %v3960 = vmax.f32 %v3955, 1e-16
    %v3961 = vmax.f32 %v3956, 1e-16
    %v3962 = vrsqrt.pop %v3957
    %v3963 = vrsqrt.pop %v3958
    %v3964 = vrsqrt.pop %v3959
    %v3965 = vrsqrt.pop %v3960
    %v3966 = vrsqrt.pop %v3961
    %v3967 = vmul.f32 %v3880, %v3962
    %v3968 = vmul.f32 %v3883, %v3963
    %v3969 = vmul.f32 %v3886, %v3964
    %v3970 = vmul.f32 %v3889, %v3965
    %v3971 = vmul.f32 %v3892, %v3966
    %v3972 = vadd.f32 %v3967, 1.0
    %v3973 = vadd.f32 %v3968, 1.0
    %v3974 = vadd.f32 %v3969, 1.0
    %v3975 = vadd.f32 %v3970, 1.0
    %v3976 = vadd.f32 %v3971, 1.0
    %v3977 = vmul.f32 %v3972, 0.5
    %v3978 = vmul.f32 %v3973, 0.5
    %v3979 = vmul.f32 %v3974, 0.5
    %v3980 = vmul.f32 %v3975, 0.5
    %v3981 = vmul.f32 %v3976, 0.5
    %v3982 = vsub.f32 %v3759, %v3250
    %v3983 = vsub.f32 %v3760, %v3252
    %v3984 = vsub.f32 %v3761, %v3254
    %v3985 = vsub.f32 %v3762, %v3256
    %v3986 = vsub.f32 %v3763, %v3258
    %v3987 = vmul.f32 %v3982, %v3982
    %v3988 = vmul.f32 %v3983, %v3983
    %v3989 = vmul.f32 %v3984, %v3984
    %v3990 = vmul.f32 %v3985, %v3985
    %v3991 = vmul.f32 %v3986, %v3986
    %v3992 = vsel %vm3877, %v3987, 0.0
    %3993 = vadd.xlane.f32.xlu0 %v3992
    %v3994 = vpop.xlane.xlu0 %3993
    %v3995 = vsel %vm125, %v3988, 0.0
    %3996 = vadd.xlane.f32.xlu0 %v3995
    %v3997 = vpop.xlane.xlu0 %3996
    %v3998 = vsel %vm125, %v3989, 0.0
    %3999 = vadd.xlane.f32.xlu0 %v3998
    %v4000 = vpop.xlane.xlu0 %3999
    %v4001 = vsel %vm125, %v3990, 0.0
    %4002 = vadd.xlane.f32.xlu0 %v4001
    %v4003 = vpop.xlane.xlu0 %4002
    %v4004 = vsel %vm3335, %v3991, 0.0
    %4005 = vadd.xlane.f32.xlu0 %v4004
    %v4006 = vpop.xlane.xlu0 %4005
    %v4007 = vadd.f32 %v3900, 1e-06
    %v4008 = vadd.f32 %v3903, 1e-06
    %v4009 = vadd.f32 %v3906, 1e-06
    %v4010 = vadd.f32 %v3909, 1e-06
    %v4011 = vadd.f32 %v3912, 1e-06
    %v4012 = vrcp.pop %v4007
    %v4013 = vmul.f32 %v3994, %v4012
    %v4014 = vrcp.pop %v4008
    %v4015 = vmul.f32 %v3997, %v4014
    %v4016 = vrcp.pop %v4009
    %v4017 = vmul.f32 %v4000, %v4016
    %v4018 = vrcp.pop %v4010
    %v4019 = vmul.f32 %v4003, %v4018
    %v4020 = vrcp.pop %v4011
    %v4021 = vmul.f32 %v4006, %v4020
    %v4022 = vsub.f32 0.0, %v4013
    %v4023 = vsub.f32 0.0, %v4015
    %v4024 = vsub.f32 0.0, %v4017
    %v4025 = vsub.f32 0.0, %v4019
    %v4026 = vsub.f32 0.0, %v4021
    %v4027 = vmul.f32 %v4022, 1.442695
    %v4028 = vpow.pop %v4027
    %v4029 = vmul.f32 %v4023, 1.442695
    %v4030 = vpow.pop %v4029
    %v4031 = vmul.f32 %v4024, 1.442695
    %v4032 = vpow.pop %v4031
    %v4033 = vmul.f32 %v4025, 1.442695
    %v4034 = vpow.pop %v4033
    %v4035 = vmul.f32 %v4026, 1.442695
    %v4036 = vpow.pop %v4035
    %v4037 = vmul.f32 %v3977, 0.5
    %v4038 = vmul.f32 %v3978, 0.5
    %v4039 = vmul.f32 %v3979, 0.5
    %v4040 = vmul.f32 %v3980, 0.5
    %v4041 = vmul.f32 %v3981, 0.5
    %v4042 = vmul.f32 %v4028, 0.5
    %v4043 = vmul.f32 %v4030, 0.5
    %v4044 = vmul.f32 %v4032, 0.5
    %v4045 = vmul.f32 %v4034, 0.5
    %v4046 = vmul.f32 %v4036, 0.5
    %v4047 = vadd.f32 %v4037, %v4042
    %v4048 = vadd.f32 %v4038, %v4043
    %v4049 = vadd.f32 %v4039, %v4044
    %v4050 = vadd.f32 %v4040, %v4045
    %v4051 = vadd.f32 %v4041, %v4046
    %vm4052 = vcmp.lt.f32.partialorder %v4047, 0.95
    %vm4053 = vcmp.lt.f32.partialorder %v4048, 0.95
    %vm4054 = vcmp.lt.f32.partialorder %v4049, 0.95
    %vm4055 = vcmp.lt.f32.partialorder %v4050, 0.95
    %vm4056 = vcmp.lt.f32.partialorder %v4051, 0.95
    %v4057 = vsel %vm4052, 1, 0
    %v4058 = vsel %vm4053, 1, 0
    %v4059 = vsel %vm4054, 1, 0
    %v4060 = vsel %vm4055, 1, 0
    %v4061 = vsel %vm4056, 1, 0
    %v4062 = vcvt.s32.f32 %v4057
    %v4063 = vcvt.s32.f32 %v4058
    %v4064 = vcvt.s32.f32 %v4059
    %v4065 = vcvt.s32.f32 %v4060
    %v4066 = vcvt.s32.f32 %v4061
    %v4067 = vmax.f32 %v401, 1e-12
    %v4068 = vmax.f32 %v403, 1e-12
    %v4069 = vmax.f32 %v405, 1e-12
    %v4070 = vmax.f32 %v407, 1e-12
    %v4071 = vmax.f32 %v409, 1e-12
    %v4072 = vmin.f32 %v4067, 1.0
    %v4073 = vmin.f32 %v4068, 1.0
    %v4074 = vmin.f32 %v4069, 1.0
    %v4075 = vmin.f32 %v4070, 1.0
    %v4076 = vmin.f32 %v4071, 1.0
    %v4077 = vlog2.pop %v4072
    %v4078 = vmul.f32 %v4077, 0.6931472
    %v4079 = vlog2.pop %v4073
    %v4080 = vmul.f32 %v4079, 0.6931472
    %v4081 = vlog2.pop %v4074
    %v4082 = vmul.f32 %v4081, 0.6931472
    %v4083 = vlog2.pop %v4075
    %v4084 = vmul.f32 %v4083, 0.6931472
    %v4085 = vlog2.pop %v4076
    %v4086 = vmul.f32 %v4085, 0.6931472
    %v4092 = vrot.slane %v4078, 6
    %v4093 = vrot.slane %v4080, 6
    %v4094 = vsel %vm3249, %v4092, %v4093
    %v4095 = vrot.slane %v4082, 6
    %v4096 = vsel %vm3249, %v4093, %v4095
    %v4097 = vrot.slane %v4084, 6
    %v4098 = vsel %vm3249, %v4095, %v4097
    %v4099 = vrot.slane %v4086, 6
    %v4100 = vsel %vm3249, %v4097, %v4099
    %v4106 = vmul.f32 %v4062, %v4092
    %v4107 = vmul.f32 %v4063, %v4094
    %v4108 = vmul.f32 %v4064, %v4096
    %v4109 = vmul.f32 %v4065, %v4098
    %v4110 = vmul.f32 %v4066, %v4100
    %v4111 = vsub.f32 1.0, %v4062
    %v4112 = vsub.f32 1.0, %v4063
    %v4113 = vsub.f32 1.0, %v4064
    %v4114 = vsub.f32 1.0, %v4065
    %v4115 = vsub.f32 1.0, %v4066
    %v4116 = vsub.f32 1.0, %v4072
    %v4117 = vsub.f32 1.0, %v4073
    %v4118 = vsub.f32 1.0, %v4074
    %v4119 = vsub.f32 1.0, %v4075
    %v4120 = vsub.f32 1.0, %v4076
    %v4121 = vlog2.pop %v4116
    %v4122 = vmul.f32 %v4121, 0.6931472
    %v4123 = vlog2.pop %v4117
    %v4124 = vmul.f32 %v4123, 0.6931472
    %v4125 = vlog2.pop %v4118
    %v4126 = vmul.f32 %v4125, 0.6931472
    %v4127 = vlog2.pop %v4119
    %v4128 = vmul.f32 %v4127, 0.6931472
    %v4129 = vlog2.pop %v4120
    %v4130 = vmul.f32 %v4129, 0.6931472
    %v4136 = vrot.slane %v4122, 6
    %v4137 = vrot.slane %v4124, 6
    %v4138 = vsel %vm3249, %v4136, %v4137
    %v4139 = vrot.slane %v4126, 6
    %v4140 = vsel %vm3249, %v4137, %v4139
    %v4141 = vrot.slane %v4128, 6
    %v4142 = vsel %vm3249, %v4139, %v4141
    %v4143 = vrot.slane %v4130, 6
    %v4144 = vsel %vm3249, %v4141, %v4143
    %v4150 = vmul.f32 %v4111, %v4136
    %v4151 = vmul.f32 %v4112, %v4138
    %v4152 = vmul.f32 %v4113, %v4140
    %v4153 = vmul.f32 %v4114, %v4142
    %v4154 = vmul.f32 %v4115, %v4144
    %v4155 = vadd.f32 %v4106, %v4150
    %v4156 = vadd.f32 %v4107, %v4151
    %v4157 = vadd.f32 %v4108, %v4152
    %v4158 = vadd.f32 %v4109, %v4153
    %v4159 = vadd.f32 %v4110, %v4154
    %vm4165 = vcmask 1045504
    %v4166 = vrot.slane %v4155, 2
    %v4167 = vrot.slane %v4156, 2
    %v4168 = vsel %vm4165, %v4166, %v4167
    %v4169 = vrot.slane %v4157, 2
    %v4170 = vsel %vm4165, %v4167, %v4169
    %v4171 = vrot.slane %v4158, 2
    %v4172 = vsel %vm4165, %v4169, %v4171
    %v4173 = vrot.slane %v4159, 2
    %v4174 = vsel %vm4165, %v4171, %v4173
    %v4180 = vsel %vm3830, %v4168, 0.0
    %v4181 = vsel %vm3831, %v4170, 0.0
    %v4182 = vsel %vm3832, %v4172, 0.0
    %v4183 = vsel %vm3833, %v4174, 0.0
    %v4184 = vsel %vm3834, %v4173, 0.0
    %v4185 = vsel %vm3855, %v4180, 0.0
    %v4186 = vsel %vm3855, %v4181, 0.0
    %v4187 = vadd.f32 %v4185, %v4186
    %v4188 = vsel %vm3855, %v4182, 0.0
    %v4189 = vadd.f32 %v4187, %v4188
    %v4190 = vsel %vm3855, %v4183, 0.0
    %v4191 = vadd.f32 %v4189, %v4190
    %v4192 = vsel %vm3863, %v4184, 0.0
    %v4193 = vadd.f32 %v4191, %v4192
    %v4194 = vrot.slane %v4193, 4
    %v4195 = vadd.f32 %v4193, %v4194
    %v4196 = vrot.slane %v4195, 2
    %v4197 = vadd.f32 %v4195, %v4196
    %v4198 = vrot.slane %v4197, 1
    %v4199 = vadd.f32 %v4197, %v4198
    %v4200 = vsub.f32 0.0, %v4199
    %v4201 = vmul.f32 %v4200, 0.03125
    %4203 = vrot.lane.b32.xlu0 %v3871, 1
    %v4204 = vpop.permute.xlu0 %4203
    %v4206 = vsel %vm3855, %v4201, %v4204
    %vm4207 = vcmask 8192
    %4208 = vst.msk [vmem:[#allocation2] sm:$0x1] %vm4207, %v4206
    // Predicated region
    $region34: #{tpu_custom_call.1} parent=1 // pred_check
      _
    $region35: #{tpu_custom_call.1} parent=1 // pred_check_branch
      %4210 = sbr.rel (0) target = $region37
    $region36: #{tpu_custom_call.1} parent=1 // pred_region
      _
    $region37: #{tpu_custom_call.1} parent=1 // pred_fallthru
      _
    // Predicated region
    $region38: #{tpu_custom_call.1} parent=1 // pred_check
      _
    $region39: #{tpu_custom_call.1} parent=1 // pred_check_branch
      %4212 = sbr.rel (0) target = $region41
    $region40: #{tpu_custom_call.1} parent=1 // pred_region
      %s4214 = ssub.s32 16, 16
      %4215 = vsyncadd [#allocation3], %s4214
      %s4217 = sshll.u32 [#allocation2], 4
      %s4218 = int_to_ptr.vmem [resolvable:$true] %s4217
      %4220 = dma.vmem_to_hbm [thread:$0]  %s4218, 16, %s9, [#allocation3]
    $region41: #{tpu_custom_call.1} parent=1 // pred_fallthru
      _
    // Predicated region
    $region42: #{tpu_custom_call.1} parent=1 // pred_check
      _
    $region43: #{tpu_custom_call.1} parent=1 // pred_check_branch
      %4222 = sbr.rel (0) target = $region45
    $region44: #{tpu_custom_call.1} parent=1 // pred_region
      _
    $region45: #{tpu_custom_call.1} parent=1 // pred_fallthru
      _
    // Predicated region
    $region46: #{tpu_custom_call.1} parent=1 // pred_check
      _
    $region47: #{tpu_custom_call.1} parent=1 // pred_check_branch
      %4224 = sbr.rel (0) target = $region49
    $region48: #{tpu_custom_call.1} parent=1 // pred_region
      %4225 = dma.done [#allocation3], 16
    $region49: #{tpu_custom_call.1} parent=1 // pred_fallthru
      _
    %4226 = vsyncpa [#allocation3], 1

</llo_original>
